<compile_context>
chip_gen: v5e
topology: v5e:2x2
jax: 0.10.0
libtpu: 0.0.40
codegen_flags: <defaults>
</compile_context>

<pallas_src>
import functools

import jax
import jax.numpy as jnp
from jax import lax
from jax.experimental import pallas as pl
from jax.experimental.pallas import tpu as pltpu


_VMEM_TABLE_BUDGET = 16 * 1024 * 1024  # bytes; stays well inside v7x's 64 MiB/TC


def _embedbag_mlp_kernel(
    # scalar prefetch (SMEM)
    off_ref, tok_ref,
    # inputs (VMEM)
    emb_ref, inv_ref, w1_ref, b1_ref, w2_ref, b2_ref, w3_ref, b3_ref,
    # outputs
    out_ref,
    # scratch
    x_sum,
    *, bag_tile: int,
):
    bag_base = pl.program_id(0) * bag_tile
    d_model = emb_ref.shape[1]
    row_ids8 = lax.broadcasted_iota(jnp.int32, (8, 1), 0)  # hoisted

    # ---- segment sum: per-bag (1, D) accumulation, stored 8 aligned rows at a time
    def group_body(g, carry):
        base8 = bag_base + g * 8
        acc8 = jnp.zeros((8, d_model), jnp.float32)
        for j in range(8):                                  # static unroll
            t_s = off_ref[base8 + j]
            t_e = off_ref[base8 + j + 1]

            def tok_body(t, a):
                # gather one embedding row straight from the VMEM-resident table
                return a + emb_ref[pl.ds(tok_ref[t], 1), :]

            acc1 = lax.fori_loop(t_s, t_e, tok_body,
                                 jnp.zeros((1, d_model), jnp.float32))
            acc8 = jnp.where(row_ids8 == j, acc1, acc8)
        row0 = pl.multiple_of(g * 8, 8)
        x_sum[pl.ds(row0, 8), :] = acc8                     # aligned 8-row store
        return carry

    lax.fori_loop(0, bag_tile // 8, group_body, 0)

    # ---- bag means (empty bags -> 0) and 3-layer MLP (bf16 MXU, f32 accumulate)
    x = (x_sum[...] * inv_ref[...]).astype(jnp.bfloat16)    # (bag_tile, D)

    h1 = jnp.dot(x, w1_ref[...], preferred_element_type=jnp.float32)
    h1 = jnp.maximum(h1 + b1_ref[...], 0.0)
    h2 = jnp.dot(h1.astype(jnp.bfloat16), w2_ref[...],
                 preferred_element_type=jnp.float32)
    h2 = jnp.maximum(h2 + b2_ref[...], 0.0)
    out = jnp.dot(h2.astype(jnp.bfloat16), w3_ref[...],
                  preferred_element_type=jnp.float32)
    out_ref[...] = out + b3_ref[...]


def prepare_params(params):
    """One-time host-side prep: bf16 weight casts + lane-dense class padding."""
    w3 = params["w3"]
    hidden, n_cls = w3.shape
    c_pad = pl.cdiv(n_cls, 128) * 128
    w3p = jnp.zeros((hidden, c_pad), jnp.bfloat16).at[:, :n_cls].set(
        w3.astype(jnp.bfloat16))
    b3p = jnp.zeros((1, c_pad), jnp.float32).at[:, :n_cls].set(
        params["b3"].astype(jnp.float32))
    return {
        "embedding": params["embedding"].astype(jnp.float32),  # stays f32
        "w1": params["w1"].astype(jnp.bfloat16),
        "b1": params["b1"].astype(jnp.float32),
        "w2": params["w2"].astype(jnp.bfloat16),
        "b2": params["b2"].astype(jnp.float32),
        "w3": w3p,
        "b3": b3p,
        "num_classes": n_cls,
    }


def model_forward(token_ids, offsets, prepared, *, bag_tile=128):
    """Equivalent of Model.forward(token_ids, offsets)."""
    emb = prepared["embedding"]
    w1, b1 = prepared["w1"], prepared["b1"]
    w2, b2 = prepared["w2"], prepared["b2"]
    w3, b3 = prepared["w3"], prepared["b3"]
    n_cls = prepared["num_classes"]

    vocab, d_model = emb.shape
    hidden = w1.shape[1]
    c_pad = w3.shape[1]
    t_tot = token_ids.shape[0]
    n_bags = offsets.shape[0]

    assert bag_tile % 8 == 0
    # VMEM-resident table fast path only.
    # TODO(synk): for vocabularies whose f32 table exceeds the VMEM budget, fall
    # back to an HBM-resident table with a 4-8 deep per-row DMA gather pipeline.
    if emb.size * emb.dtype.itemsize > _VMEM_TABLE_BUDGET:
        raise NotImplementedError("embedding table too large for VMEM-resident path")
    # TODO(synk): token_ids/offsets are scalar-prefetched into SMEM; very long
    # token streams would need per-tile DMA'd index slices instead.
    # TODO(synk): out-of-range token ids read garbage rows instead of raising a
    # clean index error like torch.nn.EmbeddingBag.

    # Pad bags to a multiple of bag_tile; padded bags are empty (count = 0).
    b_pad = pl.cdiv(n_bags, bag_tile) * bag_tile
    offsets = offsets.astype(jnp.int32)
    off_ext = jnp.concatenate(
        [offsets, jnp.full((b_pad + 1 - n_bags,), t_tot, jnp.int32)])
    counts = (off_ext[1:] - off_ext[:-1]).astype(jnp.float32)
    inv = jnp.where(counts > 0.0, 1.0 / jnp.maximum(counts, 1.0), 0.0)
    inv = inv.reshape(b_pad, 1)

    kernel = functools.partial(_embedbag_mlp_kernel, bag_tile=bag_tile)

    out = pl.pallas_call(
        kernel,
        out_shape=jax.ShapeDtypeStruct((b_pad, c_pad), jnp.float32),
        grid_spec=pltpu.PrefetchScalarGridSpec(
            num_scalar_prefetch=2,
            grid=(b_pad // bag_tile,),
            in_specs=[
                pl.BlockSpec((vocab, d_model), lambda i, *_: (0, 0)),    # table
                pl.BlockSpec((bag_tile, 1), lambda i, *_: (i, 0)),       # 1/count
                pl.BlockSpec((d_model, hidden), lambda i, *_: (0, 0)),   # w1
                pl.BlockSpec((1, hidden), lambda i, *_: (0, 0)),         # b1
                pl.BlockSpec((hidden, hidden), lambda i, *_: (0, 0)),    # w2
                pl.BlockSpec((1, hidden), lambda i, *_: (0, 0)),         # b2
                pl.BlockSpec((hidden, c_pad), lambda i, *_: (0, 0)),     # w3
                pl.BlockSpec((1, c_pad), lambda i, *_: (0, 0)),          # b3
            ],
            out_specs=pl.BlockSpec((bag_tile, c_pad), lambda i, *_: (i, 0)),
            scratch_shapes=[pltpu.VMEM((bag_tile, d_model), jnp.float32)],
        ),
        compiler_params=pltpu.CompilerParams(
            dimension_semantics=("parallel",)),
    )(off_ext, token_ids.astype(jnp.int32),
      emb, inv, w1, b1, w2, b2, w3, b3)

    return out[:n_bags, :n_cls]


def init_params(key, vocab_size, embedding_dim, hidden_dim, num_classes):
    ks = jax.random.split(key, 7)

    def lin(k, fan_in, shape):
        bound = 1.0 / jnp.sqrt(fan_in)
        return jax.random.uniform(k, shape, jnp.float32, -bound, bound)

    return {
        "embedding": jax.random.normal(ks[0], (vocab_size, embedding_dim),
                                       jnp.float32),
        "w1": lin(ks[1], embedding_dim, (embedding_dim, hidden_dim)),
        "b1": lin(ks[2], embedding_dim, (1, hidden_dim)),
        "w2": lin(ks[3], hidden_dim, (hidden_dim, hidden_dim)),
        "b2": lin(ks[4], hidden_dim, (1, hidden_dim)),
        "w3": lin(ks[5], hidden_dim, (hidden_dim, num_classes)),
        "b3": lin(ks[6], hidden_dim, (1, num_classes)),
    }


if __name__ == "__main__":
    # Module-consistent dims (embedding_dim=256, hidden_dim=512, num_classes=2),
    # small vocab / batch / sequence.
    vocab_size, embedding_dim, hidden_dim, num_classes = 500, 256, 512, 2
    n_bags, total_tokens = 20, 96

    key = jax.random.PRNGKey(0)
    kp, kcut, ktok = jax.random.split(key, 3)
    params = init_params(kp, vocab_size, embedding_dim, hidden_dim, num_classes)
    prepared = prepare_params(params)   # one-time: bf16 casts + class padding

    # Variable-length bags (EmbeddingBag offsets); may include empty bags.
    cuts = jnp.sort(jax.random.randint(kcut, (n_bags - 1,), 0,
                                       total_tokens + 1, dtype=jnp.int32))
    offsets = jnp.concatenate([jnp.zeros((1,), jnp.int32), cuts])
    token_ids = jax.random.randint(ktok, (total_tokens,), 0, vocab_size,
                                   dtype=jnp.int32)

    out = model_forward(token_ids, offsets, prepared)
    jax.block_until_ready(out)

    # Pure-JAX reference mirroring the kernel's f32 gather / bf16-MXU MLP.
    gathered = jnp.take(params["embedding"], token_ids, axis=0)       # f32
    seg = jnp.searchsorted(offsets, jnp.arange(total_tokens, dtype=jnp.int32),
                           side="right") - 1
    sums = jax.ops.segment_sum(gathered, seg, num_segments=n_bags)
    counts = jnp.diff(jnp.concatenate(
        [offsets, jnp.array([total_tokens], jnp.int32)])).astype(jnp.float32)
    means = sums / jnp.maximum(counts, 1.0)[:, None]

    def linear(x, w, b):
        return jnp.dot(x.astype(jnp.bfloat16), w.astype(jnp.bfloat16),
                       preferred_element_type=jnp.float32) + b

    h = jnp.maximum(linear(means, params["w1"], params["b1"]), 0.0)
    h = jnp.maximum(linear(h, params["w2"], params["b2"]), 0.0)
    ref = linear(h, params["w3"], params["b3"])

    assert out.shape == (n_bags, num_classes)
    assert jnp.allclose(out, ref, atol=1e-2, rtol=1e-2), (
        float(jnp.max(jnp.abs(out - ref))))
    print("KERNEL_OK")
</pallas_src>

<mosaic_0001>
module attributes {stable_mosaic.version = 11 : i64} {
  func.func @_embedbag_mlp_kernel(%arg0: i32, %arg1: memref<129xi32, #tpu.memory_space<smem>>, %arg2: memref<96xi32, #tpu.memory_space<smem>>, %arg3: memref<500x256xf32, #tpu.memory_space<vmem>>, %arg4: memref<128x1xf32, #tpu.memory_space<vmem>>, %arg5: memref<256x512xbf16, #tpu.memory_space<vmem>>, %arg6: memref<1x512xf32, #tpu.memory_space<vmem>>, %arg7: memref<512x512xbf16, #tpu.memory_space<vmem>>, %arg8: memref<1x512xf32, #tpu.memory_space<vmem>>, %arg9: memref<512x128xbf16, #tpu.memory_space<vmem>>, %arg10: memref<1x128xf32, #tpu.memory_space<vmem>>, %arg11: memref<128x128xf32, #tpu.memory_space<vmem>>, %arg12: memref<128x256xf32, #tpu.memory_space<vmem>>) attributes {dimension_semantics = [#tpu.dimension_semantics<parallel>], iteration_bounds = array<i64: 1>, scalar_prefetch = 2 : i64, scratch_operands = 1 : i64, tpu.core_type = #tpu.core_type<tc>, window_params = [{pipeline_mode = #tpu.pipeline_mode<synchronous>, transform_indices = @transform_0, window_bounds = array<i64: 500, 256>}, {transform_indices = @transform_1, window_bounds = array<i64: 128, 1>}, {pipeline_mode = #tpu.pipeline_mode<synchronous>, transform_indices = @transform_2, window_bounds = array<i64: 256, 512>}, {pipeline_mode = #tpu.pipeline_mode<synchronous>, transform_indices = @transform_3, window_bounds = array<i64: 1, 512>}, {pipeline_mode = #tpu.pipeline_mode<synchronous>, transform_indices = @transform_4, window_bounds = array<i64: 512, 512>}, {pipeline_mode = #tpu.pipeline_mode<synchronous>, transform_indices = @transform_5, window_bounds = array<i64: 1, 512>}, {pipeline_mode = #tpu.pipeline_mode<synchronous>, transform_indices = @transform_6, window_bounds = array<i64: 512, 128>}, {pipeline_mode = #tpu.pipeline_mode<synchronous>, transform_indices = @transform_7, window_bounds = array<i64: 1, 128>}, {transform_indices = @transform_8, window_bounds = array<i64: 128, 128>}]} {
    %c128_i32 = arith.constant 128 : i32
    %0 = arith.muli %arg0, %c128_i32 : i32
    %1 = tpu.iota {dimensions = array<i32: 0>} : vector<8x1xi32>
    %c0_i32 = arith.constant 0 : i32
    %c16_i32 = arith.constant 16 : i32
    %2 = arith.addi %c0_i32, %c16_i32 : i32
    %c1_i32 = arith.constant 1 : i32
    scf.for %arg13 = %c0_i32 to %2 step %c1_i32  : i32 {
      %c8_i32 = arith.constant 8 : i32
      %30 = arith.muli %arg13, %c8_i32 : i32
      %31 = arith.addi %0, %30 : i32
      %cst_22 = arith.constant 0.000000e+00 : f32
      %32 = vector.broadcast %cst_22 : f32 to vector<8x256xf32>
      %c0_i32_23 = arith.constant 0 : i32
      %33 = arith.addi %31, %c0_i32_23 : i32
      %34 = arith.index_cast %33 : i32 to index
      %35 = memref.load %arg1[%34] : memref<129xi32, #tpu.memory_space<smem>>
      %c0_i32_24 = arith.constant 0 : i32
      %36 = arith.addi %31, %c0_i32_24 : i32
      %c1_i32_25 = arith.constant 1 : i32
      %37 = arith.addi %36, %c1_i32_25 : i32
      %38 = arith.index_cast %37 : i32 to index
      %39 = memref.load %arg1[%38] : memref<129xi32, #tpu.memory_space<smem>>
      %cst_26 = arith.constant 0.000000e+00 : f32
      %40 = vector.broadcast %cst_26 : f32 to vector<1x256xf32>
      %41 = arith.subi %39, %35 : i32
      %42 = arith.addi %35, %41 : i32
      %c1_i32_27 = arith.constant 1 : i32
      %43 = scf.for %arg14 = %35 to %42 step %c1_i32_27 iter_args(%arg15 = %40) -> (vector<1x256xf32>)  : i32 {
        %181 = arith.index_cast %arg14 : i32 to index
        %182 = memref.load %arg2[%181] : memref<96xi32, #tpu.memory_space<smem>>
        %183 = arith.index_cast %182 : i32 to index
        %c0_67 = arith.constant 0 : index
        %184 = vector.load %arg3[%183, %c0_67] : memref<500x256xf32, #tpu.memory_space<vmem>>, vector<1x256xf32>
        %185 = arith.addf %arg15, %184 : vector<1x256xf32>
        scf.yield %185 : vector<1x256xf32>
      }
      %c0_i32_28 = arith.constant 0 : i32
      %44 = vector.broadcast %c0_i32_28 : i32 to vector<8x1xi32>
      %45 = arith.cmpi eq, %1, %44 : vector<8x1xi32>
      %46 = vector.shape_cast %45 : vector<8x1xi1> to vector<8x1xi1>
      %47 = vector.broadcast %46 : vector<8x1xi1> to vector<8x256xi1>
      %48 = vector.shape_cast %43 : vector<1x256xf32> to vector<1x256xf32>
      %49 = vector.broadcast %48 : vector<1x256xf32> to vector<8x256xf32>
      %50 = arith.select %47, %49, %32 : vector<8x256xi1>, vector<8x256xf32>
      %c1_i32_29 = arith.constant 1 : i32
      %51 = arith.addi %31, %c1_i32_29 : i32
      %52 = arith.index_cast %51 : i32 to index
      %53 = memref.load %arg1[%52] : memref<129xi32, #tpu.memory_space<smem>>
      %c1_i32_30 = arith.constant 1 : i32
      %54 = arith.addi %31, %c1_i32_30 : i32
      %c1_i32_31 = arith.constant 1 : i32
      %55 = arith.addi %54, %c1_i32_31 : i32
      %56 = arith.index_cast %55 : i32 to index
      %57 = memref.load %arg1[%56] : memref<129xi32, #tpu.memory_space<smem>>
      %cst_32 = arith.constant 0.000000e+00 : f32
      %58 = vector.broadcast %cst_32 : f32 to vector<1x256xf32>
      %59 = arith.subi %57, %53 : i32
      %60 = arith.addi %53, %59 : i32
      %c1_i32_33 = arith.constant 1 : i32
      %61 = scf.for %arg14 = %53 to %60 step %c1_i32_33 iter_args(%arg15 = %58) -> (vector<1x256xf32>)  : i32 {
        %181 = arith.index_cast %arg14 : i32 to index
        %182 = memref.load %arg2[%181] : memref<96xi32, #tpu.memory_space<smem>>
        %183 = arith.index_cast %182 : i32 to index
        %c0_67 = arith.constant 0 : index
        %184 = vector.load %arg3[%183, %c0_67] : memref<500x256xf32, #tpu.memory_space<vmem>>, vector<1x256xf32>
        %185 = arith.addf %arg15, %184 : vector<1x256xf32>
        scf.yield %185 : vector<1x256xf32>
      }
      %c1_i32_34 = arith.constant 1 : i32
      %62 = vector.broadcast %c1_i32_34 : i32 to vector<8x1xi32>
      %63 = arith.cmpi eq, %1, %62 : vector<8x1xi32>
      %64 = vector.shape_cast %63 : vector<8x1xi1> to vector<8x1xi1>
      %65 = vector.broadcast %64 : vector<8x1xi1> to vector<8x256xi1>
      %66 = vector.shape_cast %61 : vector<1x256xf32> to vector<1x256xf32>
      %67 = vector.broadcast %66 : vector<1x256xf32> to vector<8x256xf32>
      %68 = arith.select %65, %67, %50 : vector<8x256xi1>, vector<8x256xf32>
      %c2_i32 = arith.constant 2 : i32
      %69 = arith.addi %31, %c2_i32 : i32
      %70 = arith.index_cast %69 : i32 to index
      %71 = memref.load %arg1[%70] : memref<129xi32, #tpu.memory_space<smem>>
      %c2_i32_35 = arith.constant 2 : i32
      %72 = arith.addi %31, %c2_i32_35 : i32
      %c1_i32_36 = arith.constant 1 : i32
      %73 = arith.addi %72, %c1_i32_36 : i32
      %74 = arith.index_cast %73 : i32 to index
      %75 = memref.load %arg1[%74] : memref<129xi32, #tpu.memory_space<smem>>
      %cst_37 = arith.constant 0.000000e+00 : f32
      %76 = vector.broadcast %cst_37 : f32 to vector<1x256xf32>
      %77 = arith.subi %75, %71 : i32
      %78 = arith.addi %71, %77 : i32
      %c1_i32_38 = arith.constant 1 : i32
      %79 = scf.for %arg14 = %71 to %78 step %c1_i32_38 iter_args(%arg15 = %76) -> (vector<1x256xf32>)  : i32 {
        %181 = arith.index_cast %arg14 : i32 to index
        %182 = memref.load %arg2[%181] : memref<96xi32, #tpu.memory_space<smem>>
        %183 = arith.index_cast %182 : i32 to index
        %c0_67 = arith.constant 0 : index
        %184 = vector.load %arg3[%183, %c0_67] : memref<500x256xf32, #tpu.memory_space<vmem>>, vector<1x256xf32>
        %185 = arith.addf %arg15, %184 : vector<1x256xf32>
        scf.yield %185 : vector<1x256xf32>
      }
      %c2_i32_39 = arith.constant 2 : i32
      %80 = vector.broadcast %c2_i32_39 : i32 to vector<8x1xi32>
      %81 = arith.cmpi eq, %1, %80 : vector<8x1xi32>
      %82 = vector.shape_cast %81 : vector<8x1xi1> to vector<8x1xi1>
      %83 = vector.broadcast %82 : vector<8x1xi1> to vector<8x256xi1>
      %84 = vector.shape_cast %79 : vector<1x256xf32> to vector<1x256xf32>
      %85 = vector.broadcast %84 : vector<1x256xf32> to vector<8x256xf32>
      %86 = arith.select %83, %85, %68 : vector<8x256xi1>, vector<8x256xf32>
      %c3_i32 = arith.constant 3 : i32
      %87 = arith.addi %31, %c3_i32 : i32
      %88 = arith.index_cast %87 : i32 to index
      %89 = memref.load %arg1[%88] : memref<129xi32, #tpu.memory_space<smem>>
      %c3_i32_40 = arith.constant 3 : i32
      %90 = arith.addi %31, %c3_i32_40 : i32
      %c1_i32_41 = arith.constant 1 : i32
      %91 = arith.addi %90, %c1_i32_41 : i32
      %92 = arith.index_cast %91 : i32 to index
      %93 = memref.load %arg1[%92] : memref<129xi32, #tpu.memory_space<smem>>
      %cst_42 = arith.constant 0.000000e+00 : f32
      %94 = vector.broadcast %cst_42 : f32 to vector<1x256xf32>
      %95 = arith.subi %93, %89 : i32
      %96 = arith.addi %89, %95 : i32
      %c1_i32_43 = arith.constant 1 : i32
      %97 = scf.for %arg14 = %89 to %96 step %c1_i32_43 iter_args(%arg15 = %94) -> (vector<1x256xf32>)  : i32 {
        %181 = arith.index_cast %arg14 : i32 to index
        %182 = memref.load %arg2[%181] : memref<96xi32, #tpu.memory_space<smem>>
        %183 = arith.index_cast %182 : i32 to index
        %c0_67 = arith.constant 0 : index
        %184 = vector.load %arg3[%183, %c0_67] : memref<500x256xf32, #tpu.memory_space<vmem>>, vector<1x256xf32>
        %185 = arith.addf %arg15, %184 : vector<1x256xf32>
        scf.yield %185 : vector<1x256xf32>
      }
      %c3_i32_44 = arith.constant 3 : i32
      %98 = vector.broadcast %c3_i32_44 : i32 to vector<8x1xi32>
      %99 = arith.cmpi eq, %1, %98 : vector<8x1xi32>
      %100 = vector.shape_cast %99 : vector<8x1xi1> to vector<8x1xi1>
      %101 = vector.broadcast %100 : vector<8x1xi1> to vector<8x256xi1>
      %102 = vector.shape_cast %97 : vector<1x256xf32> to vector<1x256xf32>
      %103 = vector.broadcast %102 : vector<1x256xf32> to vector<8x256xf32>
      %104 = arith.select %101, %103, %86 : vector<8x256xi1>, vector<8x256xf32>
      %c4_i32 = arith.constant 4 : i32
      %105 = arith.addi %31, %c4_i32 : i32
      %106 = arith.index_cast %105 : i32 to index
      %107 = memref.load %arg1[%106] : memref<129xi32, #tpu.memory_space<smem>>
      %c4_i32_45 = arith.constant 4 : i32
      %108 = arith.addi %31, %c4_i32_45 : i32
      %c1_i32_46 = arith.constant 1 : i32
      %109 = arith.addi %108, %c1_i32_46 : i32
      %110 = arith.index_cast %109 : i32 to index
      %111 = memref.load %arg1[%110] : memref<129xi32, #tpu.memory_space<smem>>
      %cst_47 = arith.constant 0.000000e+00 : f32
      %112 = vector.broadcast %cst_47 : f32 to vector<1x256xf32>
      %113 = arith.subi %111, %107 : i32
      %114 = arith.addi %107, %113 : i32
      %c1_i32_48 = arith.constant 1 : i32
      %115 = scf.for %arg14 = %107 to %114 step %c1_i32_48 iter_args(%arg15 = %112) -> (vector<1x256xf32>)  : i32 {
        %181 = arith.index_cast %arg14 : i32 to index
        %182 = memref.load %arg2[%181] : memref<96xi32, #tpu.memory_space<smem>>
        %183 = arith.index_cast %182 : i32 to index
        %c0_67 = arith.constant 0 : index
        %184 = vector.load %arg3[%183, %c0_67] : memref<500x256xf32, #tpu.memory_space<vmem>>, vector<1x256xf32>
        %185 = arith.addf %arg15, %184 : vector<1x256xf32>
        scf.yield %185 : vector<1x256xf32>
      }
      %c4_i32_49 = arith.constant 4 : i32
      %116 = vector.broadcast %c4_i32_49 : i32 to vector<8x1xi32>
      %117 = arith.cmpi eq, %1, %116 : vector<8x1xi32>
      %118 = vector.shape_cast %117 : vector<8x1xi1> to vector<8x1xi1>
      %119 = vector.broadcast %118 : vector<8x1xi1> to vector<8x256xi1>
      %120 = vector.shape_cast %115 : vector<1x256xf32> to vector<1x256xf32>
      %121 = vector.broadcast %120 : vector<1x256xf32> to vector<8x256xf32>
      %122 = arith.select %119, %121, %104 : vector<8x256xi1>, vector<8x256xf32>
      %c5_i32 = arith.constant 5 : i32
      %123 = arith.addi %31, %c5_i32 : i32
      %124 = arith.index_cast %123 : i32 to index
      %125 = memref.load %arg1[%124] : memref<129xi32, #tpu.memory_space<smem>>
      %c5_i32_50 = arith.constant 5 : i32
      %126 = arith.addi %31, %c5_i32_50 : i32
      %c1_i32_51 = arith.constant 1 : i32
      %127 = arith.addi %126, %c1_i32_51 : i32
      %128 = arith.index_cast %127 : i32 to index
      %129 = memref.load %arg1[%128] : memref<129xi32, #tpu.memory_space<smem>>
      %cst_52 = arith.constant 0.000000e+00 : f32
      %130 = vector.broadcast %cst_52 : f32 to vector<1x256xf32>
      %131 = arith.subi %129, %125 : i32
      %132 = arith.addi %125, %131 : i32
      %c1_i32_53 = arith.constant 1 : i32
      %133 = scf.for %arg14 = %125 to %132 step %c1_i32_53 iter_args(%arg15 = %130) -> (vector<1x256xf32>)  : i32 {
        %181 = arith.index_cast %arg14 : i32 to index
        %182 = memref.load %arg2[%181] : memref<96xi32, #tpu.memory_space<smem>>
        %183 = arith.index_cast %182 : i32 to index
        %c0_67 = arith.constant 0 : index
        %184 = vector.load %arg3[%183, %c0_67] : memref<500x256xf32, #tpu.memory_space<vmem>>, vector<1x256xf32>
        %185 = arith.addf %arg15, %184 : vector<1x256xf32>
        scf.yield %185 : vector<1x256xf32>
      }
      %c5_i32_54 = arith.constant 5 : i32
      %134 = vector.broadcast %c5_i32_54 : i32 to vector<8x1xi32>
      %135 = arith.cmpi eq, %1, %134 : vector<8x1xi32>
      %136 = vector.shape_cast %135 : vector<8x1xi1> to vector<8x1xi1>
      %137 = vector.broadcast %136 : vector<8x1xi1> to vector<8x256xi1>
      %138 = vector.shape_cast %133 : vector<1x256xf32> to vector<1x256xf32>
      %139 = vector.broadcast %138 : vector<1x256xf32> to vector<8x256xf32>
      %140 = arith.select %137, %139, %122 : vector<8x256xi1>, vector<8x256xf32>
      %c6_i32 = arith.constant 6 : i32
      %141 = arith.addi %31, %c6_i32 : i32
      %142 = arith.index_cast %141 : i32 to index
      %143 = memref.load %arg1[%142] : memref<129xi32, #tpu.memory_space<smem>>
      %c6_i32_55 = arith.constant 6 : i32
      %144 = arith.addi %31, %c6_i32_55 : i32
      %c1_i32_56 = arith.constant 1 : i32
      %145 = arith.addi %144, %c1_i32_56 : i32
      %146 = arith.index_cast %145 : i32 to index
      %147 = memref.load %arg1[%146] : memref<129xi32, #tpu.memory_space<smem>>
      %cst_57 = arith.constant 0.000000e+00 : f32
      %148 = vector.broadcast %cst_57 : f32 to vector<1x256xf32>
      %149 = arith.subi %147, %143 : i32
      %150 = arith.addi %143, %149 : i32
      %c1_i32_58 = arith.constant 1 : i32
      %151 = scf.for %arg14 = %143 to %150 step %c1_i32_58 iter_args(%arg15 = %148) -> (vector<1x256xf32>)  : i32 {
        %181 = arith.index_cast %arg14 : i32 to index
        %182 = memref.load %arg2[%181] : memref<96xi32, #tpu.memory_space<smem>>
        %183 = arith.index_cast %182 : i32 to index
        %c0_67 = arith.constant 0 : index
        %184 = vector.load %arg3[%183, %c0_67] : memref<500x256xf32, #tpu.memory_space<vmem>>, vector<1x256xf32>
        %185 = arith.addf %arg15, %184 : vector<1x256xf32>
        scf.yield %185 : vector<1x256xf32>
      }
      %c6_i32_59 = arith.constant 6 : i32
      %152 = vector.broadcast %c6_i32_59 : i32 to vector<8x1xi32>
      %153 = arith.cmpi eq, %1, %152 : vector<8x1xi32>
      %154 = vector.shape_cast %153 : vector<8x1xi1> to vector<8x1xi1>
      %155 = vector.broadcast %154 : vector<8x1xi1> to vector<8x256xi1>
      %156 = vector.shape_cast %151 : vector<1x256xf32> to vector<1x256xf32>
      %157 = vector.broadcast %156 : vector<1x256xf32> to vector<8x256xf32>
      %158 = arith.select %155, %157, %140 : vector<8x256xi1>, vector<8x256xf32>
      %c7_i32 = arith.constant 7 : i32
      %159 = arith.addi %31, %c7_i32 : i32
      %160 = arith.index_cast %159 : i32 to index
      %161 = memref.load %arg1[%160] : memref<129xi32, #tpu.memory_space<smem>>
      %c7_i32_60 = arith.constant 7 : i32
      %162 = arith.addi %31, %c7_i32_60 : i32
      %c1_i32_61 = arith.constant 1 : i32
      %163 = arith.addi %162, %c1_i32_61 : i32
      %164 = arith.index_cast %163 : i32 to index
      %165 = memref.load %arg1[%164] : memref<129xi32, #tpu.memory_space<smem>>
      %cst_62 = arith.constant 0.000000e+00 : f32
      %166 = vector.broadcast %cst_62 : f32 to vector<1x256xf32>
      %167 = arith.subi %165, %161 : i32
      %168 = arith.addi %161, %167 : i32
      %c1_i32_63 = arith.constant 1 : i32
      %169 = scf.for %arg14 = %161 to %168 step %c1_i32_63 iter_args(%arg15 = %166) -> (vector<1x256xf32>)  : i32 {
        %181 = arith.index_cast %arg14 : i32 to index
        %182 = memref.load %arg2[%181] : memref<96xi32, #tpu.memory_space<smem>>
        %183 = arith.index_cast %182 : i32 to index
        %c0_67 = arith.constant 0 : index
        %184 = vector.load %arg3[%183, %c0_67] : memref<500x256xf32, #tpu.memory_space<vmem>>, vector<1x256xf32>
        %185 = arith.addf %arg15, %184 : vector<1x256xf32>
        scf.yield %185 : vector<1x256xf32>
      }
      %c7_i32_64 = arith.constant 7 : i32
      %170 = vector.broadcast %c7_i32_64 : i32 to vector<8x1xi32>
      %171 = arith.cmpi eq, %1, %170 : vector<8x1xi32>
      %172 = vector.shape_cast %171 : vector<8x1xi1> to vector<8x1xi1>
      %173 = vector.broadcast %172 : vector<8x1xi1> to vector<8x256xi1>
      %174 = vector.shape_cast %169 : vector<1x256xf32> to vector<1x256xf32>
      %175 = vector.broadcast %174 : vector<1x256xf32> to vector<8x256xf32>
      %176 = arith.select %173, %175, %158 : vector<8x256xi1>, vector<8x256xf32>
      %c8_i32_65 = arith.constant 8 : i32
      %177 = arith.muli %arg13, %c8_i32_65 : i32
      %178 = tpu.assume_multiple %177, 8 : i32
      %179 = arith.index_cast %178 : i32 to index
      %c0_66 = arith.constant 0 : index
      %180 = vector.load %arg12[%179, %c0_66] : memref<128x256xf32, #tpu.memory_space<vmem>>, vector<8x256xf32>
      tpu.vector_store %arg12[%179, %c0_66], %176 {strides = array<i32>} : memref<128x256xf32, #tpu.memory_space<vmem>>, vector<8x256xf32>,
    }
    %c16_i32_0 = arith.constant 16 : i32
    %c0 = arith.constant 0 : index
    %c0_1 = arith.constant 0 : index
    %3 = vector.load %arg12[%c0, %c0_1] : memref<128x256xf32, #tpu.memory_space<vmem>>, vector<128x256xf32>
    %c0_2 = arith.constant 0 : index
    %c0_3 = arith.constant 0 : index
    %4 = vector.load %arg4[%c0_2, %c0_3] : memref<128x1xf32, #tpu.memory_space<vmem>>, vector<128x1xf32>
    %5 = vector.broadcast %4 : vector<128x1xf32> to vector<128x256xf32>
    %6 = arith.mulf %3, %5 : vector<128x256xf32>
    %7 = arith.truncf %6 : vector<128x256xf32> to vector<128x256xbf16>
    %c0_4 = arith.constant 0 : index
    %c0_5 = arith.constant 0 : index
    %8 = vector.load %arg5[%c0_4, %c0_5] : memref<256x512xbf16, #tpu.memory_space<vmem>>, vector<256x512xbf16>
    %cst = arith.constant dense<0.000000e+00> : vector<128x512xf32>
    %9 = tpu.matmul %7, %8, %cst {dimension_numbers = #tpu.dot_dimension_numbers<[1], [0], [0], [1], [0, 0, 1, 1], [], []>} : vector<128x256xbf16>, vector<256x512xbf16>, vector<128x512xf32> -> vector<128x512xf32>
    %c0_6 = arith.constant 0 : index
    %c0_7 = arith.constant 0 : index
    %10 = vector.load %arg6[%c0_6, %c0_7] : memref<1x512xf32, #tpu.memory_space<vmem>>, vector<1x512xf32>
    %11 = vector.broadcast %10 : vector<1x512xf32> to vector<128x512xf32>
    %12 = arith.addf %9, %11 : vector<128x512xf32>
    %cst_8 = arith.constant 0.000000e+00 : f32
    %13 = vector.broadcast %cst_8 : f32 to vector<128x512xf32>
    %14 = arith.maximumf %12, %13 : vector<128x512xf32>
    %15 = arith.truncf %14 : vector<128x512xf32> to vector<128x512xbf16>
    %c0_9 = arith.constant 0 : index
    %c0_10 = arith.constant 0 : index
    %16 = vector.load %arg7[%c0_9, %c0_10] : memref<512x512xbf16, #tpu.memory_space<vmem>>, vector<512x512xbf16>
    %cst_11 = arith.constant dense<0.000000e+00> : vector<128x512xf32>
    %17 = tpu.matmul %15, %16, %cst_11 {dimension_numbers = #tpu.dot_dimension_numbers<[1], [0], [0], [1], [0, 0, 1, 1], [], []>} : vector<128x512xbf16>, vector<512x512xbf16>, vector<128x512xf32> -> vector<128x512xf32>
    %c0_12 = arith.constant 0 : index
    %c0_13 = arith.constant 0 : index
    %18 = vector.load %arg8[%c0_12, %c0_13] : memref<1x512xf32, #tpu.memory_space<vmem>>, vector<1x512xf32>
    %19 = vector.broadcast %18 : vector<1x512xf32> to vector<128x512xf32>
    %20 = arith.addf %17, %19 : vector<128x512xf32>
    %cst_14 = arith.constant 0.000000e+00 : f32
    %21 = vector.broadcast %cst_14 : f32 to vector<128x512xf32>
    %22 = arith.maximumf %20, %21 : vector<128x512xf32>
    %23 = arith.truncf %22 : vector<128x512xf32> to vector<128x512xbf16>
    %c0_15 = arith.constant 0 : index
    %c0_16 = arith.constant 0 : index
    %24 = vector.load %arg9[%c0_15, %c0_16] : memref<512x128xbf16, #tpu.memory_space<vmem>>, vector<512x128xbf16>
    %cst_17 = arith.constant dense<0.000000e+00> : vector<128x128xf32>
    %25 = tpu.matmul %23, %24, %cst_17 {dimension_numbers = #tpu.dot_dimension_numbers<[1], [0], [0], [1], [0, 0, 1, 1], [], []>} : vector<128x512xbf16>, vector<512x128xbf16>, vector<128x128xf32> -> vector<128x128xf32>
    %c0_18 = arith.constant 0 : index
    %c0_19 = arith.constant 0 : index
    %26 = vector.load %arg10[%c0_18, %c0_19] : memref<1x128xf32, #tpu.memory_space<vmem>>, vector<1x128xf32>
    %27 = vector.broadcast %26 : vector<1x128xf32> to vector<128x128xf32>
    %28 = arith.addf %25, %27 : vector<128x128xf32>
    %c0_20 = arith.constant 0 : index
    %c0_21 = arith.constant 0 : index
    %29 = vector.load %arg11[%c0_20, %c0_21] : memref<128x128xf32, #tpu.memory_space<vmem>>, vector<128x128xf32>
    tpu.vector_store %arg11[%c0_20, %c0_21], %28 {strides = array<i32>} : memref<128x128xf32, #tpu.memory_space<vmem>>, vector<128x128xf32>,
    return
  }
  func.func @transform_0(%arg0: i32, %arg1: memref<129xi32, #tpu.memory_space<smem>>, %arg2: memref<96xi32, #tpu.memory_space<smem>>) -> (i32, i32) {
    %c0_i32 = arith.constant 0 : i32
    %c0_i32_0 = arith.constant 0 : i32
    %c0_i32_1 = arith.constant 0 : i32
    return %c0_i32, %c0_i32_0 : i32, i32
  }
  func.func @transform_1(%arg0: i32, %arg1: memref<129xi32, #tpu.memory_space<smem>>, %arg2: memref<96xi32, #tpu.memory_space<smem>>) -> (i32, i32) {
    %c0_i32 = arith.constant 0 : i32
    %c0_i32_0 = arith.constant 0 : i32
    return %arg0, %c0_i32 : i32, i32
  }
  func.func @transform_2(%arg0: i32, %arg1: memref<129xi32, #tpu.memory_space<smem>>, %arg2: memref<96xi32, #tpu.memory_space<smem>>) -> (i32, i32) {
    %c0_i32 = arith.constant 0 : i32
    %c0_i32_0 = arith.constant 0 : i32
    %c0_i32_1 = arith.constant 0 : i32
    return %c0_i32, %c0_i32_0 : i32, i32
  }
  func.func @transform_3(%arg0: i32, %arg1: memref<129xi32, #tpu.memory_space<smem>>, %arg2: memref<96xi32, #tpu.memory_space<smem>>) -> (i32, i32) {
    %c0_i32 = arith.constant 0 : i32
    %c0_i32_0 = arith.constant 0 : i32
    %c0_i32_1 = arith.constant 0 : i32
    return %c0_i32, %c0_i32_0 : i32, i32
  }
  func.func @transform_4(%arg0: i32, %arg1: memref<129xi32, #tpu.memory_space<smem>>, %arg2: memref<96xi32, #tpu.memory_space<smem>>) -> (i32, i32) {
    %c0_i32 = arith.constant 0 : i32
    %c0_i32_0 = arith.constant 0 : i32
    %c0_i32_1 = arith.constant 0 : i32
    return %c0_i32, %c0_i32_0 : i32, i32
  }
  func.func @transform_5(%arg0: i32, %arg1: memref<129xi32, #tpu.memory_space<smem>>, %arg2: memref<96xi32, #tpu.memory_space<smem>>) -> (i32, i32) {
    %c0_i32 = arith.constant 0 : i32
    %c0_i32_0 = arith.constant 0 : i32
    %c0_i32_1 = arith.constant 0 : i32
    return %c0_i32, %c0_i32_0 : i32, i32
  }
  func.func @transform_6(%arg0: i32, %arg1: memref<129xi32, #tpu.memory_space<smem>>, %arg2: memref<96xi32, #tpu.memory_space<smem>>) -> (i32, i32) {
    %c0_i32 = arith.constant 0 : i32
    %c0_i32_0 = arith.constant 0 : i32
    %c0_i32_1 = arith.constant 0 : i32
    return %c0_i32, %c0_i32_0 : i32, i32
  }
  func.func @transform_7(%arg0: i32, %arg1: memref<129xi32, #tpu.memory_space<smem>>, %arg2: memref<96xi32, #tpu.memory_space<smem>>) -> (i32, i32) {
    %c0_i32 = arith.constant 0 : i32
    %c0_i32_0 = arith.constant 0 : i32
    %c0_i32_1 = arith.constant 0 : i32
    return %c0_i32, %c0_i32_0 : i32, i32
  }
  func.func @transform_8(%arg0: i32, %arg1: memref<129xi32, #tpu.memory_space<smem>>, %arg2: memref<96xi32, #tpu.memory_space<smem>>) -> (i32, i32) {
    %c0_i32 = arith.constant 0 : i32
    %c0_i32_0 = arith.constant 0 : i32
    return %arg0, %c0_i32 : i32, i32
  }
}

</mosaic_0001>

<llo_original>
// kernel: tpu_custom_call.1
$region0: #{tpu_custom_call.1}
  #allocation0 [shape = 'u32[]', space=smem, size = 0x4, offset = 0x4, fixed_abs, tag = 'smem constant byte address 0x4 - core index']
  #allocation1 [shape = 'u32[72,128]{1,0:T(1,128)}', space=vmem, size = 0x9000, scoped, tag = 'internal scratch']
  #allocation2 [shape = 'f32[128,256]{1,0:T(8,128)}', space=vmem, size = 0x20000, scoped, tag = 'scratch operand']
  #allocation3 [shape = 's32[1]{0}', space=sflag, size = 0x4, scoped, tag = 'scoped memory for tpu_custom_call.1']
  #allocation4 [shape = 'u8[1024]{0}', space=smem, size = 0x400, scoped, tag = 'prefetched SMEM operand 0']
  #allocation5 [shape = 'u8[512]{0}', space=smem, size = 0x200, scoped, tag = 'prefetched SMEM operand 1']
  %s0 = inlined_call_operand.vmem [shape: s32[129], index: 0, kind: input, shape index: {}]
  %s1 = inlined_call_operand.vmem [shape: s32[96], index: 1, kind: input, shape index: {}]
  %s2 = inlined_call_operand.hbm [shape: f32[500,256], index: 2, kind: input, shape index: {}]
  %s3 = inlined_call_operand.vmem [shape: f32[128,1], index: 3, kind: input, shape index: {}]
  %s4 = inlined_call_operand.hbm [shape: bf16[256,512], index: 4, kind: input, shape index: {}]
  %s5 = inlined_call_operand.vmem [shape: f32[1,512], index: 5, kind: input, shape index: {}]
  %s6 = inlined_call_operand.hbm [shape: bf16[512,512], index: 6, kind: input, shape index: {}]
  %s7 = inlined_call_operand.vmem [shape: f32[1,512], index: 7, kind: input, shape index: {}]
  %s8 = inlined_call_operand.hbm [shape: bf16[512,128], index: 8, kind: input, shape index: {}]
  %s9 = inlined_call_operand.vmem [shape: f32[1,128], index: 9, kind: input, shape index: {}]
  %s10 = inlined_call_operand.hbm [shape: f32[128,128], index: 10, kind: output, shape index: {}]
  %s11 = sld [smem:[#allocation0]]
  $region121: #{tpu_custom_call.1} parent=0
    _
  %s13 = ssub.s32 1, %s11
  %s14 = scalar_select 0, %s13, %s11
  %s16 = sshll.u32 %s0, 4
  %s17 = int_to_ptr.vmem [resolvable:$true] %s16
  %19 = dma.vmem_to_smem %s17, 32, [#allocation4], [#allocation3]
  %s21 = sshll.u32 %s1, 4
  %s22 = int_to_ptr.vmem [resolvable:$true] %s21
  %24 = dma.vmem_to_smem %s22, 16, [#allocation5], [#allocation3]
  %26 = dma.done [#allocation3], 48
  %27 = sfence
  $region1: #{tpu_custom_call.1} parent=0
    #allocation6 [shape = 'u8[516096]{0}', space=vmem, size = 0x7e000, scoped, tag = 'input window, operand 2, single buffered']
    #allocation7 [shape = 's32[1]{0}', space=sflag, size = 0x4, scoped, tag = 'scoped memory for tpu_custom_call.1']
    #allocation8 [shape = 's32[1]{0}', space=sflag, size = 0x4, scoped, tag = 'scoped memory for tpu_custom_call.1']
    #allocation9 [shape = 'u8[262144]{0}', space=vmem, size = 0x40000, scoped, tag = 'input window, operand 4, single buffered']
    #allocation10 [shape = 's32[1]{0}', space=sflag, size = 0x4, scoped, tag = 'scoped memory for tpu_custom_call.1']
    #allocation11 [shape = 'u8[524288]{0}', space=vmem, size = 0x80000, scoped, tag = 'input window, operand 6, single buffered']
    #allocation12 [shape = 'u8[131072]{0}', space=vmem, size = 0x20000, scoped, tag = 'input window, operand 8, single buffered']
    #allocation13 [shape = 's32[1]{0}', space=sflag, size = 0x4, scoped, tag = 'scoped memory for tpu_custom_call.1']
    #allocation14 [shape = 'u8[65536]{0}', space=vmem, size = 0x10000, scoped, tag = 'output window, operand 0, single buffered']
    %28 = vsyncpa [#allocation7], 0
    %29 = vsyncpa [#allocation10], 0
    %30 = vsyncpa [#allocation13], 0
    %31 = vsyncpa [#allocation8], 0
    // Predicated region
    $region2: #{tpu_custom_call.1} parent=1 // pred_check
      _
    $region3: #{tpu_custom_call.1} parent=1 // pred_check_branch
      %33 = sbr.rel (0) target = $region5
    $region4: #{tpu_custom_call.1} parent=1 // pred_region
      %35 = vsyncadd [#allocation7], 0
      %s36 = sshll.u32 %s2, 4
      %s37 = int_to_ptr.hbm [resolvable:$true] %s36
      %s38 = sshll.u32 [#allocation6], 4
      %s39 = int_to_ptr.vmem [resolvable:$true] %s38
      %44 = dma.hbm_to_vmem [thread:$0]  %s37, 16128, %s39, [#allocation7], 256, 256, 16
    $region5: #{tpu_custom_call.1} parent=1 // pred_fallthru
      _
    // Predicated region
    $region6: #{tpu_custom_call.1} parent=1 // pred_check
      _
    $region7: #{tpu_custom_call.1} parent=1 // pred_check_branch
      %46 = sbr.rel (0) target = $region9
    $region8: #{tpu_custom_call.1} parent=1 // pred_region
      _
    $region9: #{tpu_custom_call.1} parent=1 // pred_fallthru
      _
    // Predicated region
    $region10: #{tpu_custom_call.1} parent=1 // pred_check
      _
    $region11: #{tpu_custom_call.1} parent=1 // pred_check_branch
      %48 = sbr.rel (0) target = $region13
    $region12: #{tpu_custom_call.1} parent=1 // pred_region
      %50 = vsyncadd [#allocation10], 0
      %s51 = sshll.u32 %s4, 4
      %s52 = int_to_ptr.hbm [resolvable:$true] %s51
      %s53 = sshll.u32 [#allocation9], 4
      %s54 = int_to_ptr.vmem [resolvable:$true] %s53
      %59 = dma.hbm_to_vmem [thread:$0]  %s52, 8192, %s54, [#allocation10], 256, 256, 16
    $region13: #{tpu_custom_call.1} parent=1 // pred_fallthru
      _
    // Predicated region
    $region14: #{tpu_custom_call.1} parent=1 // pred_check
      _
    $region15: #{tpu_custom_call.1} parent=1 // pred_check_branch
      %61 = sbr.rel (0) target = $region17
    $region16: #{tpu_custom_call.1} parent=1 // pred_region
      _
    $region17: #{tpu_custom_call.1} parent=1 // pred_fallthru
      _
    // Predicated region
    $region18: #{tpu_custom_call.1} parent=1 // pred_check
      _
    $region19: #{tpu_custom_call.1} parent=1 // pred_check_branch
      %63 = sbr.rel (0) target = $region21
    $region20: #{tpu_custom_call.1} parent=1 // pred_region
      %65 = vsyncadd [#allocation10], 0
      %s66 = sshll.u32 %s6, 4
      %s67 = int_to_ptr.hbm [resolvable:$true] %s66
      %s68 = sshll.u32 [#allocation11], 4
      %s69 = int_to_ptr.vmem [resolvable:$true] %s68
      %74 = dma.hbm_to_vmem [thread:$0]  %s67, 16384, %s69, [#allocation10], 256, 256, 16
    $region21: #{tpu_custom_call.1} parent=1 // pred_fallthru
      _
    // Predicated region
    $region22: #{tpu_custom_call.1} parent=1 // pred_check
      _
    $region23: #{tpu_custom_call.1} parent=1 // pred_check_branch
      %76 = sbr.rel (0) target = $region25
    $region24: #{tpu_custom_call.1} parent=1 // pred_region
      _
    $region25: #{tpu_custom_call.1} parent=1 // pred_fallthru
      _
    // Predicated region
    $region26: #{tpu_custom_call.1} parent=1 // pred_check
      _
    $region27: #{tpu_custom_call.1} parent=1 // pred_check_branch
      %78 = sbr.rel (0) target = $region29
    $region28: #{tpu_custom_call.1} parent=1 // pred_region
      %80 = vsyncadd [#allocation13], 0
      %s81 = sshll.u32 %s8, 4
      %s82 = int_to_ptr.hbm [resolvable:$true] %s81
      %s83 = sshll.u32 [#allocation12], 4
      %s84 = int_to_ptr.vmem [resolvable:$true] %s83
      %89 = dma.hbm_to_vmem [thread:$0]  %s82, 4096, %s84, [#allocation13], 64, 64, 4
    $region29: #{tpu_custom_call.1} parent=1 // pred_fallthru
      _
    // Predicated region
    $region30: #{tpu_custom_call.1} parent=1 // pred_check
      _
    $region31: #{tpu_custom_call.1} parent=1 // pred_check_branch
      %91 = sbr.rel (0) target = $region33
    $region32: #{tpu_custom_call.1} parent=1 // pred_region
      _
    $region33: #{tpu_custom_call.1} parent=1 // pred_fallthru
      _
    // Predicated region
    $region34: #{tpu_custom_call.1} parent=1 // pred_check
      _
    $region35: #{tpu_custom_call.1} parent=1 // pred_check_branch
      %93 = sbr.rel (0) target = $region37
    $region36: #{tpu_custom_call.1} parent=1 // pred_region
      %95 = dma.done [#allocation7], 16128
    $region37: #{tpu_custom_call.1} parent=1 // pred_fallthru
      _
    // Predicated region
    $region38: #{tpu_custom_call.1} parent=1 // pred_check
      _
    $region39: #{tpu_custom_call.1} parent=1 // pred_check_branch
      %97 = sbr.rel (0) target = $region41
    $region40: #{tpu_custom_call.1} parent=1 // pred_region
      %99 = dma.done [#allocation10], 8192
    $region41: #{tpu_custom_call.1} parent=1 // pred_fallthru
      _
    // Predicated region
    $region42: #{tpu_custom_call.1} parent=1 // pred_check
      _
    $region43: #{tpu_custom_call.1} parent=1 // pred_check_branch
      %101 = sbr.rel (0) target = $region45
    $region44: #{tpu_custom_call.1} parent=1 // pred_region
      %103 = dma.done [#allocation10], 16384
    $region45: #{tpu_custom_call.1} parent=1 // pred_fallthru
      _
    // Predicated region
    $region46: #{tpu_custom_call.1} parent=1 // pred_check
      _
    $region47: #{tpu_custom_call.1} parent=1 // pred_check_branch
      %105 = sbr.rel (0) target = $region49
    $region48: #{tpu_custom_call.1} parent=1 // pred_region
      %107 = dma.done [#allocation13], 4096
    $region49: #{tpu_custom_call.1} parent=1 // pred_fallthru
      _
    %s108 = smul.u32 0, 128
    %v109 = vlaneseq
    %v110 = vshrl.u32 %v109, 7
    loop: start=0, step=1, limit=16
    $region50: #{tpu_custom_call.1} parent=1 // loop_pre_header
      _
    $region51: #{tpu_custom_call.1} parent=1 // loop_header
      %s112 = sphi 0, %s116
      %p113 = scmp.ge.s32.totalorder %s112, 16
    $region52: #{tpu_custom_call.1} parent=1 // loop_header_branch
      %115 = sbr.rel (%p113) target = $region56
    $region53: #{tpu_custom_call.1} parent=1 // loop_body
      %s117 = smul.u32 %s112, 8
      %s118 = sadd.s32 %s108, %s117
      %s119 = sld [smem:[#allocation4 + %s118]]
      %s120 = sadd.s32 %s118, 1
      %s121 = sld [smem:[#allocation4 + %s120]]
      // While loop
      $region57: #{tpu_custom_call.1} parent=53 // loop_pre_header
        _
      $region58: #{tpu_custom_call.1} parent=53 // loop_header
        %s123 = sphi %s119, %s125
        %p124 = scmp.ge.s32.totalorder %s123, %s121
        %v128 = vphi 0.0, %v139
      $region59: #{tpu_custom_call.1} parent=53 // loop_header_branch
        %127 = sbr.rel (%p124) target = $region63
      $region60: #{tpu_custom_call.1} parent=53 // loop_body
        %s129 = sld [smem:[#allocation5 + %s123]]
        %s130 = sshra.s32 %s129, 3
        %s131 = sand.u32 %s129, 7
        %s132 = sshra.s32 %s129, 3
        %s133 = sand.u32 %s129, 7
        %s134 = smul.u32 %s130, 2
        %s135 = smul.u32 %s134, 8
        %s136 = sadd.s32 %s135, %s133
        %s137 = scalar_lea.vmem [#allocation6], %s136
        %v138 = vld [vmem:[%s137] ss:$8 sm:$0x3]
        %v139 = vadd.f32 %v128, %v138
      $region61: #{tpu_custom_call.1} parent=53 // loop_footer
        %s125 = sadd.s32 %s123, 1
      $region62: #{tpu_custom_call.1} parent=53 // loop_footer_branch
        %122 = sbr.rel target = $region58
      $region63: #{tpu_custom_call.1} parent=53 // loop_exit
        _
      %vm140 = vcmp.eq.s32.totalorder %v110, 0
      %v141 = vsel %vm140, 1, 0
      %vm142 = vcmp.eq.s32.totalorder %v141, 1
      %v144 = vperm.slane %v128, 0
      %v145 = vperm.slane %v128, 1
      %v148 = vsel %vm142, %v144, 0.0
      %v149 = vsel %vm142, %v145, 0.0
      %s150 = sadd.s32 %s118, 2
      %s151 = sld [smem:[#allocation4 + %s150]]
      // While loop
      $region64: #{tpu_custom_call.1} parent=53 // loop_pre_header
        _
      $region65: #{tpu_custom_call.1} parent=53 // loop_header
        %s153 = sphi %s121, %s155
        %p154 = scmp.ge.s32.totalorder %s153, %s151
        %v158 = vphi 0.0, %v169
      $region66: #{tpu_custom_call.1} parent=53 // loop_header_branch
        %157 = sbr.rel (%p154) target = $region70
      $region67: #{tpu_custom_call.1} parent=53 // loop_body
        %s159 = sld [smem:[#allocation5 + %s153]]
        %s160 = sshra.s32 %s159, 3
        %s161 = sand.u32 %s159, 7
        %s162 = sshra.s32 %s159, 3
        %s163 = sand.u32 %s159, 7
        %s164 = smul.u32 %s160, 2
        %s165 = smul.u32 %s164, 8
        %s166 = sadd.s32 %s165, %s163
        %s167 = scalar_lea.vmem [#allocation6], %s166
        %v168 = vld [vmem:[%s167] ss:$8 sm:$0x3]
        %v169 = vadd.f32 %v158, %v168
      $region68: #{tpu_custom_call.1} parent=53 // loop_footer
        %s155 = sadd.s32 %s153, 1
      $region69: #{tpu_custom_call.1} parent=53 // loop_footer_branch
        %152 = sbr.rel target = $region65
      $region70: #{tpu_custom_call.1} parent=53 // loop_exit
        _
      %vm170 = vcmp.eq.s32.totalorder %v110, 1
      %v171 = vsel %vm170, 1, 0
      %vm172 = vcmp.eq.s32.totalorder %v171, 1
      %v174 = vperm.slane %v158, 0
      %v175 = vperm.slane %v158, 1
      %v178 = vsel %vm172, %v174, %v148
      %v179 = vsel %vm172, %v175, %v149
      %s180 = sadd.s32 %s118, 3
      %s181 = sld [smem:[#allocation4 + %s180]]
      // While loop
      $region71: #{tpu_custom_call.1} parent=53 // loop_pre_header
        _
      $region72: #{tpu_custom_call.1} parent=53 // loop_header
        %s183 = sphi %s151, %s185
        %p184 = scmp.ge.s32.totalorder %s183, %s181
        %v188 = vphi 0.0, %v199
      $region73: #{tpu_custom_call.1} parent=53 // loop_header_branch
        %187 = sbr.rel (%p184) target = $region77
      $region74: #{tpu_custom_call.1} parent=53 // loop_body
        %s189 = sld [smem:[#allocation5 + %s183]]
        %s190 = sshra.s32 %s189, 3
        %s191 = sand.u32 %s189, 7
        %s192 = sshra.s32 %s189, 3
        %s193 = sand.u32 %s189, 7
        %s194 = smul.u32 %s190, 2
        %s195 = smul.u32 %s194, 8
        %s196 = sadd.s32 %s195, %s193
        %s197 = scalar_lea.vmem [#allocation6], %s196
        %v198 = vld [vmem:[%s197] ss:$8 sm:$0x3]
        %v199 = vadd.f32 %v188, %v198
      $region75: #{tpu_custom_call.1} parent=53 // loop_footer
        %s185 = sadd.s32 %s183, 1
      $region76: #{tpu_custom_call.1} parent=53 // loop_footer_branch
        %182 = sbr.rel target = $region72
      $region77: #{tpu_custom_call.1} parent=53 // loop_exit
        _
      %vm200 = vcmp.eq.s32.totalorder %v110, 2
      %v201 = vsel %vm200, 1, 0
      %vm202 = vcmp.eq.s32.totalorder %v201, 1
      %v204 = vperm.slane %v188, 0
      %v205 = vperm.slane %v188, 1
      %v208 = vsel %vm202, %v204, %v178
      %v209 = vsel %vm202, %v205, %v179
      %s210 = sadd.s32 %s118, 4
      %s211 = sld [smem:[#allocation4 + %s210]]
      // While loop
      $region78: #{tpu_custom_call.1} parent=53 // loop_pre_header
        _
      $region79: #{tpu_custom_call.1} parent=53 // loop_header
        %s213 = sphi %s181, %s215
        %p214 = scmp.ge.s32.totalorder %s213, %s211
        %v218 = vphi 0.0, %v229
      $region80: #{tpu_custom_call.1} parent=53 // loop_header_branch
        %217 = sbr.rel (%p214) target = $region84
      $region81: #{tpu_custom_call.1} parent=53 // loop_body
        %s219 = sld [smem:[#allocation5 + %s213]]
        %s220 = sshra.s32 %s219, 3
        %s221 = sand.u32 %s219, 7
        %s222 = sshra.s32 %s219, 3
        %s223 = sand.u32 %s219, 7
        %s224 = smul.u32 %s220, 2
        %s225 = smul.u32 %s224, 8
        %s226 = sadd.s32 %s225, %s223
        %s227 = scalar_lea.vmem [#allocation6], %s226
        %v228 = vld [vmem:[%s227] ss:$8 sm:$0x3]
        %v229 = vadd.f32 %v218, %v228
      $region82: #{tpu_custom_call.1} parent=53 // loop_footer
        %s215 = sadd.s32 %s213, 1
      $region83: #{tpu_custom_call.1} parent=53 // loop_footer_branch
        %212 = sbr.rel target = $region79
      $region84: #{tpu_custom_call.1} parent=53 // loop_exit
        _
      %vm230 = vcmp.eq.s32.totalorder %v110, 3
      %v231 = vsel %vm230, 1, 0
      %vm232 = vcmp.eq.s32.totalorder %v231, 1
      %v234 = vperm.slane %v218, 0
      %v235 = vperm.slane %v218, 1
      %v238 = vsel %vm232, %v234, %v208
      %v239 = vsel %vm232, %v235, %v209
      %s240 = sadd.s32 %s118, 5
      %s241 = sld [smem:[#allocation4 + %s240]]
      // While loop
      $region85: #{tpu_custom_call.1} parent=53 // loop_pre_header
        _
      $region86: #{tpu_custom_call.1} parent=53 // loop_header
        %s243 = sphi %s211, %s245
        %p244 = scmp.ge.s32.totalorder %s243, %s241
        %v248 = vphi 0.0, %v259
      $region87: #{tpu_custom_call.1} parent=53 // loop_header_branch
        %247 = sbr.rel (%p244) target = $region91
      $region88: #{tpu_custom_call.1} parent=53 // loop_body
        %s249 = sld [smem:[#allocation5 + %s243]]
        %s250 = sshra.s32 %s249, 3
        %s251 = sand.u32 %s249, 7
        %s252 = sshra.s32 %s249, 3
        %s253 = sand.u32 %s249, 7
        %s254 = smul.u32 %s250, 2
        %s255 = smul.u32 %s254, 8
        %s256 = sadd.s32 %s255, %s253
        %s257 = scalar_lea.vmem [#allocation6], %s256
        %v258 = vld [vmem:[%s257] ss:$8 sm:$0x3]
        %v259 = vadd.f32 %v248, %v258
      $region89: #{tpu_custom_call.1} parent=53 // loop_footer
        %s245 = sadd.s32 %s243, 1
      $region90: #{tpu_custom_call.1} parent=53 // loop_footer_branch
        %242 = sbr.rel target = $region86
      $region91: #{tpu_custom_call.1} parent=53 // loop_exit
        _
      %vm260 = vcmp.eq.s32.totalorder %v110, 4
      %v261 = vsel %vm260, 1, 0
      %vm262 = vcmp.eq.s32.totalorder %v261, 1
      %v264 = vperm.slane %v248, 0
      %v265 = vperm.slane %v248, 1
      %v268 = vsel %vm262, %v264, %v238
      %v269 = vsel %vm262, %v265, %v239
      %s270 = sadd.s32 %s118, 6
      %s271 = sld [smem:[#allocation4 + %s270]]
      // While loop
      $region92: #{tpu_custom_call.1} parent=53 // loop_pre_header
        _
      $region93: #{tpu_custom_call.1} parent=53 // loop_header
        %s273 = sphi %s241, %s275
        %p274 = scmp.ge.s32.totalorder %s273, %s271
        %v278 = vphi 0.0, %v289
      $region94: #{tpu_custom_call.1} parent=53 // loop_header_branch
        %277 = sbr.rel (%p274) target = $region98
      $region95: #{tpu_custom_call.1} parent=53 // loop_body
        %s279 = sld [smem:[#allocation5 + %s273]]
        %s280 = sshra.s32 %s279, 3
        %s281 = sand.u32 %s279, 7
        %s282 = sshra.s32 %s279, 3
        %s283 = sand.u32 %s279, 7
        %s284 = smul.u32 %s280, 2
        %s285 = smul.u32 %s284, 8
        %s286 = sadd.s32 %s285, %s283
        %s287 = scalar_lea.vmem [#allocation6], %s286
        %v288 = vld [vmem:[%s287] ss:$8 sm:$0x3]
        %v289 = vadd.f32 %v278, %v288
      $region96: #{tpu_custom_call.1} parent=53 // loop_footer
        %s275 = sadd.s32 %s273, 1
      $region97: #{tpu_custom_call.1} parent=53 // loop_footer_branch
        %272 = sbr.rel target = $region93
      $region98: #{tpu_custom_call.1} parent=53 // loop_exit
        _
      %vm290 = vcmp.eq.s32.totalorder %v110, 5
      %v291 = vsel %vm290, 1, 0
      %vm292 = vcmp.eq.s32.totalorder %v291, 1
      %v294 = vperm.slane %v278, 0
      %v295 = vperm.slane %v278, 1
      %v298 = vsel %vm292, %v294, %v268
      %v299 = vsel %vm292, %v295, %v269
      %s300 = sadd.s32 %s118, 7
      %s301 = sld [smem:[#allocation4 + %s300]]
      // While loop
      $region99: #{tpu_custom_call.1} parent=53 // loop_pre_header
        _
      $region100: #{tpu_custom_call.1} parent=53 // loop_header
        %s303 = sphi %s271, %s305
        %p304 = scmp.ge.s32.totalorder %s303, %s301
        %v308 = vphi 0.0, %v319
      $region101: #{tpu_custom_call.1} parent=53 // loop_header_branch
        %307 = sbr.rel (%p304) target = $region105
      $region102: #{tpu_custom_call.1} parent=53 // loop_body
        %s309 = sld [smem:[#allocation5 + %s303]]
        %s310 = sshra.s32 %s309, 3
        %s311 = sand.u32 %s309, 7
        %s312 = sshra.s32 %s309, 3
        %s313 = sand.u32 %s309, 7
        %s314 = smul.u32 %s310, 2
        %s315 = smul.u32 %s314, 8
        %s316 = sadd.s32 %s315, %s313
        %s317 = scalar_lea.vmem [#allocation6], %s316
        %v318 = vld [vmem:[%s317] ss:$8 sm:$0x3]
        %v319 = vadd.f32 %v308, %v318
      $region103: #{tpu_custom_call.1} parent=53 // loop_footer
        %s305 = sadd.s32 %s303, 1
      $region104: #{tpu_custom_call.1} parent=53 // loop_footer_branch
        %302 = sbr.rel target = $region100
      $region105: #{tpu_custom_call.1} parent=53 // loop_exit
        _
      %vm320 = vcmp.eq.s32.totalorder %v110, 6
      %v321 = vsel %vm320, 1, 0
      %vm322 = vcmp.eq.s32.totalorder %v321, 1
      %v324 = vperm.slane %v308, 0
      %v325 = vperm.slane %v308, 1
      %v328 = vsel %vm322, %v324, %v298
      %v329 = vsel %vm322, %v325, %v299
      %s330 = sadd.s32 %s118, 8
      %s331 = sld [smem:[#allocation4 + %s330]]
      // While loop
      $region106: #{tpu_custom_call.1} parent=53 // loop_pre_header
        _
      $region107: #{tpu_custom_call.1} parent=53 // loop_header
        %s333 = sphi %s301, %s335
        %p334 = scmp.ge.s32.totalorder %s333, %s331
        %v338 = vphi 0.0, %v349
      $region108: #{tpu_custom_call.1} parent=53 // loop_header_branch
        %337 = sbr.rel (%p334) target = $region112
      $region109: #{tpu_custom_call.1} parent=53 // loop_body
        %s339 = sld [smem:[#allocation5 + %s333]]
        %s340 = sshra.s32 %s339, 3
        %s341 = sand.u32 %s339, 7
        %s342 = sshra.s32 %s339, 3
        %s343 = sand.u32 %s339, 7
        %s344 = smul.u32 %s340, 2
        %s345 = smul.u32 %s344, 8
        %s346 = sadd.s32 %s345, %s343
        %s347 = scalar_lea.vmem [#allocation6], %s346
        %v348 = vld [vmem:[%s347] ss:$8 sm:$0x3]
        %v349 = vadd.f32 %v338, %v348
      $region110: #{tpu_custom_call.1} parent=53 // loop_footer
        %s335 = sadd.s32 %s333, 1
      $region111: #{tpu_custom_call.1} parent=53 // loop_footer_branch
        %332 = sbr.rel target = $region107
      $region112: #{tpu_custom_call.1} parent=53 // loop_exit
        _
      %vm350 = vcmp.eq.s32.totalorder %v110, 7
      %v351 = vsel %vm350, 1, 0
      %vm352 = vcmp.eq.s32.totalorder %v351, 1
      %v354 = vperm.slane %v338, 0
      %v355 = vperm.slane %v338, 1
      %v358 = vsel %vm352, %v354, %v328
      %v359 = vsel %vm352, %v355, %v329
      %s360 = sshra.s32 %s117, 3
      %s361 = sand.u32 %s117, 7
      %s362 = smul.u32 %s360, 2
      %s363 = smul.addr %s362, 8
      %s364 = scalar_lea.vmem [#allocation2], %s363
      %365 = vst [vmem:[%s364] sm:$0xff] %v358
      %366 = vst [vmem:[%s364 + $0x8] sm:$0xff] %v359
    $region54: #{tpu_custom_call.1} parent=1 // loop_footer
      %s116 = sadd.s32 1, %s112
    $region55: #{tpu_custom_call.1} parent=1 // loop_footer_branch
      %111 = sbr.rel target = $region51
    $region56: #{tpu_custom_call.1} parent=1 // loop_exit
      _
    %v367 = vld [vmem:[#allocation2] sm:$0xff]
    %v368 = vld [vmem:[#allocation2 + $0x8] sm:$0xff]
    %v369 = vld [vmem:[#allocation2 + $0x10] sm:$0xff]
    %v370 = vld [vmem:[#allocation2 + $0x18] sm:$0xff]
    %v371 = vld [vmem:[#allocation2 + $0x20] sm:$0xff]
    %v372 = vld [vmem:[#allocation2 + $0x28] sm:$0xff]
    %v373 = vld [vmem:[#allocation2 + $0x30] sm:$0xff]
    %v374 = vld [vmem:[#allocation2 + $0x38] sm:$0xff]
    %v375 = vld [vmem:[#allocation2 + $0x40] sm:$0xff]
    %v376 = vld [vmem:[#allocation2 + $0x48] sm:$0xff]
    %v377 = vld [vmem:[#allocation2 + $0x50] sm:$0xff]
    %v378 = vld [vmem:[#allocation2 + $0x58] sm:$0xff]
    %v379 = vld [vmem:[#allocation2 + $0x60] sm:$0xff]
    %v380 = vld [vmem:[#allocation2 + $0x68] sm:$0xff]
    %v381 = vld [vmem:[#allocation2 + $0x70] sm:$0xff]
    %v382 = vld [vmem:[#allocation2 + $0x78] sm:$0xff]
    %v383 = vld [vmem:[#allocation2 + $0x80] sm:$0xff]
    %v384 = vld [vmem:[#allocation2 + $0x88] sm:$0xff]
    %v385 = vld [vmem:[#allocation2 + $0x90] sm:$0xff]
    %v386 = vld [vmem:[#allocation2 + $0x98] sm:$0xff]
    %v387 = vld [vmem:[#allocation2 + $0xa0] sm:$0xff]
    %v388 = vld [vmem:[#allocation2 + $0xa8] sm:$0xff]
    %v389 = vld [vmem:[#allocation2 + $0xb0] sm:$0xff]
    %v390 = vld [vmem:[#allocation2 + $0xb8] sm:$0xff]
    %v391 = vld [vmem:[#allocation2 + $0xc0] sm:$0xff]
    %v392 = vld [vmem:[#allocation2 + $0xc8] sm:$0xff]
    %v393 = vld [vmem:[#allocation2 + $0xd0] sm:$0xff]
    %v394 = vld [vmem:[#allocation2 + $0xd8] sm:$0xff]
    %v395 = vld [vmem:[#allocation2 + $0xe0] sm:$0xff]
    %v396 = vld [vmem:[#allocation2 + $0xe8] sm:$0xff]
    %v397 = vld [vmem:[#allocation2 + $0xf0] sm:$0xff]
    %v398 = vld [vmem:[#allocation2 + $0xf8] sm:$0xff]
    %v399 = vld [vmem:[%s3] sm:$0xff]
    %v400 = vld [vmem:[%s3 + $0x8] sm:$0xff]
    %v401 = vld [vmem:[%s3 + $0x10] sm:$0xff]
    %v402 = vld [vmem:[%s3 + $0x18] sm:$0xff]
    %v403 = vld [vmem:[%s3 + $0x20] sm:$0xff]
    %v404 = vld [vmem:[%s3 + $0x28] sm:$0xff]
    %v405 = vld [vmem:[%s3 + $0x30] sm:$0xff]
    %v406 = vld [vmem:[%s3 + $0x38] sm:$0xff]
    %v407 = vld [vmem:[%s3 + $0x40] sm:$0xff]
    %v408 = vld [vmem:[%s3 + $0x48] sm:$0xff]
    %v409 = vld [vmem:[%s3 + $0x50] sm:$0xff]
    %v410 = vld [vmem:[%s3 + $0x58] sm:$0xff]
    %v411 = vld [vmem:[%s3 + $0x60] sm:$0xff]
    %v412 = vld [vmem:[%s3 + $0x68] sm:$0xff]
    %v413 = vld [vmem:[%s3 + $0x70] sm:$0xff]
    %v414 = vld [vmem:[%s3 + $0x78] sm:$0xff]
    %416 = vset.pattern.permute.xlu0 0
    %417 = vperm.xlu0 %416, %v399
    %v418 = vpop.permute.xlu0 %417
    %421 = vset.pattern.permute.xlu0 0
    %422 = vperm.xlu0 %421, %v400
    %v423 = vpop.permute.xlu0 %422
    %426 = vset.pattern.permute.xlu0 0
    %427 = vperm.xlu0 %426, %v401
    %v428 = vpop.permute.xlu0 %427
    %431 = vset.pattern.permute.xlu0 0
    %432 = vperm.xlu0 %431, %v402
    %v433 = vpop.permute.xlu0 %432
    %436 = vset.pattern.permute.xlu0 0
    %437 = vperm.xlu0 %436, %v403
    %v438 = vpop.permute.xlu0 %437
    %441 = vset.pattern.permute.xlu0 0
    %442 = vperm.xlu0 %441, %v404
    %v443 = vpop.permute.xlu0 %442
    %446 = vset.pattern.permute.xlu0 0
    %447 = vperm.xlu0 %446, %v405
    %v448 = vpop.permute.xlu0 %447
    %451 = vset.pattern.permute.xlu0 0
    %452 = vperm.xlu0 %451, %v406
    %v453 = vpop.permute.xlu0 %452
    %456 = vset.pattern.permute.xlu0 0
    %457 = vperm.xlu0 %456, %v407
    %v458 = vpop.permute.xlu0 %457
    %461 = vset.pattern.permute.xlu0 0
    %462 = vperm.xlu0 %461, %v408
    %v463 = vpop.permute.xlu0 %462
    %466 = vset.pattern.permute.xlu0 0
    %467 = vperm.xlu0 %466, %v409
    %v468 = vpop.permute.xlu0 %467
    %471 = vset.pattern.permute.xlu0 0
    %472 = vperm.xlu0 %471, %v410
    %v473 = vpop.permute.xlu0 %472
    %476 = vset.pattern.permute.xlu0 0
    %477 = vperm.xlu0 %476, %v411
    %v478 = vpop.permute.xlu0 %477
    %481 = vset.pattern.permute.xlu0 0
    %482 = vperm.xlu0 %481, %v412
    %v483 = vpop.permute.xlu0 %482
    %486 = vset.pattern.permute.xlu0 0
    %487 = vperm.xlu0 %486, %v413
    %v488 = vpop.permute.xlu0 %487
    %491 = vset.pattern.permute.xlu0 0
    %492 = vperm.xlu0 %491, %v414
    %v493 = vpop.permute.xlu0 %492
    %v495 = vmul.f32 %v367, %v418
    %v496 = vmul.f32 %v368, %v418
    %v497 = vmul.f32 %v369, %v423
    %v498 = vmul.f32 %v370, %v423
    %v499 = vmul.f32 %v371, %v428
    %v500 = vmul.f32 %v372, %v428
    %v501 = vmul.f32 %v373, %v433
    %v502 = vmul.f32 %v374, %v433
    %v503 = vmul.f32 %v375, %v438
    %v504 = vmul.f32 %v376, %v438
    %v505 = vmul.f32 %v377, %v443
    %v506 = vmul.f32 %v378, %v443
    %v507 = vmul.f32 %v379, %v448
    %v508 = vmul.f32 %v380, %v448
    %v509 = vmul.f32 %v381, %v453
    %v510 = vmul.f32 %v382, %v453
    %v511 = vmul.f32 %v383, %v458
    %v512 = vmul.f32 %v384, %v458
    %v513 = vmul.f32 %v385, %v463
    %v514 = vmul.f32 %v386, %v463
    %v515 = vmul.f32 %v387, %v468
    %v516 = vmul.f32 %v388, %v468
    %v517 = vmul.f32 %v389, %v473
    %v518 = vmul.f32 %v390, %v473
    %v519 = vmul.f32 %v391, %v478
    %v520 = vmul.f32 %v392, %v478
    %v521 = vmul.f32 %v393, %v483
    %v522 = vmul.f32 %v394, %v483
    %v523 = vmul.f32 %v395, %v488
    %v524 = vmul.f32 %v396, %v488
    %v525 = vmul.f32 %v397, %v493
    %v526 = vmul.f32 %v398, %v493
    %v527 = vpack.c.bf16 %v497, %v495
    %v528 = vpack.c.bf16 %v498, %v496
    %v529 = vpack.c.bf16 %v501, %v499
    %v530 = vpack.c.bf16 %v502, %v500
    %v531 = vpack.c.bf16 %v505, %v503
    %v532 = vpack.c.bf16 %v506, %v504
    %v533 = vpack.c.bf16 %v509, %v507
    %v534 = vpack.c.bf16 %v510, %v508
    %v535 = vpack.c.bf16 %v513, %v511
    %v536 = vpack.c.bf16 %v514, %v512
    %v537 = vpack.c.bf16 %v517, %v515
    %v538 = vpack.c.bf16 %v518, %v516
    %v539 = vpack.c.bf16 %v521, %v519
    %v540 = vpack.c.bf16 %v522, %v520
    %v541 = vpack.c.bf16 %v525, %v523
    %v542 = vpack.c.bf16 %v526, %v524
    %v543 = vld [vmem:[#allocation9] sm:$0xff]
    %v544 = vld [vmem:[#allocation9 + $0x8] sm:$0xff]
    %v545 = vld [vmem:[#allocation9 + $0x10] sm:$0xff]
    %v546 = vld [vmem:[#allocation9 + $0x18] sm:$0xff]
    %v547 = vld [vmem:[#allocation9 + $0x20] sm:$0xff]
    %v548 = vld [vmem:[#allocation9 + $0x28] sm:$0xff]
    %v549 = vld [vmem:[#allocation9 + $0x30] sm:$0xff]
    %v550 = vld [vmem:[#allocation9 + $0x38] sm:$0xff]
    %v551 = vld [vmem:[#allocation9 + $0x40] sm:$0xff]
    %v552 = vld [vmem:[#allocation9 + $0x48] sm:$0xff]
    %v553 = vld [vmem:[#allocation9 + $0x50] sm:$0xff]
    %v554 = vld [vmem:[#allocation9 + $0x58] sm:$0xff]
    %v555 = vld [vmem:[#allocation9 + $0x60] sm:$0xff]
    %v556 = vld [vmem:[#allocation9 + $0x68] sm:$0xff]
    %v557 = vld [vmem:[#allocation9 + $0x70] sm:$0xff]
    %v558 = vld [vmem:[#allocation9 + $0x78] sm:$0xff]
    %v559 = vld [vmem:[#allocation9 + $0x80] sm:$0xff]
    %v560 = vld [vmem:[#allocation9 + $0x88] sm:$0xff]
    %v561 = vld [vmem:[#allocation9 + $0x90] sm:$0xff]
    %v562 = vld [vmem:[#allocation9 + $0x98] sm:$0xff]
    %v563 = vld [vmem:[#allocation9 + $0xa0] sm:$0xff]
    %v564 = vld [vmem:[#allocation9 + $0xa8] sm:$0xff]
    %v565 = vld [vmem:[#allocation9 + $0xb0] sm:$0xff]
    %v566 = vld [vmem:[#allocation9 + $0xb8] sm:$0xff]
    %v567 = vld [vmem:[#allocation9 + $0xc0] sm:$0xff]
    %v568 = vld [vmem:[#allocation9 + $0xc8] sm:$0xff]
    %v569 = vld [vmem:[#allocation9 + $0xd0] sm:$0xff]
    %v570 = vld [vmem:[#allocation9 + $0xd8] sm:$0xff]
    %v571 = vld [vmem:[#allocation9 + $0xe0] sm:$0xff]
    %v572 = vld [vmem:[#allocation9 + $0xe8] sm:$0xff]
    %v573 = vld [vmem:[#allocation9 + $0xf0] sm:$0xff]
    %v574 = vld [vmem:[#allocation9 + $0xf8] sm:$0xff]
    %v575 = vld [vmem:[#allocation9 + $0x100] sm:$0xff]
    %v576 = vld [vmem:[#allocation9 + $0x108] sm:$0xff]
    %v577 = vld [vmem:[#allocation9 + $0x110] sm:$0xff]
    %v578 = vld [vmem:[#allocation9 + $0x118] sm:$0xff]
    %v579 = vld [vmem:[#allocation9 + $0x120] sm:$0xff]
    %v580 = vld [vmem:[#allocation9 + $0x128] sm:$0xff]
    %v581 = vld [vmem:[#allocation9 + $0x130] sm:$0xff]
    %v582 = vld [vmem:[#allocation9 + $0x138] sm:$0xff]
    %v583 = vld [vmem:[#allocation9 + $0x140] sm:$0xff]
    %v584 = vld [vmem:[#allocation9 + $0x148] sm:$0xff]
    %v585 = vld [vmem:[#allocation9 + $0x150] sm:$0xff]
    %v586 = vld [vmem:[#allocation9 + $0x158] sm:$0xff]
    %v587 = vld [vmem:[#allocation9 + $0x160] sm:$0xff]
    %v588 = vld [vmem:[#allocation9 + $0x168] sm:$0xff]
    %v589 = vld [vmem:[#allocation9 + $0x170] sm:$0xff]
    %v590 = vld [vmem:[#allocation9 + $0x178] sm:$0xff]
    %v591 = vld [vmem:[#allocation9 + $0x180] sm:$0xff]
    %v592 = vld [vmem:[#allocation9 + $0x188] sm:$0xff]
    %v593 = vld [vmem:[#allocation9 + $0x190] sm:$0xff]
    %v594 = vld [vmem:[#allocation9 + $0x198] sm:$0xff]
    %v595 = vld [vmem:[#allocation9 + $0x1a0] sm:$0xff]
    %v596 = vld [vmem:[#allocation9 + $0x1a8] sm:$0xff]
    %v597 = vld [vmem:[#allocation9 + $0x1b0] sm:$0xff]
    %v598 = vld [vmem:[#allocation9 + $0x1b8] sm:$0xff]
    %v599 = vld [vmem:[#allocation9 + $0x1c0] sm:$0xff]
    %v600 = vld [vmem:[#allocation9 + $0x1c8] sm:$0xff]
    %v601 = vld [vmem:[#allocation9 + $0x1d0] sm:$0xff]
    %v602 = vld [vmem:[#allocation9 + $0x1d8] sm:$0xff]
    %v603 = vld [vmem:[#allocation9 + $0x1e0] sm:$0xff]
    %v604 = vld [vmem:[#allocation9 + $0x1e8] sm:$0xff]
    %v605 = vld [vmem:[#allocation9 + $0x1f0] sm:$0xff]
    %v606 = vld [vmem:[#allocation9 + $0x1f8] sm:$0xff]
    %v607 = vld [vmem:[%s5] sm:$0xf]
    %v609 = vperm.slane %v607, 0
    %v610 = vperm.slane %v607, 1
    %v611 = vperm.slane %v607, 2
    %v612 = vperm.slane %v607, 3
    %v681 = vunpack.c.l.b16 %v543
    %v682 = vunpack.c.h.b16 %v543
    %v683 = vunpack.c.l.b16 %v544
    %v684 = vunpack.c.h.b16 %v544
    %v685 = vunpack.c.l.b16 %v545
    %v686 = vunpack.c.h.b16 %v545
    %v687 = vunpack.c.l.b16 %v546
    %v688 = vunpack.c.h.b16 %v546
    %v689 = vunpack.c.l.b16 %v547
    %v690 = vunpack.c.h.b16 %v547
    %v691 = vunpack.c.l.b16 %v548
    %v692 = vunpack.c.h.b16 %v548
    %v693 = vunpack.c.l.b16 %v549
    %v694 = vunpack.c.h.b16 %v549
    %v695 = vunpack.c.l.b16 %v550
    %v696 = vunpack.c.h.b16 %v550
    %v697 = vunpack.c.l.b16 %v551
    %v698 = vunpack.c.h.b16 %v551
    %v699 = vunpack.c.l.b16 %v552
    %v700 = vunpack.c.h.b16 %v552
    %v701 = vunpack.c.l.b16 %v553
    %v702 = vunpack.c.h.b16 %v553
    %v703 = vunpack.c.l.b16 %v554
    %v704 = vunpack.c.h.b16 %v554
    %v705 = vunpack.c.l.b16 %v555
    %v706 = vunpack.c.h.b16 %v555
    %v707 = vunpack.c.l.b16 %v556
    %v708 = vunpack.c.h.b16 %v556
    %v709 = vunpack.c.l.b16 %v557
    %v710 = vunpack.c.h.b16 %v557
    %v711 = vunpack.c.l.b16 %v558
    %v712 = vunpack.c.h.b16 %v558
    %v713 = vunpack.c.l.b16 %v559
    %v714 = vunpack.c.h.b16 %v559
    %v715 = vunpack.c.l.b16 %v560
    %v716 = vunpack.c.h.b16 %v560
    %v717 = vunpack.c.l.b16 %v561
    %v718 = vunpack.c.h.b16 %v561
    %v719 = vunpack.c.l.b16 %v562
    %v720 = vunpack.c.h.b16 %v562
    %v721 = vunpack.c.l.b16 %v563
    %v722 = vunpack.c.h.b16 %v563
    %v723 = vunpack.c.l.b16 %v564
    %v724 = vunpack.c.h.b16 %v564
    %v725 = vunpack.c.l.b16 %v565
    %v726 = vunpack.c.h.b16 %v565
    %v727 = vunpack.c.l.b16 %v566
    %v728 = vunpack.c.h.b16 %v566
    %v729 = vunpack.c.l.b16 %v567
    %v730 = vunpack.c.h.b16 %v567
    %v731 = vunpack.c.l.b16 %v568
    %v732 = vunpack.c.h.b16 %v568
    %v733 = vunpack.c.l.b16 %v569
    %v734 = vunpack.c.h.b16 %v569
    %v735 = vunpack.c.l.b16 %v570
    %v736 = vunpack.c.h.b16 %v570
    %v737 = vunpack.c.l.b16 %v571
    %v738 = vunpack.c.h.b16 %v571
    %v739 = vunpack.c.l.b16 %v572
    %v740 = vunpack.c.h.b16 %v572
    %v741 = vunpack.c.l.b16 %v573
    %v742 = vunpack.c.h.b16 %v573
    %v743 = vunpack.c.l.b16 %v574
    %v744 = vunpack.c.h.b16 %v574
    %v745 = vunpack.c.l.b16 %v575
    %v746 = vunpack.c.h.b16 %v575
    %v747 = vunpack.c.l.b16 %v576
    %v748 = vunpack.c.h.b16 %v576
    %v749 = vunpack.c.l.b16 %v577
    %v750 = vunpack.c.h.b16 %v577
    %v751 = vunpack.c.l.b16 %v578
    %v752 = vunpack.c.h.b16 %v578
    %v753 = vunpack.c.l.b16 %v579
    %v754 = vunpack.c.h.b16 %v579
    %v755 = vunpack.c.l.b16 %v580
    %v756 = vunpack.c.h.b16 %v580
    %v757 = vunpack.c.l.b16 %v581
    %v758 = vunpack.c.h.b16 %v581
    %v759 = vunpack.c.l.b16 %v582
    %v760 = vunpack.c.h.b16 %v582
    %v761 = vunpack.c.l.b16 %v583
    %v762 = vunpack.c.h.b16 %v583
    %v763 = vunpack.c.l.b16 %v584
    %v764 = vunpack.c.h.b16 %v584
    %v765 = vunpack.c.l.b16 %v585
    %v766 = vunpack.c.h.b16 %v585
    %v767 = vunpack.c.l.b16 %v586
    %v768 = vunpack.c.h.b16 %v586
    %v769 = vunpack.c.l.b16 %v587
    %v770 = vunpack.c.h.b16 %v587
    %v771 = vunpack.c.l.b16 %v588
    %v772 = vunpack.c.h.b16 %v588
    %v773 = vunpack.c.l.b16 %v589
    %v774 = vunpack.c.h.b16 %v589
    %v775 = vunpack.c.l.b16 %v590
    %v776 = vunpack.c.h.b16 %v590
    %v777 = vunpack.c.l.b16 %v591
    %v778 = vunpack.c.h.b16 %v591
    %v779 = vunpack.c.l.b16 %v592
    %v780 = vunpack.c.h.b16 %v592
    %v781 = vunpack.c.l.b16 %v593
    %v782 = vunpack.c.h.b16 %v593
    %v783 = vunpack.c.l.b16 %v594
    %v784 = vunpack.c.h.b16 %v594
    %v785 = vunpack.c.l.b16 %v595
    %v786 = vunpack.c.h.b16 %v595
    %v787 = vunpack.c.l.b16 %v596
    %v788 = vunpack.c.h.b16 %v596
    %v789 = vunpack.c.l.b16 %v597
    %v790 = vunpack.c.h.b16 %v597
    %v791 = vunpack.c.l.b16 %v598
    %v792 = vunpack.c.h.b16 %v598
    %v793 = vunpack.c.l.b16 %v599
    %v794 = vunpack.c.h.b16 %v599
    %v795 = vunpack.c.l.b16 %v600
    %v796 = vunpack.c.h.b16 %v600
    %v797 = vunpack.c.l.b16 %v601
    %v798 = vunpack.c.h.b16 %v601
    %v799 = vunpack.c.l.b16 %v602
    %v800 = vunpack.c.h.b16 %v602
    %v801 = vunpack.c.l.b16 %v603
    %v802 = vunpack.c.h.b16 %v603
    %v803 = vunpack.c.l.b16 %v604
    %v804 = vunpack.c.h.b16 %v604
    %v805 = vunpack.c.l.b16 %v605
    %v806 = vunpack.c.h.b16 %v605
    %v807 = vunpack.c.l.b16 %v606
    %v808 = vunpack.c.h.b16 %v606
    %v809 = vpack.c.b16 %v685, %v681
    %v810 = vpack.c.b16 %v686, %v682
    %v811 = vpack.c.b16 %v687, %v683
    %v812 = vpack.c.b16 %v688, %v684
    %v813 = vpack.c.b16 %v693, %v689
    %v814 = vpack.c.b16 %v694, %v690
    %v815 = vpack.c.b16 %v695, %v691
    %v816 = vpack.c.b16 %v696, %v692
    %v817 = vpack.c.b16 %v701, %v697
    %v818 = vpack.c.b16 %v702, %v698
    %v819 = vpack.c.b16 %v703, %v699
    %v820 = vpack.c.b16 %v704, %v700
    %v821 = vpack.c.b16 %v709, %v705
    %v822 = vpack.c.b16 %v710, %v706
    %v823 = vpack.c.b16 %v711, %v707
    %v824 = vpack.c.b16 %v712, %v708
    %v825 = vpack.c.b16 %v717, %v713
    %v826 = vpack.c.b16 %v718, %v714
    %v827 = vpack.c.b16 %v719, %v715
    %v828 = vpack.c.b16 %v720, %v716
    %v829 = vpack.c.b16 %v725, %v721
    %v830 = vpack.c.b16 %v726, %v722
    %v831 = vpack.c.b16 %v727, %v723
    %v832 = vpack.c.b16 %v728, %v724
    %v833 = vpack.c.b16 %v733, %v729
    %v834 = vpack.c.b16 %v734, %v730
    %v835 = vpack.c.b16 %v735, %v731
    %v836 = vpack.c.b16 %v736, %v732
    %v837 = vpack.c.b16 %v741, %v737
    %v838 = vpack.c.b16 %v742, %v738
    %v839 = vpack.c.b16 %v743, %v739
    %v840 = vpack.c.b16 %v744, %v740
    %v841 = vpack.c.b16 %v749, %v745
    %v842 = vpack.c.b16 %v750, %v746
    %v843 = vpack.c.b16 %v751, %v747
    %v844 = vpack.c.b16 %v752, %v748
    %v845 = vpack.c.b16 %v757, %v753
    %v846 = vpack.c.b16 %v758, %v754
    %v847 = vpack.c.b16 %v759, %v755
    %v848 = vpack.c.b16 %v760, %v756
    %v849 = vpack.c.b16 %v765, %v761
    %v850 = vpack.c.b16 %v766, %v762
    %v851 = vpack.c.b16 %v767, %v763
    %v852 = vpack.c.b16 %v768, %v764
    %v853 = vpack.c.b16 %v773, %v769
    %v854 = vpack.c.b16 %v774, %v770
    %v855 = vpack.c.b16 %v775, %v771
    %v856 = vpack.c.b16 %v776, %v772
    %v857 = vpack.c.b16 %v781, %v777
    %v858 = vpack.c.b16 %v782, %v778
    %v859 = vpack.c.b16 %v783, %v779
    %v860 = vpack.c.b16 %v784, %v780
    %v861 = vpack.c.b16 %v789, %v785
    %v862 = vpack.c.b16 %v790, %v786
    %v863 = vpack.c.b16 %v791, %v787
    %v864 = vpack.c.b16 %v792, %v788
    %v865 = vpack.c.b16 %v797, %v793
    %v866 = vpack.c.b16 %v798, %v794
    %v867 = vpack.c.b16 %v799, %v795
    %v868 = vpack.c.b16 %v800, %v796
    %v869 = vpack.c.b16 %v805, %v801
    %v870 = vpack.c.b16 %v806, %v802
    %v871 = vpack.c.b16 %v807, %v803
    %v872 = vpack.c.b16 %v808, %v804
    %937 = vmatpush.bf16.msra.mxu0 %v837
    %938 = vmatpush.bf16.msra.mxu0 %v833
    %939 = vmatpush.bf16.msra.mxu0 %v829
    %940 = vmatpush.bf16.msra.mxu0 %v825
    %941 = vmatpush.bf16.msra.mxu0 %v821
    %942 = vmatpush.bf16.msra.mxu0 %v817
    %943 = vmatpush.bf16.msra.mxu0 %v813
    %944 = vmatpush.bf16.msra.mxu0 %v809
    %945 = vmatmul.bf16.gmra.mxu0 %v527
    %v946 = vpop.f32.mrf.mxu0
    %v947 = vadd.f32 %v609, %v946
    %v948 = vpop.f32.mrf.mxu0
    %v949 = vadd.f32 %v609, %v948
    %950 = vmatmul.bf16.gmra.mxu0 %v529
    %v951 = vpop.f32.mrf.mxu0
    %v952 = vadd.f32 %v609, %v951
    %v953 = vpop.f32.mrf.mxu0
    %v954 = vadd.f32 %v609, %v953
    %955 = vmatmul.bf16.gmra.mxu0 %v531
    %v956 = vpop.f32.mrf.mxu0
    %v957 = vadd.f32 %v609, %v956
    %v958 = vpop.f32.mrf.mxu0
    %v959 = vadd.f32 %v609, %v958
    %960 = vmatmul.bf16.gmra.mxu0 %v533
    %v961 = vpop.f32.mrf.mxu0
    %v962 = vadd.f32 %v609, %v961
    %v963 = vpop.f32.mrf.mxu0
    %v964 = vadd.f32 %v609, %v963
    %965 = vmatmul.bf16.gmra.mxu0 %v535
    %v966 = vpop.f32.mrf.mxu0
    %v967 = vadd.f32 %v609, %v966
    %v968 = vpop.f32.mrf.mxu0
    %v969 = vadd.f32 %v609, %v968
    %970 = vmatmul.bf16.gmra.mxu0 %v537
    %v971 = vpop.f32.mrf.mxu0
    %v972 = vadd.f32 %v609, %v971
    %v973 = vpop.f32.mrf.mxu0
    %v974 = vadd.f32 %v609, %v973
    %975 = vmatmul.bf16.gmra.mxu0 %v539
    %v976 = vpop.f32.mrf.mxu0
    %v977 = vadd.f32 %v609, %v976
    %v978 = vpop.f32.mrf.mxu0
    %v979 = vadd.f32 %v609, %v978
    %980 = vmatmul.bf16.gmra.mxu0 %v541
    %v981 = vpop.f32.mrf.mxu0
    %v982 = vadd.f32 %v609, %v981
    %v983 = vpop.f32.mrf.mxu0
    %v984 = vadd.f32 %v609, %v983
    %985 = vdwg.mxu0
    %986 = vmatpush.bf16.msra.mxu0 %v869
    %987 = vmatpush.bf16.msra.mxu0 %v865
    %988 = vmatpush.bf16.msra.mxu0 %v861
    %989 = vmatpush.bf16.msra.mxu0 %v857
    %990 = vmatpush.bf16.msra.mxu0 %v853
    %991 = vmatpush.bf16.msra.mxu0 %v849
    %992 = vmatpush.bf16.msra.mxu0 %v845
    %993 = vmatpush.bf16.msra.mxu0 %v841
    %994 = vmatmul.bf16.gmra.mxu0 %v528
    %v995 = vpop.f32.mrf.mxu0
    %v996 = vadd.f32 %v947, %v995
    %v997 = vpop.f32.mrf.mxu0
    %v998 = vadd.f32 %v949, %v997
    %999 = vmatmul.bf16.gmra.mxu0 %v530
    %v1000 = vpop.f32.mrf.mxu0
    %v1001 = vadd.f32 %v952, %v1000
    %v1002 = vpop.f32.mrf.mxu0
    %v1003 = vadd.f32 %v954, %v1002
    %1004 = vmatmul.bf16.gmra.mxu0 %v532
    %v1005 = vpop.f32.mrf.mxu0
    %v1006 = vadd.f32 %v957, %v1005
    %v1007 = vpop.f32.mrf.mxu0
    %v1008 = vadd.f32 %v959, %v1007
    %1009 = vmatmul.bf16.gmra.mxu0 %v534
    %v1010 = vpop.f32.mrf.mxu0
    %v1011 = vadd.f32 %v962, %v1010
    %v1012 = vpop.f32.mrf.mxu0
    %v1013 = vadd.f32 %v964, %v1012
    %1014 = vmatmul.bf16.gmra.mxu0 %v536
    %v1015 = vpop.f32.mrf.mxu0
    %v1016 = vadd.f32 %v967, %v1015
    %v1017 = vpop.f32.mrf.mxu0
    %v1018 = vadd.f32 %v969, %v1017
    %1019 = vmatmul.bf16.gmra.mxu0 %v538
    %v1020 = vpop.f32.mrf.mxu0
    %v1021 = vadd.f32 %v972, %v1020
    %v1022 = vpop.f32.mrf.mxu0
    %v1023 = vadd.f32 %v974, %v1022
    %1024 = vmatmul.bf16.gmra.mxu0 %v540
    %v1025 = vpop.f32.mrf.mxu0
    %v1026 = vadd.f32 %v977, %v1025
    %v1027 = vpop.f32.mrf.mxu0
    %v1028 = vadd.f32 %v979, %v1027
    %1029 = vmatmul.bf16.gmra.mxu0 %v542
    %v1030 = vpop.f32.mrf.mxu0
    %v1031 = vadd.f32 %v982, %v1030
    %v1032 = vpop.f32.mrf.mxu0
    %v1033 = vadd.f32 %v984, %v1032
    %1034 = vdwg.mxu0
    %1035 = vmatpush.bf16.msra.mxu0 %v838
    %1036 = vmatpush.bf16.msra.mxu0 %v834
    %1037 = vmatpush.bf16.msra.mxu0 %v830
    %1038 = vmatpush.bf16.msra.mxu0 %v826
    %1039 = vmatpush.bf16.msra.mxu0 %v822
    %1040 = vmatpush.bf16.msra.mxu0 %v818
    %1041 = vmatpush.bf16.msra.mxu0 %v814
    %1042 = vmatpush.bf16.msra.mxu0 %v810
    %1043 = vmatmul.bf16.gmra.mxu0 %v527
    %v1044 = vpop.f32.mrf.mxu0
    %v1045 = vadd.f32 %v610, %v1044
    %v1046 = vpop.f32.mrf.mxu0
    %v1047 = vadd.f32 %v610, %v1046
    %1048 = vmatmul.bf16.gmra.mxu0 %v529
    %v1049 = vpop.f32.mrf.mxu0
    %v1050 = vadd.f32 %v610, %v1049
    %v1051 = vpop.f32.mrf.mxu0
    %v1052 = vadd.f32 %v610, %v1051
    %1053 = vmatmul.bf16.gmra.mxu0 %v531
    %v1054 = vpop.f32.mrf.mxu0
    %v1055 = vadd.f32 %v610, %v1054
    %v1056 = vpop.f32.mrf.mxu0
    %v1057 = vadd.f32 %v610, %v1056
    %1058 = vmatmul.bf16.gmra.mxu0 %v533
    %v1059 = vpop.f32.mrf.mxu0
    %v1060 = vadd.f32 %v610, %v1059
    %v1061 = vpop.f32.mrf.mxu0
    %v1062 = vadd.f32 %v610, %v1061
    %1063 = vmatmul.bf16.gmra.mxu0 %v535
    %v1064 = vpop.f32.mrf.mxu0
    %v1065 = vadd.f32 %v610, %v1064
    %v1066 = vpop.f32.mrf.mxu0
    %v1067 = vadd.f32 %v610, %v1066
    %1068 = vmatmul.bf16.gmra.mxu0 %v537
    %v1069 = vpop.f32.mrf.mxu0
    %v1070 = vadd.f32 %v610, %v1069
    %v1071 = vpop.f32.mrf.mxu0
    %v1072 = vadd.f32 %v610, %v1071
    %1073 = vmatmul.bf16.gmra.mxu0 %v539
    %v1074 = vpop.f32.mrf.mxu0
    %v1075 = vadd.f32 %v610, %v1074
    %v1076 = vpop.f32.mrf.mxu0
    %v1077 = vadd.f32 %v610, %v1076
    %1078 = vmatmul.bf16.gmra.mxu0 %v541
    %v1079 = vpop.f32.mrf.mxu0
    %v1080 = vadd.f32 %v610, %v1079
    %v1081 = vpop.f32.mrf.mxu0
    %v1082 = vadd.f32 %v610, %v1081
    %1083 = vdwg.mxu0
    %1084 = vmatpush.bf16.msra.mxu0 %v870
    %1085 = vmatpush.bf16.msra.mxu0 %v866
    %1086 = vmatpush.bf16.msra.mxu0 %v862
    %1087 = vmatpush.bf16.msra.mxu0 %v858
    %1088 = vmatpush.bf16.msra.mxu0 %v854
    %1089 = vmatpush.bf16.msra.mxu0 %v850
    %1090 = vmatpush.bf16.msra.mxu0 %v846
    %1091 = vmatpush.bf16.msra.mxu0 %v842
    %1092 = vmatmul.bf16.gmra.mxu0 %v528
    %v1093 = vpop.f32.mrf.mxu0
    %v1094 = vadd.f32 %v1045, %v1093
    %v1095 = vpop.f32.mrf.mxu0
    %v1096 = vadd.f32 %v1047, %v1095
    %1097 = vmatmul.bf16.gmra.mxu0 %v530
    %v1098 = vpop.f32.mrf.mxu0
    %v1099 = vadd.f32 %v1050, %v1098
    %v1100 = vpop.f32.mrf.mxu0
    %v1101 = vadd.f32 %v1052, %v1100
    %1102 = vmatmul.bf16.gmra.mxu0 %v532
    %v1103 = vpop.f32.mrf.mxu0
    %v1104 = vadd.f32 %v1055, %v1103
    %v1105 = vpop.f32.mrf.mxu0
    %v1106 = vadd.f32 %v1057, %v1105
    %1107 = vmatmul.bf16.gmra.mxu0 %v534
    %v1108 = vpop.f32.mrf.mxu0
    %v1109 = vadd.f32 %v1060, %v1108
    %v1110 = vpop.f32.mrf.mxu0
    %v1111 = vadd.f32 %v1062, %v1110
    %1112 = vmatmul.bf16.gmra.mxu0 %v536
    %v1113 = vpop.f32.mrf.mxu0
    %v1114 = vadd.f32 %v1065, %v1113
    %v1115 = vpop.f32.mrf.mxu0
    %v1116 = vadd.f32 %v1067, %v1115
    %1117 = vmatmul.bf16.gmra.mxu0 %v538
    %v1118 = vpop.f32.mrf.mxu0
    %v1119 = vadd.f32 %v1070, %v1118
    %v1120 = vpop.f32.mrf.mxu0
    %v1121 = vadd.f32 %v1072, %v1120
    %1122 = vmatmul.bf16.gmra.mxu0 %v540
    %v1123 = vpop.f32.mrf.mxu0
    %v1124 = vadd.f32 %v1075, %v1123
    %v1125 = vpop.f32.mrf.mxu0
    %v1126 = vadd.f32 %v1077, %v1125
    %1127 = vmatmul.bf16.gmra.mxu0 %v542
    %v1128 = vpop.f32.mrf.mxu0
    %v1129 = vadd.f32 %v1080, %v1128
    %v1130 = vpop.f32.mrf.mxu0
    %v1131 = vadd.f32 %v1082, %v1130
    %1132 = vdwg.mxu0
    %1133 = vmatpush.bf16.msra.mxu0 %v839
    %1134 = vmatpush.bf16.msra.mxu0 %v835
    %1135 = vmatpush.bf16.msra.mxu0 %v831
    %1136 = vmatpush.bf16.msra.mxu0 %v827
    %1137 = vmatpush.bf16.msra.mxu0 %v823
    %1138 = vmatpush.bf16.msra.mxu0 %v819
    %1139 = vmatpush.bf16.msra.mxu0 %v815
    %1140 = vmatpush.bf16.msra.mxu0 %v811
    %1141 = vmatmul.bf16.gmra.mxu0 %v527
    %v1142 = vpop.f32.mrf.mxu0
    %v1143 = vadd.f32 %v611, %v1142
    %v1144 = vpop.f32.mrf.mxu0
    %v1145 = vadd.f32 %v611, %v1144
    %1146 = vmatmul.bf16.gmra.mxu0 %v529
    %v1147 = vpop.f32.mrf.mxu0
    %v1148 = vadd.f32 %v611, %v1147
    %v1149 = vpop.f32.mrf.mxu0
    %v1150 = vadd.f32 %v611, %v1149
    %1151 = vmatmul.bf16.gmra.mxu0 %v531
    %v1152 = vpop.f32.mrf.mxu0
    %v1153 = vadd.f32 %v611, %v1152
    %v1154 = vpop.f32.mrf.mxu0
    %v1155 = vadd.f32 %v611, %v1154
    %1156 = vmatmul.bf16.gmra.mxu0 %v533
    %v1157 = vpop.f32.mrf.mxu0
    %v1158 = vadd.f32 %v611, %v1157
    %v1159 = vpop.f32.mrf.mxu0
    %v1160 = vadd.f32 %v611, %v1159
    %1161 = vmatmul.bf16.gmra.mxu0 %v535
    %v1162 = vpop.f32.mrf.mxu0
    %v1163 = vadd.f32 %v611, %v1162
    %v1164 = vpop.f32.mrf.mxu0
    %v1165 = vadd.f32 %v611, %v1164
    %1166 = vmatmul.bf16.gmra.mxu0 %v537
    %v1167 = vpop.f32.mrf.mxu0
    %v1168 = vadd.f32 %v611, %v1167
    %v1169 = vpop.f32.mrf.mxu0
    %v1170 = vadd.f32 %v611, %v1169
    %1171 = vmatmul.bf16.gmra.mxu0 %v539
    %v1172 = vpop.f32.mrf.mxu0
    %v1173 = vadd.f32 %v611, %v1172
    %v1174 = vpop.f32.mrf.mxu0
    %v1175 = vadd.f32 %v611, %v1174
    %1176 = vmatmul.bf16.gmra.mxu0 %v541
    %v1177 = vpop.f32.mrf.mxu0
    %v1178 = vadd.f32 %v611, %v1177
    %v1179 = vpop.f32.mrf.mxu0
    %v1180 = vadd.f32 %v611, %v1179
    %1181 = vdwg.mxu0
    %1182 = vmatpush.bf16.msra.mxu0 %v871
    %1183 = vmatpush.bf16.msra.mxu0 %v867
    %1184 = vmatpush.bf16.msra.mxu0 %v863
    %1185 = vmatpush.bf16.msra.mxu0 %v859
    %1186 = vmatpush.bf16.msra.mxu0 %v855
    %1187 = vmatpush.bf16.msra.mxu0 %v851
    %1188 = vmatpush.bf16.msra.mxu0 %v847
    %1189 = vmatpush.bf16.msra.mxu0 %v843
    %1190 = vmatmul.bf16.gmra.mxu0 %v528
    %v1191 = vpop.f32.mrf.mxu0
    %v1192 = vadd.f32 %v1143, %v1191
    %v1193 = vpop.f32.mrf.mxu0
    %v1194 = vadd.f32 %v1145, %v1193
    %1195 = vmatmul.bf16.gmra.mxu0 %v530
    %v1196 = vpop.f32.mrf.mxu0
    %v1197 = vadd.f32 %v1148, %v1196
    %v1198 = vpop.f32.mrf.mxu0
    %v1199 = vadd.f32 %v1150, %v1198
    %1200 = vmatmul.bf16.gmra.mxu0 %v532
    %v1201 = vpop.f32.mrf.mxu0
    %v1202 = vadd.f32 %v1153, %v1201
    %v1203 = vpop.f32.mrf.mxu0
    %v1204 = vadd.f32 %v1155, %v1203
    %1205 = vmatmul.bf16.gmra.mxu0 %v534
    %v1206 = vpop.f32.mrf.mxu0
    %v1207 = vadd.f32 %v1158, %v1206
    %v1208 = vpop.f32.mrf.mxu0
    %v1209 = vadd.f32 %v1160, %v1208
    %1210 = vmatmul.bf16.gmra.mxu0 %v536
    %v1211 = vpop.f32.mrf.mxu0
    %v1212 = vadd.f32 %v1163, %v1211
    %v1213 = vpop.f32.mrf.mxu0
    %v1214 = vadd.f32 %v1165, %v1213
    %1215 = vmatmul.bf16.gmra.mxu0 %v538
    %v1216 = vpop.f32.mrf.mxu0
    %v1217 = vadd.f32 %v1168, %v1216
    %v1218 = vpop.f32.mrf.mxu0
    %v1219 = vadd.f32 %v1170, %v1218
    %1220 = vmatmul.bf16.gmra.mxu0 %v540
    %v1221 = vpop.f32.mrf.mxu0
    %v1222 = vadd.f32 %v1173, %v1221
    %v1223 = vpop.f32.mrf.mxu0
    %v1224 = vadd.f32 %v1175, %v1223
    %1225 = vmatmul.bf16.gmra.mxu0 %v542
    %v1226 = vpop.f32.mrf.mxu0
    %v1227 = vadd.f32 %v1178, %v1226
    %v1228 = vpop.f32.mrf.mxu0
    %v1229 = vadd.f32 %v1180, %v1228
    %1230 = vdwg.mxu0
    %1231 = vmatpush.bf16.msra.mxu0 %v840
    %1232 = vmatpush.bf16.msra.mxu0 %v836
    %1233 = vmatpush.bf16.msra.mxu0 %v832
    %1234 = vmatpush.bf16.msra.mxu0 %v828
    %1235 = vmatpush.bf16.msra.mxu0 %v824
    %1236 = vmatpush.bf16.msra.mxu0 %v820
    %1237 = vmatpush.bf16.msra.mxu0 %v816
    %1238 = vmatpush.bf16.msra.mxu0 %v812
    %1239 = vmatmul.bf16.gmra.mxu0 %v527
    %v1240 = vpop.f32.mrf.mxu0
    %v1241 = vadd.f32 %v612, %v1240
    %v1242 = vpop.f32.mrf.mxu0
    %v1243 = vadd.f32 %v612, %v1242
    %1244 = vmatmul.bf16.gmra.mxu0 %v529
    %v1245 = vpop.f32.mrf.mxu0
    %v1246 = vadd.f32 %v612, %v1245
    %v1247 = vpop.f32.mrf.mxu0
    %v1248 = vadd.f32 %v612, %v1247
    %1249 = vmatmul.bf16.gmra.mxu0 %v531
    %v1250 = vpop.f32.mrf.mxu0
    %v1251 = vadd.f32 %v612, %v1250
    %v1252 = vpop.f32.mrf.mxu0
    %v1253 = vadd.f32 %v612, %v1252
    %1254 = vmatmul.bf16.gmra.mxu0 %v533
    %v1255 = vpop.f32.mrf.mxu0
    %v1256 = vadd.f32 %v612, %v1255
    %v1257 = vpop.f32.mrf.mxu0
    %v1258 = vadd.f32 %v612, %v1257
    %1259 = vmatmul.bf16.gmra.mxu0 %v535
    %v1260 = vpop.f32.mrf.mxu0
    %v1261 = vadd.f32 %v612, %v1260
    %v1262 = vpop.f32.mrf.mxu0
    %v1263 = vadd.f32 %v612, %v1262
    %1264 = vmatmul.bf16.gmra.mxu0 %v537
    %v1265 = vpop.f32.mrf.mxu0
    %v1266 = vadd.f32 %v612, %v1265
    %v1267 = vpop.f32.mrf.mxu0
    %v1268 = vadd.f32 %v612, %v1267
    %1269 = vmatmul.bf16.gmra.mxu0 %v539
    %v1270 = vpop.f32.mrf.mxu0
    %v1271 = vadd.f32 %v612, %v1270
    %v1272 = vpop.f32.mrf.mxu0
    %v1273 = vadd.f32 %v612, %v1272
    %1274 = vmatmul.bf16.gmra.mxu0 %v541
    %v1275 = vpop.f32.mrf.mxu0
    %v1276 = vadd.f32 %v612, %v1275
    %v1277 = vpop.f32.mrf.mxu0
    %v1278 = vadd.f32 %v612, %v1277
    %1279 = vdwg.mxu0
    %1280 = vmatpush.bf16.msra.mxu0 %v872
    %1281 = vmatpush.bf16.msra.mxu0 %v868
    %1282 = vmatpush.bf16.msra.mxu0 %v864
    %1283 = vmatpush.bf16.msra.mxu0 %v860
    %1284 = vmatpush.bf16.msra.mxu0 %v856
    %1285 = vmatpush.bf16.msra.mxu0 %v852
    %1286 = vmatpush.bf16.msra.mxu0 %v848
    %1287 = vmatpush.bf16.msra.mxu0 %v844
    %1288 = vmatmul.bf16.gmra.mxu0 %v528
    %v1289 = vpop.f32.mrf.mxu0
    %v1290 = vadd.f32 %v1241, %v1289
    %v1291 = vpop.f32.mrf.mxu0
    %v1292 = vadd.f32 %v1243, %v1291
    %1293 = vmatmul.bf16.gmra.mxu0 %v530
    %v1294 = vpop.f32.mrf.mxu0
    %v1295 = vadd.f32 %v1246, %v1294
    %v1296 = vpop.f32.mrf.mxu0
    %v1297 = vadd.f32 %v1248, %v1296
    %1298 = vmatmul.bf16.gmra.mxu0 %v532
    %v1299 = vpop.f32.mrf.mxu0
    %v1300 = vadd.f32 %v1251, %v1299
    %v1301 = vpop.f32.mrf.mxu0
    %v1302 = vadd.f32 %v1253, %v1301
    %1303 = vmatmul.bf16.gmra.mxu0 %v534
    %v1304 = vpop.f32.mrf.mxu0
    %v1305 = vadd.f32 %v1256, %v1304
    %v1306 = vpop.f32.mrf.mxu0
    %v1307 = vadd.f32 %v1258, %v1306
    %1308 = vmatmul.bf16.gmra.mxu0 %v536
    %v1309 = vpop.f32.mrf.mxu0
    %v1310 = vadd.f32 %v1261, %v1309
    %v1311 = vpop.f32.mrf.mxu0
    %v1312 = vadd.f32 %v1263, %v1311
    %1313 = vmatmul.bf16.gmra.mxu0 %v538
    %v1314 = vpop.f32.mrf.mxu0
    %v1315 = vadd.f32 %v1266, %v1314
    %v1316 = vpop.f32.mrf.mxu0
    %v1317 = vadd.f32 %v1268, %v1316
    %1318 = vmatmul.bf16.gmra.mxu0 %v540
    %v1319 = vpop.f32.mrf.mxu0
    %v1320 = vadd.f32 %v1271, %v1319
    %v1321 = vpop.f32.mrf.mxu0
    %v1322 = vadd.f32 %v1273, %v1321
    %1323 = vmatmul.bf16.gmra.mxu0 %v542
    %v1324 = vpop.f32.mrf.mxu0
    %v1325 = vadd.f32 %v1276, %v1324
    %v1326 = vpop.f32.mrf.mxu0
    %v1327 = vadd.f32 %v1278, %v1326
    %1328 = vdwg.mxu0
    %v1329 = vmax.f32 %v996, 0.0
    %v1330 = vmax.f32 %v1094, 0.0
    %v1331 = vmax.f32 %v1192, 0.0
    %v1332 = vmax.f32 %v1290, 0.0
    %v1333 = vmax.f32 %v998, 0.0
    %v1334 = vmax.f32 %v1096, 0.0
    %v1335 = vmax.f32 %v1194, 0.0
    %v1336 = vmax.f32 %v1292, 0.0
    %v1337 = vmax.f32 %v1001, 0.0
    %v1338 = vmax.f32 %v1099, 0.0
    %v1339 = vmax.f32 %v1197, 0.0
    %v1340 = vmax.f32 %v1295, 0.0
    %v1341 = vmax.f32 %v1003, 0.0
    %v1342 = vmax.f32 %v1101, 0.0
    %v1343 = vmax.f32 %v1199, 0.0
    %v1344 = vmax.f32 %v1297, 0.0
    %v1345 = vmax.f32 %v1006, 0.0
    %v1346 = vmax.f32 %v1104, 0.0
    %v1347 = vmax.f32 %v1202, 0.0
    %v1348 = vmax.f32 %v1300, 0.0
    %v1349 = vmax.f32 %v1008, 0.0
    %v1350 = vmax.f32 %v1106, 0.0
    %v1351 = vmax.f32 %v1204, 0.0
    %v1352 = vmax.f32 %v1302, 0.0
    %v1353 = vmax.f32 %v1011, 0.0
    %v1354 = vmax.f32 %v1109, 0.0
    %v1355 = vmax.f32 %v1207, 0.0
    %v1356 = vmax.f32 %v1305, 0.0
    %v1357 = vmax.f32 %v1013, 0.0
    %v1358 = vmax.f32 %v1111, 0.0
    %v1359 = vmax.f32 %v1209, 0.0
    %v1360 = vmax.f32 %v1307, 0.0
    %v1361 = vmax.f32 %v1016, 0.0
    %v1362 = vmax.f32 %v1114, 0.0
    %v1363 = vmax.f32 %v1212, 0.0
    %v1364 = vmax.f32 %v1310, 0.0
    %v1365 = vmax.f32 %v1018, 0.0
    %v1366 = vmax.f32 %v1116, 0.0
    %v1367 = vmax.f32 %v1214, 0.0
    %v1368 = vmax.f32 %v1312, 0.0
    %v1369 = vmax.f32 %v1021, 0.0
    %v1370 = vmax.f32 %v1119, 0.0
    %v1371 = vmax.f32 %v1217, 0.0
    %v1372 = vmax.f32 %v1315, 0.0
    %v1373 = vmax.f32 %v1023, 0.0
    %v1374 = vmax.f32 %v1121, 0.0
    %v1375 = vmax.f32 %v1219, 0.0
    %v1376 = vmax.f32 %v1317, 0.0
    %v1377 = vmax.f32 %v1026, 0.0
    %v1378 = vmax.f32 %v1124, 0.0
    %v1379 = vmax.f32 %v1222, 0.0
    %v1380 = vmax.f32 %v1320, 0.0
    %v1381 = vmax.f32 %v1028, 0.0
    %v1382 = vmax.f32 %v1126, 0.0
    %v1383 = vmax.f32 %v1224, 0.0
    %v1384 = vmax.f32 %v1322, 0.0
    %v1385 = vmax.f32 %v1031, 0.0
    %v1386 = vmax.f32 %v1129, 0.0
    %v1387 = vmax.f32 %v1227, 0.0
    %v1388 = vmax.f32 %v1325, 0.0
    %v1389 = vmax.f32 %v1033, 0.0
    %v1390 = vmax.f32 %v1131, 0.0
    %v1391 = vmax.f32 %v1229, 0.0
    %v1392 = vmax.f32 %v1327, 0.0
    %v1393 = vpack.c.bf16 %v1333, %v1329
    %v1394 = vpack.c.bf16 %v1334, %v1330
    %v1395 = vpack.c.bf16 %v1335, %v1331
    %v1396 = vpack.c.bf16 %v1336, %v1332
    %v1397 = vpack.c.bf16 %v1341, %v1337
    %v1398 = vpack.c.bf16 %v1342, %v1338
    %v1399 = vpack.c.bf16 %v1343, %v1339
    %v1400 = vpack.c.bf16 %v1344, %v1340
    %v1401 = vpack.c.bf16 %v1349, %v1345
    %v1402 = vpack.c.bf16 %v1350, %v1346
    %v1403 = vpack.c.bf16 %v1351, %v1347
    %v1404 = vpack.c.bf16 %v1352, %v1348
    %v1405 = vpack.c.bf16 %v1357, %v1353
    %v1406 = vpack.c.bf16 %v1358, %v1354
    %v1407 = vpack.c.bf16 %v1359, %v1355
    %v1408 = vpack.c.bf16 %v1360, %v1356
    %v1409 = vpack.c.bf16 %v1365, %v1361
    %v1410 = vpack.c.bf16 %v1366, %v1362
    %v1411 = vpack.c.bf16 %v1367, %v1363
    %v1412 = vpack.c.bf16 %v1368, %v1364
    %v1413 = vpack.c.bf16 %v1373, %v1369
    %v1414 = vpack.c.bf16 %v1374, %v1370
    %v1415 = vpack.c.bf16 %v1375, %v1371
    %v1416 = vpack.c.bf16 %v1376, %v1372
    %v1417 = vpack.c.bf16 %v1381, %v1377
    %v1418 = vpack.c.bf16 %v1382, %v1378
    %v1419 = vpack.c.bf16 %v1383, %v1379
    %v1420 = vpack.c.bf16 %v1384, %v1380
    %v1421 = vpack.c.bf16 %v1389, %v1385
    %v1422 = vpack.c.bf16 %v1390, %v1386
    %v1423 = vpack.c.bf16 %v1391, %v1387
    %v1424 = vpack.c.bf16 %v1392, %v1388
    %v1425 = vld [vmem:[#allocation11] sm:$0xff]
    %v1426 = vld [vmem:[#allocation11 + $0x8] sm:$0xff]
    %v1427 = vld [vmem:[#allocation11 + $0x10] sm:$0xff]
    %v1428 = vld [vmem:[#allocation11 + $0x18] sm:$0xff]
    %v1429 = vld [vmem:[#allocation11 + $0x20] sm:$0xff]
    %v1430 = vld [vmem:[#allocation11 + $0x28] sm:$0xff]
    %v1431 = vld [vmem:[#allocation11 + $0x30] sm:$0xff]
    %v1432 = vld [vmem:[#allocation11 + $0x38] sm:$0xff]
    %v1433 = vld [vmem:[#allocation11 + $0x40] sm:$0xff]
    %v1434 = vld [vmem:[#allocation11 + $0x48] sm:$0xff]
    %v1435 = vld [vmem:[#allocation11 + $0x50] sm:$0xff]
    %v1436 = vld [vmem:[#allocation11 + $0x58] sm:$0xff]
    %v1437 = vld [vmem:[#allocation11 + $0x60] sm:$0xff]
    %v1438 = vld [vmem:[#allocation11 + $0x68] sm:$0xff]
    %v1439 = vld [vmem:[#allocation11 + $0x70] sm:$0xff]
    %v1440 = vld [vmem:[#allocation11 + $0x78] sm:$0xff]
    %v1441 = vld [vmem:[#allocation11 + $0x80] sm:$0xff]
    %v1442 = vld [vmem:[#allocation11 + $0x88] sm:$0xff]
    %v1443 = vld [vmem:[#allocation11 + $0x90] sm:$0xff]
    %v1444 = vld [vmem:[#allocation11 + $0x98] sm:$0xff]
    %v1445 = vld [vmem:[#allocation11 + $0xa0] sm:$0xff]
    %v1446 = vld [vmem:[#allocation11 + $0xa8] sm:$0xff]
    %v1447 = vld [vmem:[#allocation11 + $0xb0] sm:$0xff]
    %v1448 = vld [vmem:[#allocation11 + $0xb8] sm:$0xff]
    %v1449 = vld [vmem:[#allocation11 + $0xc0] sm:$0xff]
    %v1450 = vld [vmem:[#allocation11 + $0xc8] sm:$0xff]
    %v1451 = vld [vmem:[#allocation11 + $0xd0] sm:$0xff]
    %v1452 = vld [vmem:[#allocation11 + $0xd8] sm:$0xff]
    %v1453 = vld [vmem:[#allocation11 + $0xe0] sm:$0xff]
    %v1454 = vld [vmem:[#allocation11 + $0xe8] sm:$0xff]
    %v1455 = vld [vmem:[#allocation11 + $0xf0] sm:$0xff]
    %v1456 = vld [vmem:[#allocation11 + $0xf8] sm:$0xff]
    %v1457 = vld [vmem:[#allocation11 + $0x100] sm:$0xff]
    %v1458 = vld [vmem:[#allocation11 + $0x108] sm:$0xff]
    %v1459 = vld [vmem:[#allocation11 + $0x110] sm:$0xff]
    %v1460 = vld [vmem:[#allocation11 + $0x118] sm:$0xff]
    %v1461 = vld [vmem:[#allocation11 + $0x120] sm:$0xff]
    %v1462 = vld [vmem:[#allocation11 + $0x128] sm:$0xff]
    %v1463 = vld [vmem:[#allocation11 + $0x130] sm:$0xff]
    %v1464 = vld [vmem:[#allocation11 + $0x138] sm:$0xff]
    %v1465 = vld [vmem:[#allocation11 + $0x140] sm:$0xff]
    %v1466 = vld [vmem:[#allocation11 + $0x148] sm:$0xff]
    %v1467 = vld [vmem:[#allocation11 + $0x150] sm:$0xff]
    %v1468 = vld [vmem:[#allocation11 + $0x158] sm:$0xff]
    %v1469 = vld [vmem:[#allocation11 + $0x160] sm:$0xff]
    %v1470 = vld [vmem:[#allocation11 + $0x168] sm:$0xff]
    %v1471 = vld [vmem:[#allocation11 + $0x170] sm:$0xff]
    %v1472 = vld [vmem:[#allocation11 + $0x178] sm:$0xff]
    %v1473 = vld [vmem:[#allocation11 + $0x180] sm:$0xff]
    %v1474 = vld [vmem:[#allocation11 + $0x188] sm:$0xff]
    %v1475 = vld [vmem:[#allocation11 + $0x190] sm:$0xff]
    %v1476 = vld [vmem:[#allocation11 + $0x198] sm:$0xff]
    %v1477 = vld [vmem:[#allocation11 + $0x1a0] sm:$0xff]
    %v1478 = vld [vmem:[#allocation11 + $0x1a8] sm:$0xff]
    %v1479 = vld [vmem:[#allocation11 + $0x1b0] sm:$0xff]
    %v1480 = vld [vmem:[#allocation11 + $0x1b8] sm:$0xff]
    %v1481 = vld [vmem:[#allocation11 + $0x1c0] sm:$0xff]
    %v1482 = vld [vmem:[#allocation11 + $0x1c8] sm:$0xff]
    %v1483 = vld [vmem:[#allocation11 + $0x1d0] sm:$0xff]
    %v1484 = vld [vmem:[#allocation11 + $0x1d8] sm:$0xff]
    %v1485 = vld [vmem:[#allocation11 + $0x1e0] sm:$0xff]
    %v1486 = vld [vmem:[#allocation11 + $0x1e8] sm:$0xff]
    %v1487 = vld [vmem:[#allocation11 + $0x1f0] sm:$0xff]
    %v1488 = vld [vmem:[#allocation11 + $0x1f8] sm:$0xff]
    %v1489 = vld [vmem:[#allocation11 + $0x200] sm:$0xff]
    %v1490 = vld [vmem:[#allocation11 + $0x208] sm:$0xff]
    %v1491 = vld [vmem:[#allocation11 + $0x210] sm:$0xff]
    %v1492 = vld [vmem:[#allocation11 + $0x218] sm:$0xff]
    %v1493 = vld [vmem:[#allocation11 + $0x220] sm:$0xff]
    %v1494 = vld [vmem:[#allocation11 + $0x228] sm:$0xff]
    %v1495 = vld [vmem:[#allocation11 + $0x230] sm:$0xff]
    %v1496 = vld [vmem:[#allocation11 + $0x238] sm:$0xff]
    %v1497 = vld [vmem:[#allocation11 + $0x240] sm:$0xff]
    %v1498 = vld [vmem:[#allocation11 + $0x248] sm:$0xff]
    %v1499 = vld [vmem:[#allocation11 + $0x250] sm:$0xff]
    %v1500 = vld [vmem:[#allocation11 + $0x258] sm:$0xff]
    %v1501 = vld [vmem:[#allocation11 + $0x260] sm:$0xff]
    %v1502 = vld [vmem:[#allocation11 + $0x268] sm:$0xff]
    %v1503 = vld [vmem:[#allocation11 + $0x270] sm:$0xff]
    %v1504 = vld [vmem:[#allocation11 + $0x278] sm:$0xff]
    %v1505 = vld [vmem:[#allocation11 + $0x280] sm:$0xff]
    %v1506 = vld [vmem:[#allocation11 + $0x288] sm:$0xff]
    %v1507 = vld [vmem:[#allocation11 + $0x290] sm:$0xff]
    %v1508 = vld [vmem:[#allocation11 + $0x298] sm:$0xff]
    %v1509 = vld [vmem:[#allocation11 + $0x2a0] sm:$0xff]
    %v1510 = vld [vmem:[#allocation11 + $0x2a8] sm:$0xff]
    %v1511 = vld [vmem:[#allocation11 + $0x2b0] sm:$0xff]
    %v1512 = vld [vmem:[#allocation11 + $0x2b8] sm:$0xff]
    %v1513 = vld [vmem:[#allocation11 + $0x2c0] sm:$0xff]
    %v1514 = vld [vmem:[#allocation11 + $0x2c8] sm:$0xff]
    %v1515 = vld [vmem:[#allocation11 + $0x2d0] sm:$0xff]
    %v1516 = vld [vmem:[#allocation11 + $0x2d8] sm:$0xff]
    %v1517 = vld [vmem:[#allocation11 + $0x2e0] sm:$0xff]
    %v1518 = vld [vmem:[#allocation11 + $0x2e8] sm:$0xff]
    %v1519 = vld [vmem:[#allocation11 + $0x2f0] sm:$0xff]
    %v1520 = vld [vmem:[#allocation11 + $0x2f8] sm:$0xff]
    %v1521 = vld [vmem:[#allocation11 + $0x300] sm:$0xff]
    %v1522 = vld [vmem:[#allocation11 + $0x308] sm:$0xff]
    %v1523 = vld [vmem:[#allocation11 + $0x310] sm:$0xff]
    %v1524 = vld [vmem:[#allocation11 + $0x318] sm:$0xff]
    %v1525 = vld [vmem:[#allocation11 + $0x320] sm:$0xff]
    %v1526 = vld [vmem:[#allocation11 + $0x328] sm:$0xff]
    %v1527 = vld [vmem:[#allocation11 + $0x330] sm:$0xff]
    %v1528 = vld [vmem:[#allocation11 + $0x338] sm:$0xff]
    %v1529 = vld [vmem:[#allocation11 + $0x340] sm:$0xff]
    %v1530 = vld [vmem:[#allocation11 + $0x348] sm:$0xff]
    %v1531 = vld [vmem:[#allocation11 + $0x350] sm:$0xff]
    %v1532 = vld [vmem:[#allocation11 + $0x358] sm:$0xff]
    %v1533 = vld [vmem:[#allocation11 + $0x360] sm:$0xff]
    %v1534 = vld [vmem:[#allocation11 + $0x368] sm:$0xff]
    %v1535 = vld [vmem:[#allocation11 + $0x370] sm:$0xff]
    %v1536 = vld [vmem:[#allocation11 + $0x378] sm:$0xff]
    %v1537 = vld [vmem:[#allocation11 + $0x380] sm:$0xff]
    %v1538 = vld [vmem:[#allocation11 + $0x388] sm:$0xff]
    %v1539 = vld [vmem:[#allocation11 + $0x390] sm:$0xff]
    %v1540 = vld [vmem:[#allocation11 + $0x398] sm:$0xff]
    %v1541 = vld [vmem:[#allocation11 + $0x3a0] sm:$0xff]
    %v1542 = vld [vmem:[#allocation11 + $0x3a8] sm:$0xff]
    %v1543 = vld [vmem:[#allocation11 + $0x3b0] sm:$0xff]
    %v1544 = vld [vmem:[#allocation11 + $0x3b8] sm:$0xff]
    %v1545 = vld [vmem:[#allocation11 + $0x3c0] sm:$0xff]
    %v1546 = vld [vmem:[#allocation11 + $0x3c8] sm:$0xff]
    %v1547 = vld [vmem:[#allocation11 + $0x3d0] sm:$0xff]
    %v1548 = vld [vmem:[#allocation11 + $0x3d8] sm:$0xff]
    %v1549 = vld [vmem:[#allocation11 + $0x3e0] sm:$0xff]
    %v1550 = vld [vmem:[#allocation11 + $0x3e8] sm:$0xff]
    %v1551 = vld [vmem:[#allocation11 + $0x3f0] sm:$0xff]
    %v1552 = vld [vmem:[#allocation11 + $0x3f8] sm:$0xff]
    %v1553 = vld [vmem:[%s7] sm:$0xf]
    %v1555 = vperm.slane %v1553, 0
    %v1556 = vperm.slane %v1553, 1
    %v1557 = vperm.slane %v1553, 2
    %v1558 = vperm.slane %v1553, 3
    %v1691 = vunpack.c.l.b16 %v1425
    %v1692 = vunpack.c.h.b16 %v1425
    %v1693 = vunpack.c.l.b16 %v1426
    %v1694 = vunpack.c.h.b16 %v1426
    %v1695 = vunpack.c.l.b16 %v1427
    %v1696 = vunpack.c.h.b16 %v1427
    %v1697 = vunpack.c.l.b16 %v1428
    %v1698 = vunpack.c.h.b16 %v1428
    %v1699 = vunpack.c.l.b16 %v1429
    %v1700 = vunpack.c.h.b16 %v1429
    %v1701 = vunpack.c.l.b16 %v1430
    %v1702 = vunpack.c.h.b16 %v1430
    %v1703 = vunpack.c.l.b16 %v1431
    %v1704 = vunpack.c.h.b16 %v1431
    %v1705 = vunpack.c.l.b16 %v1432
    %v1706 = vunpack.c.h.b16 %v1432
    %v1707 = vunpack.c.l.b16 %v1433
    %v1708 = vunpack.c.h.b16 %v1433
    %v1709 = vunpack.c.l.b16 %v1434
    %v1710 = vunpack.c.h.b16 %v1434
    %v1711 = vunpack.c.l.b16 %v1435
    %v1712 = vunpack.c.h.b16 %v1435
    %v1713 = vunpack.c.l.b16 %v1436
    %v1714 = vunpack.c.h.b16 %v1436
    %v1715 = vunpack.c.l.b16 %v1437
    %v1716 = vunpack.c.h.b16 %v1437
    %v1717 = vunpack.c.l.b16 %v1438
    %v1718 = vunpack.c.h.b16 %v1438
    %v1719 = vunpack.c.l.b16 %v1439
    %v1720 = vunpack.c.h.b16 %v1439
    %v1721 = vunpack.c.l.b16 %v1440
    %v1722 = vunpack.c.h.b16 %v1440
    %v1723 = vunpack.c.l.b16 %v1441
    %v1724 = vunpack.c.h.b16 %v1441
    %v1725 = vunpack.c.l.b16 %v1442
    %v1726 = vunpack.c.h.b16 %v1442
    %v1727 = vunpack.c.l.b16 %v1443
    %v1728 = vunpack.c.h.b16 %v1443
    %v1729 = vunpack.c.l.b16 %v1444
    %v1730 = vunpack.c.h.b16 %v1444
    %v1731 = vunpack.c.l.b16 %v1445
    %v1732 = vunpack.c.h.b16 %v1445
    %v1733 = vunpack.c.l.b16 %v1446
    %v1734 = vunpack.c.h.b16 %v1446
    %v1735 = vunpack.c.l.b16 %v1447
    %v1736 = vunpack.c.h.b16 %v1447
    %v1737 = vunpack.c.l.b16 %v1448
    %v1738 = vunpack.c.h.b16 %v1448
    %v1739 = vunpack.c.l.b16 %v1449
    %v1740 = vunpack.c.h.b16 %v1449
    %v1741 = vunpack.c.l.b16 %v1450
    %v1742 = vunpack.c.h.b16 %v1450
    %v1743 = vunpack.c.l.b16 %v1451
    %v1744 = vunpack.c.h.b16 %v1451
    %v1745 = vunpack.c.l.b16 %v1452
    %v1746 = vunpack.c.h.b16 %v1452
    %v1747 = vunpack.c.l.b16 %v1453
    %v1748 = vunpack.c.h.b16 %v1453
    %v1749 = vunpack.c.l.b16 %v1454
    %v1750 = vunpack.c.h.b16 %v1454
    %v1751 = vunpack.c.l.b16 %v1455
    %v1752 = vunpack.c.h.b16 %v1455
    %v1753 = vunpack.c.l.b16 %v1456
    %v1754 = vunpack.c.h.b16 %v1456
    %v1755 = vunpack.c.l.b16 %v1457
    %v1756 = vunpack.c.h.b16 %v1457
    %v1757 = vunpack.c.l.b16 %v1458
    %v1758 = vunpack.c.h.b16 %v1458
    %v1759 = vunpack.c.l.b16 %v1459
    %v1760 = vunpack.c.h.b16 %v1459
    %v1761 = vunpack.c.l.b16 %v1460
    %v1762 = vunpack.c.h.b16 %v1460
    %v1763 = vunpack.c.l.b16 %v1461
    %v1764 = vunpack.c.h.b16 %v1461
    %v1765 = vunpack.c.l.b16 %v1462
    %v1766 = vunpack.c.h.b16 %v1462
    %v1767 = vunpack.c.l.b16 %v1463
    %v1768 = vunpack.c.h.b16 %v1463
    %v1769 = vunpack.c.l.b16 %v1464
    %v1770 = vunpack.c.h.b16 %v1464
    %v1771 = vunpack.c.l.b16 %v1465
    %v1772 = vunpack.c.h.b16 %v1465
    %v1773 = vunpack.c.l.b16 %v1466
    %v1774 = vunpack.c.h.b16 %v1466
    %v1775 = vunpack.c.l.b16 %v1467
    %v1776 = vunpack.c.h.b16 %v1467
    %v1777 = vunpack.c.l.b16 %v1468
    %v1778 = vunpack.c.h.b16 %v1468
    %v1779 = vunpack.c.l.b16 %v1469
    %v1780 = vunpack.c.h.b16 %v1469
    %v1781 = vunpack.c.l.b16 %v1470
    %v1782 = vunpack.c.h.b16 %v1470
    %v1783 = vunpack.c.l.b16 %v1471
    %v1784 = vunpack.c.h.b16 %v1471
    %v1785 = vunpack.c.l.b16 %v1472
    %v1786 = vunpack.c.h.b16 %v1472
    %v1787 = vunpack.c.l.b16 %v1473
    %v1788 = vunpack.c.h.b16 %v1473
    %v1789 = vunpack.c.l.b16 %v1474
    %v1790 = vunpack.c.h.b16 %v1474
    %v1791 = vunpack.c.l.b16 %v1475
    %v1792 = vunpack.c.h.b16 %v1475
    %v1793 = vunpack.c.l.b16 %v1476
    %v1794 = vunpack.c.h.b16 %v1476
    %v1795 = vunpack.c.l.b16 %v1477
    %v1796 = vunpack.c.h.b16 %v1477
    %v1797 = vunpack.c.l.b16 %v1478
    %v1798 = vunpack.c.h.b16 %v1478
    %v1799 = vunpack.c.l.b16 %v1479
    %v1800 = vunpack.c.h.b16 %v1479
    %v1801 = vunpack.c.l.b16 %v1480
    %v1802 = vunpack.c.h.b16 %v1480
    %v1803 = vunpack.c.l.b16 %v1481
    %v1804 = vunpack.c.h.b16 %v1481
    %v1805 = vunpack.c.l.b16 %v1482
    %v1806 = vunpack.c.h.b16 %v1482
    %v1807 = vunpack.c.l.b16 %v1483
    %v1808 = vunpack.c.h.b16 %v1483
    %v1809 = vunpack.c.l.b16 %v1484
    %v1810 = vunpack.c.h.b16 %v1484
    %v1811 = vunpack.c.l.b16 %v1485
    %v1812 = vunpack.c.h.b16 %v1485
    %v1813 = vunpack.c.l.b16 %v1486
    %v1814 = vunpack.c.h.b16 %v1486
    %v1815 = vunpack.c.l.b16 %v1487
    %v1816 = vunpack.c.h.b16 %v1487
    %v1817 = vunpack.c.l.b16 %v1488
    %v1818 = vunpack.c.h.b16 %v1488
    %v1819 = vunpack.c.l.b16 %v1489
    %v1820 = vunpack.c.h.b16 %v1489
    %v1821 = vunpack.c.l.b16 %v1490
    %v1822 = vunpack.c.h.b16 %v1490
    %v1823 = vunpack.c.l.b16 %v1491
    %v1824 = vunpack.c.h.b16 %v1491
    %v1825 = vunpack.c.l.b16 %v1492
    %v1826 = vunpack.c.h.b16 %v1492
    %v1827 = vunpack.c.l.b16 %v1493
    %v1828 = vunpack.c.h.b16 %v1493
    %v1829 = vunpack.c.l.b16 %v1494
    %v1830 = vunpack.c.h.b16 %v1494
    %v1831 = vunpack.c.l.b16 %v1495
    %v1832 = vunpack.c.h.b16 %v1495
    %v1833 = vunpack.c.l.b16 %v1496
    %v1834 = vunpack.c.h.b16 %v1496
    %v1835 = vunpack.c.l.b16 %v1497
    %v1836 = vunpack.c.h.b16 %v1497
    %v1837 = vunpack.c.l.b16 %v1498
    %v1838 = vunpack.c.h.b16 %v1498
    %v1839 = vunpack.c.l.b16 %v1499
    %v1840 = vunpack.c.h.b16 %v1499
    %v1841 = vunpack.c.l.b16 %v1500
    %v1842 = vunpack.c.h.b16 %v1500
    %v1843 = vunpack.c.l.b16 %v1501
    %v1844 = vunpack.c.h.b16 %v1501
    %v1845 = vunpack.c.l.b16 %v1502
    %v1846 = vunpack.c.h.b16 %v1502
    %v1847 = vunpack.c.l.b16 %v1503
    %v1848 = vunpack.c.h.b16 %v1503
    %v1849 = vunpack.c.l.b16 %v1504
    %v1850 = vunpack.c.h.b16 %v1504
    %v1851 = vunpack.c.l.b16 %v1505
    %v1852 = vunpack.c.h.b16 %v1505
    %v1853 = vunpack.c.l.b16 %v1506
    %v1854 = vunpack.c.h.b16 %v1506
    %v1855 = vunpack.c.l.b16 %v1507
    %v1856 = vunpack.c.h.b16 %v1507
    %v1857 = vunpack.c.l.b16 %v1508
    %v1858 = vunpack.c.h.b16 %v1508
    %v1859 = vunpack.c.l.b16 %v1509
    %v1860 = vunpack.c.h.b16 %v1509
    %v1861 = vunpack.c.l.b16 %v1510
    %v1862 = vunpack.c.h.b16 %v1510
    %v1863 = vunpack.c.l.b16 %v1511
    %v1864 = vunpack.c.h.b16 %v1511
    %v1865 = vunpack.c.l.b16 %v1512
    %v1866 = vunpack.c.h.b16 %v1512
    %v1867 = vunpack.c.l.b16 %v1513
    %v1868 = vunpack.c.h.b16 %v1513
    %v1869 = vunpack.c.l.b16 %v1514
    %v1870 = vunpack.c.h.b16 %v1514
    %v1871 = vunpack.c.l.b16 %v1515
    %v1872 = vunpack.c.h.b16 %v1515
    %v1873 = vunpack.c.l.b16 %v1516
    %v1874 = vunpack.c.h.b16 %v1516
    %v1875 = vunpack.c.l.b16 %v1517
    %v1876 = vunpack.c.h.b16 %v1517
    %v1877 = vunpack.c.l.b16 %v1518
    %v1878 = vunpack.c.h.b16 %v1518
    %v1879 = vunpack.c.l.b16 %v1519
    %v1880 = vunpack.c.h.b16 %v1519
    %v1881 = vunpack.c.l.b16 %v1520
    %v1882 = vunpack.c.h.b16 %v1520
    %v1883 = vunpack.c.l.b16 %v1521
    %v1884 = vunpack.c.h.b16 %v1521
    %v1885 = vunpack.c.l.b16 %v1522
    %v1886 = vunpack.c.h.b16 %v1522
    %v1887 = vunpack.c.l.b16 %v1523
    %v1888 = vunpack.c.h.b16 %v1523
    %v1889 = vunpack.c.l.b16 %v1524
    %v1890 = vunpack.c.h.b16 %v1524
    %v1891 = vunpack.c.l.b16 %v1525
    %v1892 = vunpack.c.h.b16 %v1525
    %v1893 = vunpack.c.l.b16 %v1526
    %v1894 = vunpack.c.h.b16 %v1526
    %v1895 = vunpack.c.l.b16 %v1527
    %v1896 = vunpack.c.h.b16 %v1527
    %v1897 = vunpack.c.l.b16 %v1528
    %v1898 = vunpack.c.h.b16 %v1528
    %v1899 = vunpack.c.l.b16 %v1529
    %v1900 = vunpack.c.h.b16 %v1529
    %v1901 = vunpack.c.l.b16 %v1530
    %v1902 = vunpack.c.h.b16 %v1530
    %v1903 = vunpack.c.l.b16 %v1531
    %v1904 = vunpack.c.h.b16 %v1531
    %v1905 = vunpack.c.l.b16 %v1532
    %v1906 = vunpack.c.h.b16 %v1532
    %v1907 = vunpack.c.l.b16 %v1533
    %v1908 = vunpack.c.h.b16 %v1533
    %v1909 = vunpack.c.l.b16 %v1534
    %v1910 = vunpack.c.h.b16 %v1534
    %v1911 = vunpack.c.l.b16 %v1535
    %v1912 = vunpack.c.h.b16 %v1535
    %v1913 = vunpack.c.l.b16 %v1536
    %v1914 = vunpack.c.h.b16 %v1536
    %v1915 = vunpack.c.l.b16 %v1537
    %v1916 = vunpack.c.h.b16 %v1537
    %v1917 = vunpack.c.l.b16 %v1538
    %v1918 = vunpack.c.h.b16 %v1538
    %v1919 = vunpack.c.l.b16 %v1539
    %v1920 = vunpack.c.h.b16 %v1539
    %v1921 = vunpack.c.l.b16 %v1540
    %v1922 = vunpack.c.h.b16 %v1540
    %v1923 = vunpack.c.l.b16 %v1541
    %v1924 = vunpack.c.h.b16 %v1541
    %v1925 = vunpack.c.l.b16 %v1542
    %v1926 = vunpack.c.h.b16 %v1542
    %v1927 = vunpack.c.l.b16 %v1543
    %v1928 = vunpack.c.h.b16 %v1543
    %v1929 = vunpack.c.l.b16 %v1544
    %v1930 = vunpack.c.h.b16 %v1544
    %v1931 = vunpack.c.l.b16 %v1545
    %v1932 = vunpack.c.h.b16 %v1545
    %v1933 = vunpack.c.l.b16 %v1546
    %v1934 = vunpack.c.h.b16 %v1546
    %v1935 = vunpack.c.l.b16 %v1547
    %v1936 = vunpack.c.h.b16 %v1547
    %v1937 = vunpack.c.l.b16 %v1548
    %v1938 = vunpack.c.h.b16 %v1548
    %v1939 = vunpack.c.l.b16 %v1549
    %v1940 = vunpack.c.h.b16 %v1549
    %v1941 = vunpack.c.l.b16 %v1550
    %v1942 = vunpack.c.h.b16 %v1550
    %v1943 = vunpack.c.l.b16 %v1551
    %v1944 = vunpack.c.h.b16 %v1551
    %v1945 = vunpack.c.l.b16 %v1552
    %v1946 = vunpack.c.h.b16 %v1552
    %v1947 = vpack.c.b16 %v1695, %v1691
    %v1948 = vpack.c.b16 %v1696, %v1692
    %v1949 = vpack.c.b16 %v1697, %v1693
    %v1950 = vpack.c.b16 %v1698, %v1694
    %v1951 = vpack.c.b16 %v1703, %v1699
    %v1952 = vpack.c.b16 %v1704, %v1700
    %v1953 = vpack.c.b16 %v1705, %v1701
    %v1954 = vpack.c.b16 %v1706, %v1702
    %v1955 = vpack.c.b16 %v1711, %v1707
    %v1956 = vpack.c.b16 %v1712, %v1708
    %v1957 = vpack.c.b16 %v1713, %v1709
    %v1958 = vpack.c.b16 %v1714, %v1710
    %v1959 = vpack.c.b16 %v1719, %v1715
    %v1960 = vpack.c.b16 %v1720, %v1716
    %v1961 = vpack.c.b16 %v1721, %v1717
    %v1962 = vpack.c.b16 %v1722, %v1718
    %v1963 = vpack.c.b16 %v1727, %v1723
    %v1964 = vpack.c.b16 %v1728, %v1724
    %v1965 = vpack.c.b16 %v1729, %v1725
    %v1966 = vpack.c.b16 %v1730, %v1726
    %v1967 = vpack.c.b16 %v1735, %v1731
    %v1968 = vpack.c.b16 %v1736, %v1732
    %v1969 = vpack.c.b16 %v1737, %v1733
    %v1970 = vpack.c.b16 %v1738, %v1734
    %v1971 = vpack.c.b16 %v1743, %v1739
    %v1972 = vpack.c.b16 %v1744, %v1740
    %v1973 = vpack.c.b16 %v1745, %v1741
    %v1974 = vpack.c.b16 %v1746, %v1742
    %v1975 = vpack.c.b16 %v1751, %v1747
    %v1976 = vpack.c.b16 %v1752, %v1748
    %v1977 = vpack.c.b16 %v1753, %v1749
    %v1978 = vpack.c.b16 %v1754, %v1750
    %v1979 = vpack.c.b16 %v1759, %v1755
    %v1980 = vpack.c.b16 %v1760, %v1756
    %v1981 = vpack.c.b16 %v1761, %v1757
    %v1982 = vpack.c.b16 %v1762, %v1758
    %v1983 = vpack.c.b16 %v1767, %v1763
    %v1984 = vpack.c.b16 %v1768, %v1764
    %v1985 = vpack.c.b16 %v1769, %v1765
    %v1986 = vpack.c.b16 %v1770, %v1766
    %v1987 = vpack.c.b16 %v1775, %v1771
    %v1988 = vpack.c.b16 %v1776, %v1772
    %v1989 = vpack.c.b16 %v1777, %v1773
    %v1990 = vpack.c.b16 %v1778, %v1774
    %v1991 = vpack.c.b16 %v1783, %v1779
    %v1992 = vpack.c.b16 %v1784, %v1780
    %v1993 = vpack.c.b16 %v1785, %v1781
    %v1994 = vpack.c.b16 %v1786, %v1782
    %v1995 = vpack.c.b16 %v1791, %v1787
    %v1996 = vpack.c.b16 %v1792, %v1788
    %v1997 = vpack.c.b16 %v1793, %v1789
    %v1998 = vpack.c.b16 %v1794, %v1790
    %v1999 = vpack.c.b16 %v1799, %v1795
    %v2000 = vpack.c.b16 %v1800, %v1796
    %v2001 = vpack.c.b16 %v1801, %v1797
    %v2002 = vpack.c.b16 %v1802, %v1798
    %v2003 = vpack.c.b16 %v1807, %v1803
    %v2004 = vpack.c.b16 %v1808, %v1804
    %v2005 = vpack.c.b16 %v1809, %v1805
    %v2006 = vpack.c.b16 %v1810, %v1806
    %v2007 = vpack.c.b16 %v1815, %v1811
    %v2008 = vpack.c.b16 %v1816, %v1812
    %v2009 = vpack.c.b16 %v1817, %v1813
    %v2010 = vpack.c.b16 %v1818, %v1814
    %v2011 = vpack.c.b16 %v1823, %v1819
    %v2012 = vpack.c.b16 %v1824, %v1820
    %v2013 = vpack.c.b16 %v1825, %v1821
    %v2014 = vpack.c.b16 %v1826, %v1822
    %v2015 = vpack.c.b16 %v1831, %v1827
    %v2016 = vpack.c.b16 %v1832, %v1828
    %v2017 = vpack.c.b16 %v1833, %v1829
    %v2018 = vpack.c.b16 %v1834, %v1830
    %v2019 = vpack.c.b16 %v1839, %v1835
    %v2020 = vpack.c.b16 %v1840, %v1836
    %v2021 = vpack.c.b16 %v1841, %v1837
    %v2022 = vpack.c.b16 %v1842, %v1838
    %v2023 = vpack.c.b16 %v1847, %v1843
    %v2024 = vpack.c.b16 %v1848, %v1844
    %v2025 = vpack.c.b16 %v1849, %v1845
    %v2026 = vpack.c.b16 %v1850, %v1846
    %v2027 = vpack.c.b16 %v1855, %v1851
    %v2028 = vpack.c.b16 %v1856, %v1852
    %v2029 = vpack.c.b16 %v1857, %v1853
    %v2030 = vpack.c.b16 %v1858, %v1854
    %v2031 = vpack.c.b16 %v1863, %v1859
    %v2032 = vpack.c.b16 %v1864, %v1860
    %v2033 = vpack.c.b16 %v1865, %v1861
    %v2034 = vpack.c.b16 %v1866, %v1862
    %v2035 = vpack.c.b16 %v1871, %v1867
    %v2036 = vpack.c.b16 %v1872, %v1868
    %v2037 = vpack.c.b16 %v1873, %v1869
    %v2038 = vpack.c.b16 %v1874, %v1870
    %v2039 = vpack.c.b16 %v1879, %v1875
    %v2040 = vpack.c.b16 %v1880, %v1876
    %v2041 = vpack.c.b16 %v1881, %v1877
    %v2042 = vpack.c.b16 %v1882, %v1878
    %v2043 = vpack.c.b16 %v1887, %v1883
    %v2044 = vpack.c.b16 %v1888, %v1884
    %v2045 = vpack.c.b16 %v1889, %v1885
    %v2046 = vpack.c.b16 %v1890, %v1886
    %v2047 = vpack.c.b16 %v1895, %v1891
    %v2048 = vpack.c.b16 %v1896, %v1892
    %v2049 = vpack.c.b16 %v1897, %v1893
    %v2050 = vpack.c.b16 %v1898, %v1894
    %v2051 = vpack.c.b16 %v1903, %v1899
    %v2052 = vpack.c.b16 %v1904, %v1900
    %v2053 = vpack.c.b16 %v1905, %v1901
    %v2054 = vpack.c.b16 %v1906, %v1902
    %v2055 = vpack.c.b16 %v1911, %v1907
    %v2056 = vpack.c.b16 %v1912, %v1908
    %v2057 = vpack.c.b16 %v1913, %v1909
    %v2058 = vpack.c.b16 %v1914, %v1910
    %v2059 = vpack.c.b16 %v1919, %v1915
    %v2060 = vpack.c.b16 %v1920, %v1916
    %v2061 = vpack.c.b16 %v1921, %v1917
    %v2062 = vpack.c.b16 %v1922, %v1918
    %v2063 = vpack.c.b16 %v1927, %v1923
    %v2064 = vpack.c.b16 %v1928, %v1924
    %v2065 = vpack.c.b16 %v1929, %v1925
    %v2066 = vpack.c.b16 %v1930, %v1926
    %v2067 = vpack.c.b16 %v1935, %v1931
    %v2068 = vpack.c.b16 %v1936, %v1932
    %v2069 = vpack.c.b16 %v1937, %v1933
    %v2070 = vpack.c.b16 %v1938, %v1934
    %v2071 = vpack.c.b16 %v1943, %v1939
    %v2072 = vpack.c.b16 %v1944, %v1940
    %v2073 = vpack.c.b16 %v1945, %v1941
    %v2074 = vpack.c.b16 %v1946, %v1942
    %2203 = vmatpush.bf16.msra.mxu0 %v1975
    %2204 = vmatpush.bf16.msra.mxu0 %v1971
    %2205 = vmatpush.bf16.msra.mxu0 %v1967
    %2206 = vmatpush.bf16.msra.mxu0 %v1963
    %2207 = vmatpush.bf16.msra.mxu0 %v1959
    %2208 = vmatpush.bf16.msra.mxu0 %v1955
    %2209 = vmatpush.bf16.msra.mxu0 %v1951
    %2210 = vmatpush.bf16.msra.mxu0 %v1947
    %2211 = vmatmul.bf16.gmra.mxu0 %v1393
    %v2212 = vpop.f32.mrf.mxu0
    %v2213 = vadd.f32 %v1555, %v2212
    %v2214 = vpop.f32.mrf.mxu0
    %v2215 = vadd.f32 %v1555, %v2214
    %2216 = vmatmul.bf16.gmra.mxu0 %v1397
    %v2217 = vpop.f32.mrf.mxu0
    %v2218 = vadd.f32 %v1555, %v2217
    %v2219 = vpop.f32.mrf.mxu0
    %v2220 = vadd.f32 %v1555, %v2219
    %2221 = vmatmul.bf16.gmra.mxu0 %v1401
    %v2222 = vpop.f32.mrf.mxu0
    %v2223 = vadd.f32 %v1555, %v2222
    %v2224 = vpop.f32.mrf.mxu0
    %v2225 = vadd.f32 %v1555, %v2224
    %2226 = vmatmul.bf16.gmra.mxu0 %v1405
    %v2227 = vpop.f32.mrf.mxu0
    %v2228 = vadd.f32 %v1555, %v2227
    %v2229 = vpop.f32.mrf.mxu0
    %v2230 = vadd.f32 %v1555, %v2229
    %2231 = vmatmul.bf16.gmra.mxu0 %v1409
    %v2232 = vpop.f32.mrf.mxu0
    %v2233 = vadd.f32 %v1555, %v2232
    %v2234 = vpop.f32.mrf.mxu0
    %v2235 = vadd.f32 %v1555, %v2234
    %2236 = vmatmul.bf16.gmra.mxu0 %v1413
    %v2237 = vpop.f32.mrf.mxu0
    %v2238 = vadd.f32 %v1555, %v2237
    %v2239 = vpop.f32.mrf.mxu0
    %v2240 = vadd.f32 %v1555, %v2239
    %2241 = vmatmul.bf16.gmra.mxu0 %v1417
    %v2242 = vpop.f32.mrf.mxu0
    %v2243 = vadd.f32 %v1555, %v2242
    %v2244 = vpop.f32.mrf.mxu0
    %v2245 = vadd.f32 %v1555, %v2244
    %2246 = vmatmul.bf16.gmra.mxu0 %v1421
    %v2247 = vpop.f32.mrf.mxu0
    %v2248 = vadd.f32 %v1555, %v2247
    %v2249 = vpop.f32.mrf.mxu0
    %v2250 = vadd.f32 %v1555, %v2249
    %2251 = vdwg.mxu0
    %2252 = vmatpush.bf16.msra.mxu0 %v2007
    %2253 = vmatpush.bf16.msra.mxu0 %v2003
    %2254 = vmatpush.bf16.msra.mxu0 %v1999
    %2255 = vmatpush.bf16.msra.mxu0 %v1995
    %2256 = vmatpush.bf16.msra.mxu0 %v1991
    %2257 = vmatpush.bf16.msra.mxu0 %v1987
    %2258 = vmatpush.bf16.msra.mxu0 %v1983
    %2259 = vmatpush.bf16.msra.mxu0 %v1979
    %2260 = vmatmul.bf16.gmra.mxu0 %v1394
    %v2261 = vpop.f32.mrf.mxu0
    %v2262 = vadd.f32 %v2213, %v2261
    %v2263 = vpop.f32.mrf.mxu0
    %v2264 = vadd.f32 %v2215, %v2263
    %2265 = vmatmul.bf16.gmra.mxu0 %v1398
    %v2266 = vpop.f32.mrf.mxu0
    %v2267 = vadd.f32 %v2218, %v2266
    %v2268 = vpop.f32.mrf.mxu0
    %v2269 = vadd.f32 %v2220, %v2268
    %2270 = vmatmul.bf16.gmra.mxu0 %v1402
    %v2271 = vpop.f32.mrf.mxu0
    %v2272 = vadd.f32 %v2223, %v2271
    %v2273 = vpop.f32.mrf.mxu0
    %v2274 = vadd.f32 %v2225, %v2273
    %2275 = vmatmul.bf16.gmra.mxu0 %v1406
    %v2276 = vpop.f32.mrf.mxu0
    %v2277 = vadd.f32 %v2228, %v2276
    %v2278 = vpop.f32.mrf.mxu0
    %v2279 = vadd.f32 %v2230, %v2278
    %2280 = vmatmul.bf16.gmra.mxu0 %v1410
    %v2281 = vpop.f32.mrf.mxu0
    %v2282 = vadd.f32 %v2233, %v2281
    %v2283 = vpop.f32.mrf.mxu0
    %v2284 = vadd.f32 %v2235, %v2283
    %2285 = vmatmul.bf16.gmra.mxu0 %v1414
    %v2286 = vpop.f32.mrf.mxu0
    %v2287 = vadd.f32 %v2238, %v2286
    %v2288 = vpop.f32.mrf.mxu0
    %v2289 = vadd.f32 %v2240, %v2288
    %2290 = vmatmul.bf16.gmra.mxu0 %v1418
    %v2291 = vpop.f32.mrf.mxu0
    %v2292 = vadd.f32 %v2243, %v2291
    %v2293 = vpop.f32.mrf.mxu0
    %v2294 = vadd.f32 %v2245, %v2293
    %2295 = vmatmul.bf16.gmra.mxu0 %v1422
    %v2296 = vpop.f32.mrf.mxu0
    %v2297 = vadd.f32 %v2248, %v2296
    %v2298 = vpop.f32.mrf.mxu0
    %v2299 = vadd.f32 %v2250, %v2298
    %2300 = vdwg.mxu0
    %2301 = vmatpush.bf16.msra.mxu0 %v2039
    %2302 = vmatpush.bf16.msra.mxu0 %v2035
    %2303 = vmatpush.bf16.msra.mxu0 %v2031
    %2304 = vmatpush.bf16.msra.mxu0 %v2027
    %2305 = vmatpush.bf16.msra.mxu0 %v2023
    %2306 = vmatpush.bf16.msra.mxu0 %v2019
    %2307 = vmatpush.bf16.msra.mxu0 %v2015
    %2308 = vmatpush.bf16.msra.mxu0 %v2011
    %2309 = vmatmul.bf16.gmra.mxu0 %v1395
    %v2310 = vpop.f32.mrf.mxu0
    %v2311 = vadd.f32 %v2262, %v2310
    %v2312 = vpop.f32.mrf.mxu0
    %v2313 = vadd.f32 %v2264, %v2312
    %2314 = vmatmul.bf16.gmra.mxu0 %v1399
    %v2315 = vpop.f32.mrf.mxu0
    %v2316 = vadd.f32 %v2267, %v2315
    %v2317 = vpop.f32.mrf.mxu0
    %v2318 = vadd.f32 %v2269, %v2317
    %2319 = vmatmul.bf16.gmra.mxu0 %v1403
    %v2320 = vpop.f32.mrf.mxu0
    %v2321 = vadd.f32 %v2272, %v2320
    %v2322 = vpop.f32.mrf.mxu0
    %v2323 = vadd.f32 %v2274, %v2322
    %2324 = vmatmul.bf16.gmra.mxu0 %v1407
    %v2325 = vpop.f32.mrf.mxu0
    %v2326 = vadd.f32 %v2277, %v2325
    %v2327 = vpop.f32.mrf.mxu0
    %v2328 = vadd.f32 %v2279, %v2327
    %2329 = vmatmul.bf16.gmra.mxu0 %v1411
    %v2330 = vpop.f32.mrf.mxu0
    %v2331 = vadd.f32 %v2282, %v2330
    %v2332 = vpop.f32.mrf.mxu0
    %v2333 = vadd.f32 %v2284, %v2332
    %2334 = vmatmul.bf16.gmra.mxu0 %v1415
    %v2335 = vpop.f32.mrf.mxu0
    %v2336 = vadd.f32 %v2287, %v2335
    %v2337 = vpop.f32.mrf.mxu0
    %v2338 = vadd.f32 %v2289, %v2337
    %2339 = vmatmul.bf16.gmra.mxu0 %v1419
    %v2340 = vpop.f32.mrf.mxu0
    %v2341 = vadd.f32 %v2292, %v2340
    %v2342 = vpop.f32.mrf.mxu0
    %v2343 = vadd.f32 %v2294, %v2342
    %2344 = vmatmul.bf16.gmra.mxu0 %v1423
    %v2345 = vpop.f32.mrf.mxu0
    %v2346 = vadd.f32 %v2297, %v2345
    %v2347 = vpop.f32.mrf.mxu0
    %v2348 = vadd.f32 %v2299, %v2347
    %2349 = vdwg.mxu0
    %2350 = vmatpush.bf16.msra.mxu0 %v2071
    %2351 = vmatpush.bf16.msra.mxu0 %v2067
    %2352 = vmatpush.bf16.msra.mxu0 %v2063
    %2353 = vmatpush.bf16.msra.mxu0 %v2059
    %2354 = vmatpush.bf16.msra.mxu0 %v2055
    %2355 = vmatpush.bf16.msra.mxu0 %v2051
    %2356 = vmatpush.bf16.msra.mxu0 %v2047
    %2357 = vmatpush.bf16.msra.mxu0 %v2043
    %2358 = vmatmul.bf16.gmra.mxu0 %v1396
    %v2359 = vpop.f32.mrf.mxu0
    %v2360 = vadd.f32 %v2311, %v2359
    %v2361 = vpop.f32.mrf.mxu0
    %v2362 = vadd.f32 %v2313, %v2361
    %2363 = vmatmul.bf16.gmra.mxu0 %v1400
    %v2364 = vpop.f32.mrf.mxu0
    %v2365 = vadd.f32 %v2316, %v2364
    %v2366 = vpop.f32.mrf.mxu0
    %v2367 = vadd.f32 %v2318, %v2366
    %2368 = vmatmul.bf16.gmra.mxu0 %v1404
    %v2369 = vpop.f32.mrf.mxu0
    %v2370 = vadd.f32 %v2321, %v2369
    %v2371 = vpop.f32.mrf.mxu0
    %v2372 = vadd.f32 %v2323, %v2371
    %2373 = vmatmul.bf16.gmra.mxu0 %v1408
    %v2374 = vpop.f32.mrf.mxu0
    %v2375 = vadd.f32 %v2326, %v2374
    %v2376 = vpop.f32.mrf.mxu0
    %v2377 = vadd.f32 %v2328, %v2376
    %2378 = vmatmul.bf16.gmra.mxu0 %v1412
    %v2379 = vpop.f32.mrf.mxu0
    %v2380 = vadd.f32 %v2331, %v2379
    %v2381 = vpop.f32.mrf.mxu0
    %v2382 = vadd.f32 %v2333, %v2381
    %2383 = vmatmul.bf16.gmra.mxu0 %v1416
    %v2384 = vpop.f32.mrf.mxu0
    %v2385 = vadd.f32 %v2336, %v2384
    %v2386 = vpop.f32.mrf.mxu0
    %v2387 = vadd.f32 %v2338, %v2386
    %2388 = vmatmul.bf16.gmra.mxu0 %v1420
    %v2389 = vpop.f32.mrf.mxu0
    %v2390 = vadd.f32 %v2341, %v2389
    %v2391 = vpop.f32.mrf.mxu0
    %v2392 = vadd.f32 %v2343, %v2391
    %2393 = vmatmul.bf16.gmra.mxu0 %v1424
    %v2394 = vpop.f32.mrf.mxu0
    %v2395 = vadd.f32 %v2346, %v2394
    %v2396 = vpop.f32.mrf.mxu0
    %v2397 = vadd.f32 %v2348, %v2396
    %2398 = vdwg.mxu0
    %2399 = vmatpush.bf16.msra.mxu0 %v1976
    %2400 = vmatpush.bf16.msra.mxu0 %v1972
    %2401 = vmatpush.bf16.msra.mxu0 %v1968
    %2402 = vmatpush.bf16.msra.mxu0 %v1964
    %2403 = vmatpush.bf16.msra.mxu0 %v1960
    %2404 = vmatpush.bf16.msra.mxu0 %v1956
    %2405 = vmatpush.bf16.msra.mxu0 %v1952
    %2406 = vmatpush.bf16.msra.mxu0 %v1948
    %2407 = vmatmul.bf16.gmra.mxu0 %v1393
    %v2408 = vpop.f32.mrf.mxu0
    %v2409 = vadd.f32 %v1556, %v2408
    %v2410 = vpop.f32.mrf.mxu0
    %v2411 = vadd.f32 %v1556, %v2410
    %2412 = vmatmul.bf16.gmra.mxu0 %v1397
    %v2413 = vpop.f32.mrf.mxu0
    %v2414 = vadd.f32 %v1556, %v2413
    %v2415 = vpop.f32.mrf.mxu0
    %v2416 = vadd.f32 %v1556, %v2415
    %2417 = vmatmul.bf16.gmra.mxu0 %v1401
    %v2418 = vpop.f32.mrf.mxu0
    %v2419 = vadd.f32 %v1556, %v2418
    %v2420 = vpop.f32.mrf.mxu0
    %v2421 = vadd.f32 %v1556, %v2420
    %2422 = vmatmul.bf16.gmra.mxu0 %v1405
    %v2423 = vpop.f32.mrf.mxu0
    %v2424 = vadd.f32 %v1556, %v2423
    %v2425 = vpop.f32.mrf.mxu0
    %v2426 = vadd.f32 %v1556, %v2425
    %2427 = vmatmul.bf16.gmra.mxu0 %v1409
    %v2428 = vpop.f32.mrf.mxu0
    %v2429 = vadd.f32 %v1556, %v2428
    %v2430 = vpop.f32.mrf.mxu0
    %v2431 = vadd.f32 %v1556, %v2430
    %2432 = vmatmul.bf16.gmra.mxu0 %v1413
    %v2433 = vpop.f32.mrf.mxu0
    %v2434 = vadd.f32 %v1556, %v2433
    %v2435 = vpop.f32.mrf.mxu0
    %v2436 = vadd.f32 %v1556, %v2435
    %2437 = vmatmul.bf16.gmra.mxu0 %v1417
    %v2438 = vpop.f32.mrf.mxu0
    %v2439 = vadd.f32 %v1556, %v2438
    %v2440 = vpop.f32.mrf.mxu0
    %v2441 = vadd.f32 %v1556, %v2440
    %2442 = vmatmul.bf16.gmra.mxu0 %v1421
    %v2443 = vpop.f32.mrf.mxu0
    %v2444 = vadd.f32 %v1556, %v2443
    %v2445 = vpop.f32.mrf.mxu0
    %v2446 = vadd.f32 %v1556, %v2445
    %2447 = vdwg.mxu0
    %2448 = vmatpush.bf16.msra.mxu0 %v2008
    %2449 = vmatpush.bf16.msra.mxu0 %v2004
    %2450 = vmatpush.bf16.msra.mxu0 %v2000
    %2451 = vmatpush.bf16.msra.mxu0 %v1996
    %2452 = vmatpush.bf16.msra.mxu0 %v1992
    %2453 = vmatpush.bf16.msra.mxu0 %v1988
    %2454 = vmatpush.bf16.msra.mxu0 %v1984
    %2455 = vmatpush.bf16.msra.mxu0 %v1980
    %2456 = vmatmul.bf16.gmra.mxu0 %v1394
    %v2457 = vpop.f32.mrf.mxu0
    %v2458 = vadd.f32 %v2409, %v2457
    %v2459 = vpop.f32.mrf.mxu0
    %v2460 = vadd.f32 %v2411, %v2459
    %2461 = vmatmul.bf16.gmra.mxu0 %v1398
    %v2462 = vpop.f32.mrf.mxu0
    %v2463 = vadd.f32 %v2414, %v2462
    %v2464 = vpop.f32.mrf.mxu0
    %v2465 = vadd.f32 %v2416, %v2464
    %2466 = vmatmul.bf16.gmra.mxu0 %v1402
    %v2467 = vpop.f32.mrf.mxu0
    %v2468 = vadd.f32 %v2419, %v2467
    %v2469 = vpop.f32.mrf.mxu0
    %v2470 = vadd.f32 %v2421, %v2469
    %2471 = vmatmul.bf16.gmra.mxu0 %v1406
    %v2472 = vpop.f32.mrf.mxu0
    %v2473 = vadd.f32 %v2424, %v2472
    %v2474 = vpop.f32.mrf.mxu0
    %v2475 = vadd.f32 %v2426, %v2474
    %2476 = vmatmul.bf16.gmra.mxu0 %v1410
    %v2477 = vpop.f32.mrf.mxu0
    %v2478 = vadd.f32 %v2429, %v2477
    %v2479 = vpop.f32.mrf.mxu0
    %v2480 = vadd.f32 %v2431, %v2479
    %2481 = vmatmul.bf16.gmra.mxu0 %v1414
    %v2482 = vpop.f32.mrf.mxu0
    %v2483 = vadd.f32 %v2434, %v2482
    %v2484 = vpop.f32.mrf.mxu0
    %v2485 = vadd.f32 %v2436, %v2484
    %2486 = vmatmul.bf16.gmra.mxu0 %v1418
    %v2487 = vpop.f32.mrf.mxu0
    %v2488 = vadd.f32 %v2439, %v2487
    %v2489 = vpop.f32.mrf.mxu0
    %v2490 = vadd.f32 %v2441, %v2489
    %2491 = vmatmul.bf16.gmra.mxu0 %v1422
    %v2492 = vpop.f32.mrf.mxu0
    %v2493 = vadd.f32 %v2444, %v2492
    %v2494 = vpop.f32.mrf.mxu0
    %v2495 = vadd.f32 %v2446, %v2494
    %2496 = vdwg.mxu0
    %2497 = vmatpush.bf16.msra.mxu0 %v2040
    %2498 = vmatpush.bf16.msra.mxu0 %v2036
    %2499 = vmatpush.bf16.msra.mxu0 %v2032
    %2500 = vmatpush.bf16.msra.mxu0 %v2028
    %2501 = vmatpush.bf16.msra.mxu0 %v2024
    %2502 = vmatpush.bf16.msra.mxu0 %v2020
    %2503 = vmatpush.bf16.msra.mxu0 %v2016
    %2504 = vmatpush.bf16.msra.mxu0 %v2012
    %2505 = vmatmul.bf16.gmra.mxu0 %v1395
    %v2506 = vpop.f32.mrf.mxu0
    %v2507 = vadd.f32 %v2458, %v2506
    %v2508 = vpop.f32.mrf.mxu0
    %v2509 = vadd.f32 %v2460, %v2508
    %2510 = vmatmul.bf16.gmra.mxu0 %v1399
    %v2511 = vpop.f32.mrf.mxu0
    %v2512 = vadd.f32 %v2463, %v2511
    %v2513 = vpop.f32.mrf.mxu0
    %v2514 = vadd.f32 %v2465, %v2513
    %2515 = vmatmul.bf16.gmra.mxu0 %v1403
    %v2516 = vpop.f32.mrf.mxu0
    %v2517 = vadd.f32 %v2468, %v2516
    %v2518 = vpop.f32.mrf.mxu0
    %v2519 = vadd.f32 %v2470, %v2518
    %2520 = vmatmul.bf16.gmra.mxu0 %v1407
    %v2521 = vpop.f32.mrf.mxu0
    %v2522 = vadd.f32 %v2473, %v2521
    %v2523 = vpop.f32.mrf.mxu0
    %v2524 = vadd.f32 %v2475, %v2523
    %2525 = vmatmul.bf16.gmra.mxu0 %v1411
    %v2526 = vpop.f32.mrf.mxu0
    %v2527 = vadd.f32 %v2478, %v2526
    %v2528 = vpop.f32.mrf.mxu0
    %v2529 = vadd.f32 %v2480, %v2528
    %2530 = vmatmul.bf16.gmra.mxu0 %v1415
    %v2531 = vpop.f32.mrf.mxu0
    %v2532 = vadd.f32 %v2483, %v2531
    %v2533 = vpop.f32.mrf.mxu0
    %v2534 = vadd.f32 %v2485, %v2533
    %2535 = vmatmul.bf16.gmra.mxu0 %v1419
    %v2536 = vpop.f32.mrf.mxu0
    %v2537 = vadd.f32 %v2488, %v2536
    %v2538 = vpop.f32.mrf.mxu0
    %v2539 = vadd.f32 %v2490, %v2538
    %2540 = vmatmul.bf16.gmra.mxu0 %v1423
    %v2541 = vpop.f32.mrf.mxu0
    %v2542 = vadd.f32 %v2493, %v2541
    %v2543 = vpop.f32.mrf.mxu0
    %v2544 = vadd.f32 %v2495, %v2543
    %2545 = vdwg.mxu0
    %2546 = vmatpush.bf16.msra.mxu0 %v2072
    %2547 = vmatpush.bf16.msra.mxu0 %v2068
    %2548 = vmatpush.bf16.msra.mxu0 %v2064
    %2549 = vmatpush.bf16.msra.mxu0 %v2060
    %2550 = vmatpush.bf16.msra.mxu0 %v2056
    %2551 = vmatpush.bf16.msra.mxu0 %v2052
    %2552 = vmatpush.bf16.msra.mxu0 %v2048
    %2553 = vmatpush.bf16.msra.mxu0 %v2044
    %2554 = vmatmul.bf16.gmra.mxu0 %v1396
    %v2555 = vpop.f32.mrf.mxu0
    %v2556 = vadd.f32 %v2507, %v2555
    %v2557 = vpop.f32.mrf.mxu0
    %v2558 = vadd.f32 %v2509, %v2557
    %2559 = vmatmul.bf16.gmra.mxu0 %v1400
    %v2560 = vpop.f32.mrf.mxu0
    %v2561 = vadd.f32 %v2512, %v2560
    %v2562 = vpop.f32.mrf.mxu0
    %v2563 = vadd.f32 %v2514, %v2562
    %2564 = vmatmul.bf16.gmra.mxu0 %v1404
    %v2565 = vpop.f32.mrf.mxu0
    %v2566 = vadd.f32 %v2517, %v2565
    %v2567 = vpop.f32.mrf.mxu0
    %v2568 = vadd.f32 %v2519, %v2567
    %2569 = vmatmul.bf16.gmra.mxu0 %v1408
    %v2570 = vpop.f32.mrf.mxu0
    %v2571 = vadd.f32 %v2522, %v2570
    %v2572 = vpop.f32.mrf.mxu0
    %v2573 = vadd.f32 %v2524, %v2572
    %2574 = vmatmul.bf16.gmra.mxu0 %v1412
    %v2575 = vpop.f32.mrf.mxu0
    %v2576 = vadd.f32 %v2527, %v2575
    %v2577 = vpop.f32.mrf.mxu0
    %v2578 = vadd.f32 %v2529, %v2577
    %2579 = vmatmul.bf16.gmra.mxu0 %v1416
    %v2580 = vpop.f32.mrf.mxu0
    %v2581 = vadd.f32 %v2532, %v2580
    %v2582 = vpop.f32.mrf.mxu0
    %v2583 = vadd.f32 %v2534, %v2582
    %2584 = vmatmul.bf16.gmra.mxu0 %v1420
    %v2585 = vpop.f32.mrf.mxu0
    %v2586 = vadd.f32 %v2537, %v2585
    %v2587 = vpop.f32.mrf.mxu0
    %v2588 = vadd.f32 %v2539, %v2587
    %2589 = vmatmul.bf16.gmra.mxu0 %v1424
    %v2590 = vpop.f32.mrf.mxu0
    %v2591 = vadd.f32 %v2542, %v2590
    %v2592 = vpop.f32.mrf.mxu0
    %v2593 = vadd.f32 %v2544, %v2592
    %2594 = vdwg.mxu0
    %2595 = vmatpush.bf16.msra.mxu0 %v1977
    %2596 = vmatpush.bf16.msra.mxu0 %v1973
    %2597 = vmatpush.bf16.msra.mxu0 %v1969
    %2598 = vmatpush.bf16.msra.mxu0 %v1965
    %2599 = vmatpush.bf16.msra.mxu0 %v1961
    %2600 = vmatpush.bf16.msra.mxu0 %v1957
    %2601 = vmatpush.bf16.msra.mxu0 %v1953
    %2602 = vmatpush.bf16.msra.mxu0 %v1949
    %2603 = vmatmul.bf16.gmra.mxu0 %v1393
    %v2604 = vpop.f32.mrf.mxu0
    %v2605 = vadd.f32 %v1557, %v2604
    %v2606 = vpop.f32.mrf.mxu0
    %v2607 = vadd.f32 %v1557, %v2606
    %2608 = vmatmul.bf16.gmra.mxu0 %v1397
    %v2609 = vpop.f32.mrf.mxu0
    %v2610 = vadd.f32 %v1557, %v2609
    %v2611 = vpop.f32.mrf.mxu0
    %v2612 = vadd.f32 %v1557, %v2611
    %2613 = vmatmul.bf16.gmra.mxu0 %v1401
    %v2614 = vpop.f32.mrf.mxu0
    %v2615 = vadd.f32 %v1557, %v2614
    %v2616 = vpop.f32.mrf.mxu0
    %v2617 = vadd.f32 %v1557, %v2616
    %2618 = vmatmul.bf16.gmra.mxu0 %v1405
    %v2619 = vpop.f32.mrf.mxu0
    %v2620 = vadd.f32 %v1557, %v2619
    %v2621 = vpop.f32.mrf.mxu0
    %v2622 = vadd.f32 %v1557, %v2621
    %2623 = vmatmul.bf16.gmra.mxu0 %v1409
    %v2624 = vpop.f32.mrf.mxu0
    %v2625 = vadd.f32 %v1557, %v2624
    %v2626 = vpop.f32.mrf.mxu0
    %v2627 = vadd.f32 %v1557, %v2626
    %2628 = vmatmul.bf16.gmra.mxu0 %v1413
    %v2629 = vpop.f32.mrf.mxu0
    %v2630 = vadd.f32 %v1557, %v2629
    %v2631 = vpop.f32.mrf.mxu0
    %v2632 = vadd.f32 %v1557, %v2631
    %2633 = vmatmul.bf16.gmra.mxu0 %v1417
    %v2634 = vpop.f32.mrf.mxu0
    %v2635 = vadd.f32 %v1557, %v2634
    %v2636 = vpop.f32.mrf.mxu0
    %v2637 = vadd.f32 %v1557, %v2636
    %2638 = vmatmul.bf16.gmra.mxu0 %v1421
    %v2639 = vpop.f32.mrf.mxu0
    %v2640 = vadd.f32 %v1557, %v2639
    %v2641 = vpop.f32.mrf.mxu0
    %v2642 = vadd.f32 %v1557, %v2641
    %2643 = vdwg.mxu0
    %2644 = vmatpush.bf16.msra.mxu0 %v2009
    %2645 = vmatpush.bf16.msra.mxu0 %v2005
    %2646 = vmatpush.bf16.msra.mxu0 %v2001
    %2647 = vmatpush.bf16.msra.mxu0 %v1997
    %2648 = vmatpush.bf16.msra.mxu0 %v1993
    %2649 = vmatpush.bf16.msra.mxu0 %v1989
    %2650 = vmatpush.bf16.msra.mxu0 %v1985
    %2651 = vmatpush.bf16.msra.mxu0 %v1981
    %2652 = vmatmul.bf16.gmra.mxu0 %v1394
    %v2653 = vpop.f32.mrf.mxu0
    %v2654 = vadd.f32 %v2605, %v2653
    %v2655 = vpop.f32.mrf.mxu0
    %v2656 = vadd.f32 %v2607, %v2655
    %2657 = vmatmul.bf16.gmra.mxu0 %v1398
    %v2658 = vpop.f32.mrf.mxu0
    %v2659 = vadd.f32 %v2610, %v2658
    %v2660 = vpop.f32.mrf.mxu0
    %v2661 = vadd.f32 %v2612, %v2660
    %2662 = vmatmul.bf16.gmra.mxu0 %v1402
    %v2663 = vpop.f32.mrf.mxu0
    %v2664 = vadd.f32 %v2615, %v2663
    %v2665 = vpop.f32.mrf.mxu0
    %v2666 = vadd.f32 %v2617, %v2665
    %2667 = vmatmul.bf16.gmra.mxu0 %v1406
    %v2668 = vpop.f32.mrf.mxu0
    %v2669 = vadd.f32 %v2620, %v2668
    %v2670 = vpop.f32.mrf.mxu0
    %v2671 = vadd.f32 %v2622, %v2670
    %2672 = vmatmul.bf16.gmra.mxu0 %v1410
    %v2673 = vpop.f32.mrf.mxu0
    %v2674 = vadd.f32 %v2625, %v2673
    %v2675 = vpop.f32.mrf.mxu0
    %v2676 = vadd.f32 %v2627, %v2675
    %2677 = vmatmul.bf16.gmra.mxu0 %v1414
    %v2678 = vpop.f32.mrf.mxu0
    %v2679 = vadd.f32 %v2630, %v2678
    %v2680 = vpop.f32.mrf.mxu0
    %v2681 = vadd.f32 %v2632, %v2680
    %2682 = vmatmul.bf16.gmra.mxu0 %v1418
    %v2683 = vpop.f32.mrf.mxu0
    %v2684 = vadd.f32 %v2635, %v2683
    %v2685 = vpop.f32.mrf.mxu0
    %v2686 = vadd.f32 %v2637, %v2685
    %2687 = vmatmul.bf16.gmra.mxu0 %v1422
    %v2688 = vpop.f32.mrf.mxu0
    %v2689 = vadd.f32 %v2640, %v2688
    %v2690 = vpop.f32.mrf.mxu0
    %v2691 = vadd.f32 %v2642, %v2690
    %2692 = vdwg.mxu0
    %2693 = vmatpush.bf16.msra.mxu0 %v2041
    %2694 = vmatpush.bf16.msra.mxu0 %v2037
    %2695 = vmatpush.bf16.msra.mxu0 %v2033
    %2696 = vmatpush.bf16.msra.mxu0 %v2029
    %2697 = vmatpush.bf16.msra.mxu0 %v2025
    %2698 = vmatpush.bf16.msra.mxu0 %v2021
    %2699 = vmatpush.bf16.msra.mxu0 %v2017
    %2700 = vmatpush.bf16.msra.mxu0 %v2013
    %2701 = vmatmul.bf16.gmra.mxu0 %v1395
    %v2702 = vpop.f32.mrf.mxu0
    %v2703 = vadd.f32 %v2654, %v2702
    %v2704 = vpop.f32.mrf.mxu0
    %v2705 = vadd.f32 %v2656, %v2704
    %2706 = vmatmul.bf16.gmra.mxu0 %v1399
    %v2707 = vpop.f32.mrf.mxu0
    %v2708 = vadd.f32 %v2659, %v2707
    %v2709 = vpop.f32.mrf.mxu0
    %v2710 = vadd.f32 %v2661, %v2709
    %2711 = vmatmul.bf16.gmra.mxu0 %v1403
    %v2712 = vpop.f32.mrf.mxu0
    %v2713 = vadd.f32 %v2664, %v2712
    %v2714 = vpop.f32.mrf.mxu0
    %v2715 = vadd.f32 %v2666, %v2714
    %2716 = vmatmul.bf16.gmra.mxu0 %v1407
    %v2717 = vpop.f32.mrf.mxu0
    %v2718 = vadd.f32 %v2669, %v2717
    %v2719 = vpop.f32.mrf.mxu0
    %v2720 = vadd.f32 %v2671, %v2719
    %2721 = vmatmul.bf16.gmra.mxu0 %v1411
    %v2722 = vpop.f32.mrf.mxu0
    %v2723 = vadd.f32 %v2674, %v2722
    %v2724 = vpop.f32.mrf.mxu0
    %v2725 = vadd.f32 %v2676, %v2724
    %2726 = vmatmul.bf16.gmra.mxu0 %v1415
    %v2727 = vpop.f32.mrf.mxu0
    %v2728 = vadd.f32 %v2679, %v2727
    %v2729 = vpop.f32.mrf.mxu0
    %v2730 = vadd.f32 %v2681, %v2729
    %2731 = vmatmul.bf16.gmra.mxu0 %v1419
    %v2732 = vpop.f32.mrf.mxu0
    %v2733 = vadd.f32 %v2684, %v2732
    %v2734 = vpop.f32.mrf.mxu0
    %v2735 = vadd.f32 %v2686, %v2734
    %2736 = vmatmul.bf16.gmra.mxu0 %v1423
    %v2737 = vpop.f32.mrf.mxu0
    %v2738 = vadd.f32 %v2689, %v2737
    %v2739 = vpop.f32.mrf.mxu0
    %v2740 = vadd.f32 %v2691, %v2739
    %2741 = vdwg.mxu0
    %2742 = vmatpush.bf16.msra.mxu0 %v2073
    %2743 = vmatpush.bf16.msra.mxu0 %v2069
    %2744 = vmatpush.bf16.msra.mxu0 %v2065
    %2745 = vmatpush.bf16.msra.mxu0 %v2061
    %2746 = vmatpush.bf16.msra.mxu0 %v2057
    %2747 = vmatpush.bf16.msra.mxu0 %v2053
    %2748 = vmatpush.bf16.msra.mxu0 %v2049
    %2749 = vmatpush.bf16.msra.mxu0 %v2045
    %2750 = vmatmul.bf16.gmra.mxu0 %v1396
    %v2751 = vpop.f32.mrf.mxu0
    %v2752 = vadd.f32 %v2703, %v2751
    %v2753 = vpop.f32.mrf.mxu0
    %v2754 = vadd.f32 %v2705, %v2753
    %2755 = vmatmul.bf16.gmra.mxu0 %v1400
    %v2756 = vpop.f32.mrf.mxu0
    %v2757 = vadd.f32 %v2708, %v2756
    %v2758 = vpop.f32.mrf.mxu0
    %v2759 = vadd.f32 %v2710, %v2758
    %2760 = vmatmul.bf16.gmra.mxu0 %v1404
    %v2761 = vpop.f32.mrf.mxu0
    %v2762 = vadd.f32 %v2713, %v2761
    %v2763 = vpop.f32.mrf.mxu0
    %v2764 = vadd.f32 %v2715, %v2763
    %2765 = vmatmul.bf16.gmra.mxu0 %v1408
    %v2766 = vpop.f32.mrf.mxu0
    %v2767 = vadd.f32 %v2718, %v2766
    %v2768 = vpop.f32.mrf.mxu0
    %v2769 = vadd.f32 %v2720, %v2768
    %2770 = vmatmul.bf16.gmra.mxu0 %v1412
    %v2771 = vpop.f32.mrf.mxu0
    %v2772 = vadd.f32 %v2723, %v2771
    %v2773 = vpop.f32.mrf.mxu0
    %v2774 = vadd.f32 %v2725, %v2773
    %2775 = vmatmul.bf16.gmra.mxu0 %v1416
    %v2776 = vpop.f32.mrf.mxu0
    %v2777 = vadd.f32 %v2728, %v2776
    %v2778 = vpop.f32.mrf.mxu0
    %v2779 = vadd.f32 %v2730, %v2778
    %2780 = vmatmul.bf16.gmra.mxu0 %v1420
    %v2781 = vpop.f32.mrf.mxu0
    %v2782 = vadd.f32 %v2733, %v2781
    %v2783 = vpop.f32.mrf.mxu0
    %v2784 = vadd.f32 %v2735, %v2783
    %2785 = vmatmul.bf16.gmra.mxu0 %v1424
    %v2786 = vpop.f32.mrf.mxu0
    %v2787 = vadd.f32 %v2738, %v2786
    %v2788 = vpop.f32.mrf.mxu0
    %v2789 = vadd.f32 %v2740, %v2788
    %2790 = vdwg.mxu0
    %2791 = vmatpush.bf16.msra.mxu0 %v1978
    %2792 = vmatpush.bf16.msra.mxu0 %v1974
    %2793 = vmatpush.bf16.msra.mxu0 %v1970
    %2794 = vmatpush.bf16.msra.mxu0 %v1966
    %2795 = vmatpush.bf16.msra.mxu0 %v1962
    %2796 = vmatpush.bf16.msra.mxu0 %v1958
    %2797 = vmatpush.bf16.msra.mxu0 %v1954
    %2798 = vmatpush.bf16.msra.mxu0 %v1950
    %2799 = vmatmul.bf16.gmra.mxu0 %v1393
    %v2800 = vpop.f32.mrf.mxu0
    %v2801 = vadd.f32 %v1558, %v2800
    %v2802 = vpop.f32.mrf.mxu0
    %v2803 = vadd.f32 %v1558, %v2802
    %2804 = vmatmul.bf16.gmra.mxu0 %v1397
    %v2805 = vpop.f32.mrf.mxu0
    %v2806 = vadd.f32 %v1558, %v2805
    %v2807 = vpop.f32.mrf.mxu0
    %v2808 = vadd.f32 %v1558, %v2807
    %2809 = vmatmul.bf16.gmra.mxu0 %v1401
    %v2810 = vpop.f32.mrf.mxu0
    %v2811 = vadd.f32 %v1558, %v2810
    %v2812 = vpop.f32.mrf.mxu0
    %v2813 = vadd.f32 %v1558, %v2812
    %2814 = vmatmul.bf16.gmra.mxu0 %v1405
    %v2815 = vpop.f32.mrf.mxu0
    %v2816 = vadd.f32 %v1558, %v2815
    %v2817 = vpop.f32.mrf.mxu0
    %v2818 = vadd.f32 %v1558, %v2817
    %2819 = vmatmul.bf16.gmra.mxu0 %v1409
    %v2820 = vpop.f32.mrf.mxu0
    %v2821 = vadd.f32 %v1558, %v2820
    %v2822 = vpop.f32.mrf.mxu0
    %v2823 = vadd.f32 %v1558, %v2822
    %2824 = vmatmul.bf16.gmra.mxu0 %v1413
    %v2825 = vpop.f32.mrf.mxu0
    %v2826 = vadd.f32 %v1558, %v2825
    %v2827 = vpop.f32.mrf.mxu0
    %v2828 = vadd.f32 %v1558, %v2827
    %2829 = vmatmul.bf16.gmra.mxu0 %v1417
    %v2830 = vpop.f32.mrf.mxu0
    %v2831 = vadd.f32 %v1558, %v2830
    %v2832 = vpop.f32.mrf.mxu0
    %v2833 = vadd.f32 %v1558, %v2832
    %2834 = vmatmul.bf16.gmra.mxu0 %v1421
    %v2835 = vpop.f32.mrf.mxu0
    %v2836 = vadd.f32 %v1558, %v2835
    %v2837 = vpop.f32.mrf.mxu0
    %v2838 = vadd.f32 %v1558, %v2837
    %2839 = vdwg.mxu0
    %2840 = vmatpush.bf16.msra.mxu0 %v2010
    %2841 = vmatpush.bf16.msra.mxu0 %v2006
    %2842 = vmatpush.bf16.msra.mxu0 %v2002
    %2843 = vmatpush.bf16.msra.mxu0 %v1998
    %2844 = vmatpush.bf16.msra.mxu0 %v1994
    %2845 = vmatpush.bf16.msra.mxu0 %v1990
    %2846 = vmatpush.bf16.msra.mxu0 %v1986
    %2847 = vmatpush.bf16.msra.mxu0 %v1982
    %2848 = vmatmul.bf16.gmra.mxu0 %v1394
    %v2849 = vpop.f32.mrf.mxu0
    %v2850 = vadd.f32 %v2801, %v2849
    %v2851 = vpop.f32.mrf.mxu0
    %v2852 = vadd.f32 %v2803, %v2851
    %2853 = vmatmul.bf16.gmra.mxu0 %v1398
    %v2854 = vpop.f32.mrf.mxu0
    %v2855 = vadd.f32 %v2806, %v2854
    %v2856 = vpop.f32.mrf.mxu0
    %v2857 = vadd.f32 %v2808, %v2856
    %2858 = vmatmul.bf16.gmra.mxu0 %v1402
    %v2859 = vpop.f32.mrf.mxu0
    %v2860 = vadd.f32 %v2811, %v2859
    %v2861 = vpop.f32.mrf.mxu0
    %v2862 = vadd.f32 %v2813, %v2861
    %2863 = vmatmul.bf16.gmra.mxu0 %v1406
    %v2864 = vpop.f32.mrf.mxu0
    %v2865 = vadd.f32 %v2816, %v2864
    %v2866 = vpop.f32.mrf.mxu0
    %v2867 = vadd.f32 %v2818, %v2866
    %2868 = vmatmul.bf16.gmra.mxu0 %v1410
    %v2869 = vpop.f32.mrf.mxu0
    %v2870 = vadd.f32 %v2821, %v2869
    %v2871 = vpop.f32.mrf.mxu0
    %v2872 = vadd.f32 %v2823, %v2871
    %2873 = vmatmul.bf16.gmra.mxu0 %v1414
    %v2874 = vpop.f32.mrf.mxu0
    %v2875 = vadd.f32 %v2826, %v2874
    %v2876 = vpop.f32.mrf.mxu0
    %v2877 = vadd.f32 %v2828, %v2876
    %2878 = vmatmul.bf16.gmra.mxu0 %v1418
    %v2879 = vpop.f32.mrf.mxu0
    %v2880 = vadd.f32 %v2831, %v2879
    %v2881 = vpop.f32.mrf.mxu0
    %v2882 = vadd.f32 %v2833, %v2881
    %2883 = vmatmul.bf16.gmra.mxu0 %v1422
    %v2884 = vpop.f32.mrf.mxu0
    %v2885 = vadd.f32 %v2836, %v2884
    %v2886 = vpop.f32.mrf.mxu0
    %v2887 = vadd.f32 %v2838, %v2886
    %2888 = vdwg.mxu0
    %2889 = vmatpush.bf16.msra.mxu0 %v2042
    %2890 = vmatpush.bf16.msra.mxu0 %v2038
    %2891 = vmatpush.bf16.msra.mxu0 %v2034
    %2892 = vmatpush.bf16.msra.mxu0 %v2030
    %2893 = vmatpush.bf16.msra.mxu0 %v2026
    %2894 = vmatpush.bf16.msra.mxu0 %v2022
    %2895 = vmatpush.bf16.msra.mxu0 %v2018
    %2896 = vmatpush.bf16.msra.mxu0 %v2014
    %2897 = vmatmul.bf16.gmra.mxu0 %v1395
    %v2898 = vpop.f32.mrf.mxu0
    %v2899 = vadd.f32 %v2850, %v2898
    %v2900 = vpop.f32.mrf.mxu0
    %v2901 = vadd.f32 %v2852, %v2900
    %2902 = vmatmul.bf16.gmra.mxu0 %v1399
    %v2903 = vpop.f32.mrf.mxu0
    %v2904 = vadd.f32 %v2855, %v2903
    %v2905 = vpop.f32.mrf.mxu0
    %v2906 = vadd.f32 %v2857, %v2905
    %2907 = vmatmul.bf16.gmra.mxu0 %v1403
    %v2908 = vpop.f32.mrf.mxu0
    %v2909 = vadd.f32 %v2860, %v2908
    %v2910 = vpop.f32.mrf.mxu0
    %v2911 = vadd.f32 %v2862, %v2910
    %2912 = vmatmul.bf16.gmra.mxu0 %v1407
    %v2913 = vpop.f32.mrf.mxu0
    %v2914 = vadd.f32 %v2865, %v2913
    %v2915 = vpop.f32.mrf.mxu0
    %v2916 = vadd.f32 %v2867, %v2915
    %2917 = vmatmul.bf16.gmra.mxu0 %v1411
    %v2918 = vpop.f32.mrf.mxu0
    %v2919 = vadd.f32 %v2870, %v2918
    %v2920 = vpop.f32.mrf.mxu0
    %v2921 = vadd.f32 %v2872, %v2920
    %2922 = vmatmul.bf16.gmra.mxu0 %v1415
    %v2923 = vpop.f32.mrf.mxu0
    %v2924 = vadd.f32 %v2875, %v2923
    %v2925 = vpop.f32.mrf.mxu0
    %v2926 = vadd.f32 %v2877, %v2925
    %2927 = vmatmul.bf16.gmra.mxu0 %v1419
    %v2928 = vpop.f32.mrf.mxu0
    %v2929 = vadd.f32 %v2880, %v2928
    %v2930 = vpop.f32.mrf.mxu0
    %v2931 = vadd.f32 %v2882, %v2930
    %2932 = vmatmul.bf16.gmra.mxu0 %v1423
    %v2933 = vpop.f32.mrf.mxu0
    %v2934 = vadd.f32 %v2885, %v2933
    %v2935 = vpop.f32.mrf.mxu0
    %v2936 = vadd.f32 %v2887, %v2935
    %2937 = vdwg.mxu0
    %2938 = vmatpush.bf16.msra.mxu0 %v2074
    %2939 = vmatpush.bf16.msra.mxu0 %v2070
    %2940 = vmatpush.bf16.msra.mxu0 %v2066
    %2941 = vmatpush.bf16.msra.mxu0 %v2062
    %2942 = vmatpush.bf16.msra.mxu0 %v2058
    %2943 = vmatpush.bf16.msra.mxu0 %v2054
    %2944 = vmatpush.bf16.msra.mxu0 %v2050
    %2945 = vmatpush.bf16.msra.mxu0 %v2046
    %2946 = vmatmul.bf16.gmra.mxu0 %v1396
    %v2947 = vpop.f32.mrf.mxu0
    %v2948 = vadd.f32 %v2899, %v2947
    %v2949 = vpop.f32.mrf.mxu0
    %v2950 = vadd.f32 %v2901, %v2949
    %2951 = vmatmul.bf16.gmra.mxu0 %v1400
    %v2952 = vpop.f32.mrf.mxu0
    %v2953 = vadd.f32 %v2904, %v2952
    %v2954 = vpop.f32.mrf.mxu0
    %v2955 = vadd.f32 %v2906, %v2954
    %2956 = vmatmul.bf16.gmra.mxu0 %v1404
    %v2957 = vpop.f32.mrf.mxu0
    %v2958 = vadd.f32 %v2909, %v2957
    %v2959 = vpop.f32.mrf.mxu0
    %v2960 = vadd.f32 %v2911, %v2959
    %2961 = vmatmul.bf16.gmra.mxu0 %v1408
    %v2962 = vpop.f32.mrf.mxu0
    %v2963 = vadd.f32 %v2914, %v2962
    %v2964 = vpop.f32.mrf.mxu0
    %v2965 = vadd.f32 %v2916, %v2964
    %2966 = vmatmul.bf16.gmra.mxu0 %v1412
    %v2967 = vpop.f32.mrf.mxu0
    %v2968 = vadd.f32 %v2919, %v2967
    %v2969 = vpop.f32.mrf.mxu0
    %v2970 = vadd.f32 %v2921, %v2969
    %2971 = vmatmul.bf16.gmra.mxu0 %v1416
    %v2972 = vpop.f32.mrf.mxu0
    %v2973 = vadd.f32 %v2924, %v2972
    %v2974 = vpop.f32.mrf.mxu0
    %v2975 = vadd.f32 %v2926, %v2974
    %2976 = vmatmul.bf16.gmra.mxu0 %v1420
    %v2977 = vpop.f32.mrf.mxu0
    %v2978 = vadd.f32 %v2929, %v2977
    %v2979 = vpop.f32.mrf.mxu0
    %v2980 = vadd.f32 %v2931, %v2979
    %2981 = vmatmul.bf16.gmra.mxu0 %v1424
    %v2982 = vpop.f32.mrf.mxu0
    %v2983 = vadd.f32 %v2934, %v2982
    %v2984 = vpop.f32.mrf.mxu0
    %v2985 = vadd.f32 %v2936, %v2984
    %2986 = vdwg.mxu0
    %v2987 = vmax.f32 %v2360, 0.0
    %v2988 = vmax.f32 %v2556, 0.0
    %v2989 = vmax.f32 %v2752, 0.0
    %v2990 = vmax.f32 %v2948, 0.0
    %v2991 = vmax.f32 %v2362, 0.0
    %v2992 = vmax.f32 %v2558, 0.0
    %v2993 = vmax.f32 %v2754, 0.0
    %v2994 = vmax.f32 %v2950, 0.0
    %v2995 = vmax.f32 %v2365, 0.0
    %v2996 = vmax.f32 %v2561, 0.0
    %v2997 = vmax.f32 %v2757, 0.0
    %v2998 = vmax.f32 %v2953, 0.0
    %v2999 = vmax.f32 %v2367, 0.0
    %v3000 = vmax.f32 %v2563, 0.0
    %v3001 = vmax.f32 %v2759, 0.0
    %v3002 = vmax.f32 %v2955, 0.0
    %v3003 = vmax.f32 %v2370, 0.0
    %v3004 = vmax.f32 %v2566, 0.0
    %v3005 = vmax.f32 %v2762, 0.0
    %v3006 = vmax.f32 %v2958, 0.0
    %v3007 = vmax.f32 %v2372, 0.0
    %v3008 = vmax.f32 %v2568, 0.0
    %v3009 = vmax.f32 %v2764, 0.0
    %v3010 = vmax.f32 %v2960, 0.0
    %v3011 = vmax.f32 %v2375, 0.0
    %v3012 = vmax.f32 %v2571, 0.0
    %v3013 = vmax.f32 %v2767, 0.0
    %v3014 = vmax.f32 %v2963, 0.0
    %v3015 = vmax.f32 %v2377, 0.0
    %v3016 = vmax.f32 %v2573, 0.0
    %v3017 = vmax.f32 %v2769, 0.0
    %v3018 = vmax.f32 %v2965, 0.0
    %v3019 = vmax.f32 %v2380, 0.0
    %v3020 = vmax.f32 %v2576, 0.0
    %v3021 = vmax.f32 %v2772, 0.0
    %v3022 = vmax.f32 %v2968, 0.0
    %v3023 = vmax.f32 %v2382, 0.0
    %v3024 = vmax.f32 %v2578, 0.0
    %v3025 = vmax.f32 %v2774, 0.0
    %v3026 = vmax.f32 %v2970, 0.0
    %v3027 = vmax.f32 %v2385, 0.0
    %v3028 = vmax.f32 %v2581, 0.0
    %v3029 = vmax.f32 %v2777, 0.0
    %v3030 = vmax.f32 %v2973, 0.0
    %v3031 = vmax.f32 %v2387, 0.0
    %v3032 = vmax.f32 %v2583, 0.0
    %v3033 = vmax.f32 %v2779, 0.0
    %v3034 = vmax.f32 %v2975, 0.0
    %v3035 = vmax.f32 %v2390, 0.0
    %v3036 = vmax.f32 %v2586, 0.0
    %v3037 = vmax.f32 %v2782, 0.0
    %v3038 = vmax.f32 %v2978, 0.0
    %v3039 = vmax.f32 %v2392, 0.0
    %v3040 = vmax.f32 %v2588, 0.0
    %v3041 = vmax.f32 %v2784, 0.0
    %v3042 = vmax.f32 %v2980, 0.0
    %v3043 = vmax.f32 %v2395, 0.0
    %v3044 = vmax.f32 %v2591, 0.0
    %v3045 = vmax.f32 %v2787, 0.0
    %v3046 = vmax.f32 %v2983, 0.0
    %v3047 = vmax.f32 %v2397, 0.0
    %v3048 = vmax.f32 %v2593, 0.0
    %v3049 = vmax.f32 %v2789, 0.0
    %v3050 = vmax.f32 %v2985, 0.0
    %v3051 = vpack.c.bf16 %v2991, %v2987
    %v3052 = vpack.c.bf16 %v2992, %v2988
    %v3053 = vpack.c.bf16 %v2993, %v2989
    %v3054 = vpack.c.bf16 %v2994, %v2990
    %v3055 = vpack.c.bf16 %v2999, %v2995
    %v3056 = vpack.c.bf16 %v3000, %v2996
    %v3057 = vpack.c.bf16 %v3001, %v2997
    %v3058 = vpack.c.bf16 %v3002, %v2998
    %v3059 = vpack.c.bf16 %v3007, %v3003
    %v3060 = vpack.c.bf16 %v3008, %v3004
    %v3061 = vpack.c.bf16 %v3009, %v3005
    %v3062 = vpack.c.bf16 %v3010, %v3006
    %v3063 = vpack.c.bf16 %v3015, %v3011
    %v3064 = vpack.c.bf16 %v3016, %v3012
    %v3065 = vpack.c.bf16 %v3017, %v3013
    %v3066 = vpack.c.bf16 %v3018, %v3014
    %v3067 = vpack.c.bf16 %v3023, %v3019
    %v3068 = vpack.c.bf16 %v3024, %v3020
    %v3069 = vpack.c.bf16 %v3025, %v3021
    %v3070 = vpack.c.bf16 %v3026, %v3022
    %v3071 = vpack.c.bf16 %v3031, %v3027
    %v3072 = vpack.c.bf16 %v3032, %v3028
    %v3073 = vpack.c.bf16 %v3033, %v3029
    %v3074 = vpack.c.bf16 %v3034, %v3030
    %v3075 = vpack.c.bf16 %v3039, %v3035
    %v3076 = vpack.c.bf16 %v3040, %v3036
    %v3077 = vpack.c.bf16 %v3041, %v3037
    %v3078 = vpack.c.bf16 %v3042, %v3038
    %v3079 = vpack.c.bf16 %v3047, %v3043
    %v3080 = vpack.c.bf16 %v3048, %v3044
    %v3081 = vpack.c.bf16 %v3049, %v3045
    %v3082 = vpack.c.bf16 %v3050, %v3046
    %v3083 = vld [vmem:[#allocation12] sm:$0xf]
    %v3084 = vld [vmem:[#allocation12 + $0x4] sm:$0xf]
    %v3085 = vld [vmem:[#allocation12 + $0x8] sm:$0xf]
    %v3086 = vld [vmem:[#allocation12 + $0xc] sm:$0xf]
    %v3087 = vld [vmem:[#allocation12 + $0x10] sm:$0xf]
    %v3088 = vld [vmem:[#allocation12 + $0x14] sm:$0xf]
    %v3089 = vld [vmem:[#allocation12 + $0x18] sm:$0xf]
    %v3090 = vld [vmem:[#allocation12 + $0x1c] sm:$0xf]
    %v3091 = vld [vmem:[#allocation12 + $0x20] sm:$0xf]
    %v3092 = vld [vmem:[#allocation12 + $0x24] sm:$0xf]
    %v3093 = vld [vmem:[#allocation12 + $0x28] sm:$0xf]
    %v3094 = vld [vmem:[#allocation12 + $0x2c] sm:$0xf]
    %v3095 = vld [vmem:[#allocation12 + $0x30] sm:$0xf]
    %v3096 = vld [vmem:[#allocation12 + $0x34] sm:$0xf]
    %v3097 = vld [vmem:[#allocation12 + $0x38] sm:$0xf]
    %v3098 = vld [vmem:[#allocation12 + $0x3c] sm:$0xf]
    %v3099 = vld [vmem:[#allocation12 + $0x40] sm:$0xf]
    %v3100 = vld [vmem:[#allocation12 + $0x44] sm:$0xf]
    %v3101 = vld [vmem:[#allocation12 + $0x48] sm:$0xf]
    %v3102 = vld [vmem:[#allocation12 + $0x4c] sm:$0xf]
    %v3103 = vld [vmem:[#allocation12 + $0x50] sm:$0xf]
    %v3104 = vld [vmem:[#allocation12 + $0x54] sm:$0xf]
    %v3105 = vld [vmem:[#allocation12 + $0x58] sm:$0xf]
    %v3106 = vld [vmem:[#allocation12 + $0x5c] sm:$0xf]
    %v3107 = vld [vmem:[#allocation12 + $0x60] sm:$0xf]
    %v3108 = vld [vmem:[#allocation12 + $0x64] sm:$0xf]
    %v3109 = vld [vmem:[#allocation12 + $0x68] sm:$0xf]
    %v3110 = vld [vmem:[#allocation12 + $0x6c] sm:$0xf]
    %v3111 = vld [vmem:[#allocation12 + $0x70] sm:$0xf]
    %v3112 = vld [vmem:[#allocation12 + $0x74] sm:$0xf]
    %v3113 = vld [vmem:[#allocation12 + $0x78] sm:$0xf]
    %v3114 = vld [vmem:[#allocation12 + $0x7c] sm:$0xf]
    %v3115 = vld [vmem:[#allocation12 + $0x80] sm:$0xf]
    %v3116 = vld [vmem:[#allocation12 + $0x84] sm:$0xf]
    %v3117 = vld [vmem:[#allocation12 + $0x88] sm:$0xf]
    %v3118 = vld [vmem:[#allocation12 + $0x8c] sm:$0xf]
    %v3119 = vld [vmem:[#allocation12 + $0x90] sm:$0xf]
    %v3120 = vld [vmem:[#allocation12 + $0x94] sm:$0xf]
    %v3121 = vld [vmem:[#allocation12 + $0x98] sm:$0xf]
    %v3122 = vld [vmem:[#allocation12 + $0x9c] sm:$0xf]
    %v3123 = vld [vmem:[#allocation12 + $0xa0] sm:$0xf]
    %v3124 = vld [vmem:[#allocation12 + $0xa4] sm:$0xf]
    %v3125 = vld [vmem:[#allocation12 + $0xa8] sm:$0xf]
    %v3126 = vld [vmem:[#allocation12 + $0xac] sm:$0xf]
    %v3127 = vld [vmem:[#allocation12 + $0xb0] sm:$0xf]
    %v3128 = vld [vmem:[#allocation12 + $0xb4] sm:$0xf]
    %v3129 = vld [vmem:[#allocation12 + $0xb8] sm:$0xf]
    %v3130 = vld [vmem:[#allocation12 + $0xbc] sm:$0xf]
    %v3131 = vld [vmem:[#allocation12 + $0xc0] sm:$0xf]
    %v3132 = vld [vmem:[#allocation12 + $0xc4] sm:$0xf]
    %v3133 = vld [vmem:[#allocation12 + $0xc8] sm:$0xf]
    %v3134 = vld [vmem:[#allocation12 + $0xcc] sm:$0xf]
    %v3135 = vld [vmem:[#allocation12 + $0xd0] sm:$0xf]
    %v3136 = vld [vmem:[#allocation12 + $0xd4] sm:$0xf]
    %v3137 = vld [vmem:[#allocation12 + $0xd8] sm:$0xf]
    %v3138 = vld [vmem:[#allocation12 + $0xdc] sm:$0xf]
    %v3139 = vld [vmem:[#allocation12 + $0xe0] sm:$0xf]
    %v3140 = vld [vmem:[#allocation12 + $0xe4] sm:$0xf]
    %v3141 = vld [vmem:[#allocation12 + $0xe8] sm:$0xf]
    %v3142 = vld [vmem:[#allocation12 + $0xec] sm:$0xf]
    %v3143 = vld [vmem:[#allocation12 + $0xf0] sm:$0xf]
    %v3144 = vld [vmem:[#allocation12 + $0xf4] sm:$0xf]
    %v3145 = vld [vmem:[#allocation12 + $0xf8] sm:$0xf]
    %v3146 = vld [vmem:[#allocation12 + $0xfc] sm:$0xf]
    %v3147 = vld [vmem:[%s9] sm:$0x1]
    %v3149 = vperm.slane %v3147, 0
    %v3215 = vunpack.c.l.b16 %v3083
    %v3216 = vunpack.c.l.b16 %v3084
    %v3217 = vunpack.c.l.b16 %v3085
    %v3218 = vunpack.c.l.b16 %v3086
    %v3219 = vunpack.c.l.b16 %v3087
    %v3220 = vunpack.c.l.b16 %v3088
    %v3221 = vunpack.c.l.b16 %v3089
    %v3222 = vunpack.c.l.b16 %v3090
    %v3223 = vunpack.c.l.b16 %v3091
    %v3224 = vunpack.c.l.b16 %v3092
    %v3225 = vunpack.c.l.b16 %v3093
    %v3226 = vunpack.c.l.b16 %v3094
    %v3227 = vunpack.c.l.b16 %v3095
    %v3228 = vunpack.c.l.b16 %v3096
    %v3229 = vunpack.c.l.b16 %v3097
    %v3230 = vunpack.c.l.b16 %v3098
    %v3231 = vunpack.c.l.b16 %v3099
    %v3232 = vunpack.c.l.b16 %v3100
    %v3233 = vunpack.c.l.b16 %v3101
    %v3234 = vunpack.c.l.b16 %v3102
    %v3235 = vunpack.c.l.b16 %v3103
    %v3236 = vunpack.c.l.b16 %v3104
    %v3237 = vunpack.c.l.b16 %v3105
    %v3238 = vunpack.c.l.b16 %v3106
    %v3239 = vunpack.c.l.b16 %v3107
    %v3240 = vunpack.c.l.b16 %v3108
    %v3241 = vunpack.c.l.b16 %v3109
    %v3242 = vunpack.c.l.b16 %v3110
    %v3243 = vunpack.c.l.b16 %v3111
    %v3244 = vunpack.c.l.b16 %v3112
    %v3245 = vunpack.c.l.b16 %v3113
    %v3246 = vunpack.c.l.b16 %v3114
    %v3247 = vunpack.c.l.b16 %v3115
    %v3248 = vunpack.c.l.b16 %v3116
    %v3249 = vunpack.c.l.b16 %v3117
    %v3250 = vunpack.c.l.b16 %v3118
    %v3251 = vunpack.c.l.b16 %v3119
    %v3252 = vunpack.c.l.b16 %v3120
    %v3253 = vunpack.c.l.b16 %v3121
    %v3254 = vunpack.c.l.b16 %v3122
    %v3255 = vunpack.c.l.b16 %v3123
    %v3256 = vunpack.c.l.b16 %v3124
    %v3257 = vunpack.c.l.b16 %v3125
    %v3258 = vunpack.c.l.b16 %v3126
    %v3259 = vunpack.c.l.b16 %v3127
    %v3260 = vunpack.c.l.b16 %v3128
    %v3261 = vunpack.c.l.b16 %v3129
    %v3262 = vunpack.c.l.b16 %v3130
    %v3263 = vunpack.c.l.b16 %v3131
    %v3264 = vunpack.c.l.b16 %v3132
    %v3265 = vunpack.c.l.b16 %v3133
    %v3266 = vunpack.c.l.b16 %v3134
    %v3267 = vunpack.c.l.b16 %v3135
    %v3268 = vunpack.c.l.b16 %v3136
    %v3269 = vunpack.c.l.b16 %v3137
    %v3270 = vunpack.c.l.b16 %v3138
    %v3271 = vunpack.c.l.b16 %v3139
    %v3272 = vunpack.c.l.b16 %v3140
    %v3273 = vunpack.c.l.b16 %v3141
    %v3274 = vunpack.c.l.b16 %v3142
    %v3275 = vunpack.c.l.b16 %v3143
    %v3276 = vunpack.c.l.b16 %v3144
    %v3277 = vunpack.c.l.b16 %v3145
    %v3278 = vunpack.c.l.b16 %v3146
    %v3279 = vpack.c.b16 %v3216, %v3215
    %v3280 = vpack.c.b16 %v3218, %v3217
    %v3281 = vpack.c.b16 %v3220, %v3219
    %v3282 = vpack.c.b16 %v3222, %v3221
    %v3283 = vpack.c.b16 %v3224, %v3223
    %v3284 = vpack.c.b16 %v3226, %v3225
    %v3285 = vpack.c.b16 %v3228, %v3227
    %v3286 = vpack.c.b16 %v3230, %v3229
    %v3287 = vpack.c.b16 %v3232, %v3231
    %v3288 = vpack.c.b16 %v3234, %v3233
    %v3289 = vpack.c.b16 %v3236, %v3235
    %v3290 = vpack.c.b16 %v3238, %v3237
    %v3291 = vpack.c.b16 %v3240, %v3239
    %v3292 = vpack.c.b16 %v3242, %v3241
    %v3293 = vpack.c.b16 %v3244, %v3243
    %v3294 = vpack.c.b16 %v3246, %v3245
    %v3295 = vpack.c.b16 %v3248, %v3247
    %v3296 = vpack.c.b16 %v3250, %v3249
    %v3297 = vpack.c.b16 %v3252, %v3251
    %v3298 = vpack.c.b16 %v3254, %v3253
    %v3299 = vpack.c.b16 %v3256, %v3255
    %v3300 = vpack.c.b16 %v3258, %v3257
    %v3301 = vpack.c.b16 %v3260, %v3259
    %v3302 = vpack.c.b16 %v3262, %v3261
    %v3303 = vpack.c.b16 %v3264, %v3263
    %v3304 = vpack.c.b16 %v3266, %v3265
    %v3305 = vpack.c.b16 %v3268, %v3267
    %v3306 = vpack.c.b16 %v3270, %v3269
    %v3307 = vpack.c.b16 %v3272, %v3271
    %v3308 = vpack.c.b16 %v3274, %v3273
    %v3309 = vpack.c.b16 %v3276, %v3275
    %v3310 = vpack.c.b16 %v3278, %v3277
    %3343 = vmatpush.bf16.msra.mxu0 %v3286
    %3344 = vmatpush.bf16.msra.mxu0 %v3285
    %3345 = vmatpush.bf16.msra.mxu0 %v3284
    %3346 = vmatpush.bf16.msra.mxu0 %v3283
    %3347 = vmatpush.bf16.msra.mxu0 %v3282
    %3348 = vmatpush.bf16.msra.mxu0 %v3281
    %3349 = vmatpush.bf16.msra.mxu0 %v3280
    %3350 = vmatpush.bf16.msra.mxu0 %v3279
    %3351 = vmatmul.bf16.gmra.mxu0 %v3051
    %v3352 = vpop.f32.mrf.mxu0
    %v3353 = vadd.f32 %v3149, %v3352
    %v3354 = vpop.f32.mrf.mxu0
    %v3355 = vadd.f32 %v3149, %v3354
    %3356 = vmatmul.bf16.gmra.mxu0 %v3055
    %v3357 = vpop.f32.mrf.mxu0
    %v3358 = vadd.f32 %v3149, %v3357
    %v3359 = vpop.f32.mrf.mxu0
    %v3360 = vadd.f32 %v3149, %v3359
    %3361 = vmatmul.bf16.gmra.mxu0 %v3059
    %v3362 = vpop.f32.mrf.mxu0
    %v3363 = vadd.f32 %v3149, %v3362
    %v3364 = vpop.f32.mrf.mxu0
    %v3365 = vadd.f32 %v3149, %v3364
    %3366 = vmatmul.bf16.gmra.mxu0 %v3063
    %v3367 = vpop.f32.mrf.mxu0
    %v3368 = vadd.f32 %v3149, %v3367
    %v3369 = vpop.f32.mrf.mxu0
    %v3370 = vadd.f32 %v3149, %v3369
    %3371 = vmatmul.bf16.gmra.mxu0 %v3067
    %v3372 = vpop.f32.mrf.mxu0
    %v3373 = vadd.f32 %v3149, %v3372
    %v3374 = vpop.f32.mrf.mxu0
    %v3375 = vadd.f32 %v3149, %v3374
    %3376 = vmatmul.bf16.gmra.mxu0 %v3071
    %v3377 = vpop.f32.mrf.mxu0
    %v3378 = vadd.f32 %v3149, %v3377
    %v3379 = vpop.f32.mrf.mxu0
    %v3380 = vadd.f32 %v3149, %v3379
    %3381 = vmatmul.bf16.gmra.mxu0 %v3075
    %v3382 = vpop.f32.mrf.mxu0
    %v3383 = vadd.f32 %v3149, %v3382
    %v3384 = vpop.f32.mrf.mxu0
    %v3385 = vadd.f32 %v3149, %v3384
    %3386 = vmatmul.bf16.gmra.mxu0 %v3079
    %v3387 = vpop.f32.mrf.mxu0
    %v3388 = vadd.f32 %v3149, %v3387
    %v3389 = vpop.f32.mrf.mxu0
    %v3390 = vadd.f32 %v3149, %v3389
    %3391 = vdwg.mxu0
    %3392 = vmatpush.bf16.msra.mxu0 %v3294
    %3393 = vmatpush.bf16.msra.mxu0 %v3293
    %3394 = vmatpush.bf16.msra.mxu0 %v3292
    %3395 = vmatpush.bf16.msra.mxu0 %v3291
    %3396 = vmatpush.bf16.msra.mxu0 %v3290
    %3397 = vmatpush.bf16.msra.mxu0 %v3289
    %3398 = vmatpush.bf16.msra.mxu0 %v3288
    %3399 = vmatpush.bf16.msra.mxu0 %v3287
    %3400 = vmatmul.bf16.gmra.mxu0 %v3052
    %v3401 = vpop.f32.mrf.mxu0
    %v3402 = vadd.f32 %v3353, %v3401
    %v3403 = vpop.f32.mrf.mxu0
    %v3404 = vadd.f32 %v3355, %v3403
    %3405 = vmatmul.bf16.gmra.mxu0 %v3056
    %v3406 = vpop.f32.mrf.mxu0
    %v3407 = vadd.f32 %v3358, %v3406
    %v3408 = vpop.f32.mrf.mxu0
    %v3409 = vadd.f32 %v3360, %v3408
    %3410 = vmatmul.bf16.gmra.mxu0 %v3060
    %v3411 = vpop.f32.mrf.mxu0
    %v3412 = vadd.f32 %v3363, %v3411
    %v3413 = vpop.f32.mrf.mxu0
    %v3414 = vadd.f32 %v3365, %v3413
    %3415 = vmatmul.bf16.gmra.mxu0 %v3064
    %v3416 = vpop.f32.mrf.mxu0
    %v3417 = vadd.f32 %v3368, %v3416
    %v3418 = vpop.f32.mrf.mxu0
    %v3419 = vadd.f32 %v3370, %v3418
    %3420 = vmatmul.bf16.gmra.mxu0 %v3068
    %v3421 = vpop.f32.mrf.mxu0
    %v3422 = vadd.f32 %v3373, %v3421
    %v3423 = vpop.f32.mrf.mxu0
    %v3424 = vadd.f32 %v3375, %v3423
    %3425 = vmatmul.bf16.gmra.mxu0 %v3072
    %v3426 = vpop.f32.mrf.mxu0
    %v3427 = vadd.f32 %v3378, %v3426
    %v3428 = vpop.f32.mrf.mxu0
    %v3429 = vadd.f32 %v3380, %v3428
    %3430 = vmatmul.bf16.gmra.mxu0 %v3076
    %v3431 = vpop.f32.mrf.mxu0
    %v3432 = vadd.f32 %v3383, %v3431
    %v3433 = vpop.f32.mrf.mxu0
    %v3434 = vadd.f32 %v3385, %v3433
    %3435 = vmatmul.bf16.gmra.mxu0 %v3080
    %v3436 = vpop.f32.mrf.mxu0
    %v3437 = vadd.f32 %v3388, %v3436
    %v3438 = vpop.f32.mrf.mxu0
    %v3439 = vadd.f32 %v3390, %v3438
    %3440 = vdwg.mxu0
    %3441 = vmatpush.bf16.msra.mxu0 %v3302
    %3442 = vmatpush.bf16.msra.mxu0 %v3301
    %3443 = vmatpush.bf16.msra.mxu0 %v3300
    %3444 = vmatpush.bf16.msra.mxu0 %v3299
    %3445 = vmatpush.bf16.msra.mxu0 %v3298
    %3446 = vmatpush.bf16.msra.mxu0 %v3297
    %3447 = vmatpush.bf16.msra.mxu0 %v3296
    %3448 = vmatpush.bf16.msra.mxu0 %v3295
    %3449 = vmatmul.bf16.gmra.mxu0 %v3053
    %v3450 = vpop.f32.mrf.mxu0
    %v3451 = vadd.f32 %v3402, %v3450
    %v3452 = vpop.f32.mrf.mxu0
    %v3453 = vadd.f32 %v3404, %v3452
    %3454 = vmatmul.bf16.gmra.mxu0 %v3057
    %v3455 = vpop.f32.mrf.mxu0
    %v3456 = vadd.f32 %v3407, %v3455
    %v3457 = vpop.f32.mrf.mxu0
    %v3458 = vadd.f32 %v3409, %v3457
    %3459 = vmatmul.bf16.gmra.mxu0 %v3061
    %v3460 = vpop.f32.mrf.mxu0
    %v3461 = vadd.f32 %v3412, %v3460
    %v3462 = vpop.f32.mrf.mxu0
    %v3463 = vadd.f32 %v3414, %v3462
    %3464 = vmatmul.bf16.gmra.mxu0 %v3065
    %v3465 = vpop.f32.mrf.mxu0
    %v3466 = vadd.f32 %v3417, %v3465
    %v3467 = vpop.f32.mrf.mxu0
    %v3468 = vadd.f32 %v3419, %v3467
    %3469 = vmatmul.bf16.gmra.mxu0 %v3069
    %v3470 = vpop.f32.mrf.mxu0
    %v3471 = vadd.f32 %v3422, %v3470
    %v3472 = vpop.f32.mrf.mxu0
    %v3473 = vadd.f32 %v3424, %v3472
    %3474 = vmatmul.bf16.gmra.mxu0 %v3073
    %v3475 = vpop.f32.mrf.mxu0
    %v3476 = vadd.f32 %v3427, %v3475
    %v3477 = vpop.f32.mrf.mxu0
    %v3478 = vadd.f32 %v3429, %v3477
    %3479 = vmatmul.bf16.gmra.mxu0 %v3077
    %v3480 = vpop.f32.mrf.mxu0
    %v3481 = vadd.f32 %v3432, %v3480
    %v3482 = vpop.f32.mrf.mxu0
    %v3483 = vadd.f32 %v3434, %v3482
    %3484 = vmatmul.bf16.gmra.mxu0 %v3081
    %v3485 = vpop.f32.mrf.mxu0
    %v3486 = vadd.f32 %v3437, %v3485
    %v3487 = vpop.f32.mrf.mxu0
    %v3488 = vadd.f32 %v3439, %v3487
    %3489 = vdwg.mxu0
    %3490 = vmatpush.bf16.msra.mxu0 %v3310
    %3491 = vmatpush.bf16.msra.mxu0 %v3309
    %3492 = vmatpush.bf16.msra.mxu0 %v3308
    %3493 = vmatpush.bf16.msra.mxu0 %v3307
    %3494 = vmatpush.bf16.msra.mxu0 %v3306
    %3495 = vmatpush.bf16.msra.mxu0 %v3305
    %3496 = vmatpush.bf16.msra.mxu0 %v3304
    %3497 = vmatpush.bf16.msra.mxu0 %v3303
    %3498 = vmatmul.bf16.gmra.mxu0 %v3054
    %v3499 = vpop.f32.mrf.mxu0
    %v3500 = vadd.f32 %v3451, %v3499
    %v3501 = vpop.f32.mrf.mxu0
    %v3502 = vadd.f32 %v3453, %v3501
    %3503 = vmatmul.bf16.gmra.mxu0 %v3058
    %v3504 = vpop.f32.mrf.mxu0
    %v3505 = vadd.f32 %v3456, %v3504
    %v3506 = vpop.f32.mrf.mxu0
    %v3507 = vadd.f32 %v3458, %v3506
    %3508 = vmatmul.bf16.gmra.mxu0 %v3062
    %v3509 = vpop.f32.mrf.mxu0
    %v3510 = vadd.f32 %v3461, %v3509
    %v3511 = vpop.f32.mrf.mxu0
    %v3512 = vadd.f32 %v3463, %v3511
    %3513 = vmatmul.bf16.gmra.mxu0 %v3066
    %v3514 = vpop.f32.mrf.mxu0
    %v3515 = vadd.f32 %v3466, %v3514
    %v3516 = vpop.f32.mrf.mxu0
    %v3517 = vadd.f32 %v3468, %v3516
    %3518 = vmatmul.bf16.gmra.mxu0 %v3070
    %v3519 = vpop.f32.mrf.mxu0
    %v3520 = vadd.f32 %v3471, %v3519
    %v3521 = vpop.f32.mrf.mxu0
    %v3522 = vadd.f32 %v3473, %v3521
    %3523 = vmatmul.bf16.gmra.mxu0 %v3074
    %v3524 = vpop.f32.mrf.mxu0
    %v3525 = vadd.f32 %v3476, %v3524
    %v3526 = vpop.f32.mrf.mxu0
    %v3527 = vadd.f32 %v3478, %v3526
    %3528 = vmatmul.bf16.gmra.mxu0 %v3078
    %v3529 = vpop.f32.mrf.mxu0
    %v3530 = vadd.f32 %v3481, %v3529
    %v3531 = vpop.f32.mrf.mxu0
    %v3532 = vadd.f32 %v3483, %v3531
    %3533 = vmatmul.bf16.gmra.mxu0 %v3082
    %v3534 = vpop.f32.mrf.mxu0
    %v3535 = vadd.f32 %v3486, %v3534
    %v3536 = vpop.f32.mrf.mxu0
    %v3537 = vadd.f32 %v3488, %v3536
    %3538 = vdwg.mxu0
    %3539 = vst [vmem:[#allocation14] sm:$0xff] %v3500
    %3540 = vst [vmem:[#allocation14 + $0x8] sm:$0xff] %v3502
    %3541 = vst [vmem:[#allocation14 + $0x10] sm:$0xff] %v3505
    %3542 = vst [vmem:[#allocation14 + $0x18] sm:$0xff] %v3507
    %3543 = vst [vmem:[#allocation14 + $0x20] sm:$0xff] %v3510
    %3544 = vst [vmem:[#allocation14 + $0x28] sm:$0xff] %v3512
    %3545 = vst [vmem:[#allocation14 + $0x30] sm:$0xff] %v3515
    %3546 = vst [vmem:[#allocation14 + $0x38] sm:$0xff] %v3517
    %3547 = vst [vmem:[#allocation14 + $0x40] sm:$0xff] %v3520
    %3548 = vst [vmem:[#allocation14 + $0x48] sm:$0xff] %v3522
    %3549 = vst [vmem:[#allocation14 + $0x50] sm:$0xff] %v3525
    %3550 = vst [vmem:[#allocation14 + $0x58] sm:$0xff] %v3527
    %3551 = vst [vmem:[#allocation14 + $0x60] sm:$0xff] %v3530
    %3552 = vst [vmem:[#allocation14 + $0x68] sm:$0xff] %v3532
    %3553 = vst [vmem:[#allocation14 + $0x70] sm:$0xff] %v3535
    %3554 = vst [vmem:[#allocation14 + $0x78] sm:$0xff] %v3537
    // Predicated region
    $region113: #{tpu_custom_call.1} parent=1 // pred_check
      _
    $region114: #{tpu_custom_call.1} parent=1 // pred_check_branch
      %3556 = sbr.rel (0) target = $region116
    $region115: #{tpu_custom_call.1} parent=1 // pred_region
      %3558 = vsyncadd [#allocation8], 0
      %s3559 = sshll.u32 [#allocation14], 4
      %s3560 = int_to_ptr.vmem [resolvable:$true] %s3559
      %s3561 = sshll.u32 %s10, 4
      %s3562 = int_to_ptr.hbm [resolvable:$true] %s3561
      %3567 = dma.vmem_to_hbm [thread:$0]  %s3560, 2048, %s3562, [#allocation8], 128, 128, 8
    $region116: #{tpu_custom_call.1} parent=1 // pred_fallthru
      _
    // Predicated region
    $region117: #{tpu_custom_call.1} parent=1 // pred_check
      _
    $region118: #{tpu_custom_call.1} parent=1 // pred_check_branch
      %3569 = sbr.rel (0) target = $region120
    $region119: #{tpu_custom_call.1} parent=1 // pred_region
      %3571 = dma.done [#allocation8], 2048
    $region120: #{tpu_custom_call.1} parent=1 // pred_fallthru
      _
    %3572 = vsyncpa [#allocation7], 1
    %3573 = vsyncpa [#allocation10], 1
    %3574 = vsyncpa [#allocation13], 1
    %3575 = vsyncpa [#allocation8], 1

</llo_original>
